<compile_context>
chip_gen: v7x
topology: tpu7x:2x2x1
jax: 0.10.0
libtpu: 0.0.40
codegen_flags: <defaults>
</compile_context>

<pallas_src>
import functools

import jax
import jax.numpy as jnp
from jax.experimental import pallas as pl
from jax.experimental.pallas import tpu as pltpu

DROPOUT_P = 0.4


def _ffn_kernel(use_mask, x_ref, w1_ref, b1_ref, w2_ref, b2_ref, *rest):
    # x_ref: (tm, C) f32    w1_ref: (C, th) bf16   b1_ref: (1, th) f32
    # w2_ref: (th, C) bf16  b2_ref: (1, C) f32
    # [mask_ref: (tm, C) f32, pre-scaled by 1/keep_p]
    # o_ref: (tm, C)        acc_ref: (tm, C) f32 scratch
    if use_mask:
        mask_ref, o_ref, acc_ref = rest
    else:
        mask_ref = None
        o_ref, acc_ref = rest

    kh = pl.program_id(1)

    @pl.when(kh == 0)
    def _():
        acc_ref[...] = jnp.zeros_like(acc_ref)

    # bf16 on the MXU, f32 accumulation; bias add + ReLU stay in f32 (VPU).
    x_bf = x_ref[...].astype(jnp.bfloat16)
    h = jnp.dot(x_bf, w1_ref[...], preferred_element_type=jnp.float32)
    h = jnp.maximum(h + b1_ref[...], 0.0)
    acc_ref[...] += jnp.dot(h.astype(jnp.bfloat16), w2_ref[...],
                            preferred_element_type=jnp.float32)

    @pl.when(kh == pl.num_programs(1) - 1)
    def _():
        y = acc_ref[...] + b2_ref[...]
        if use_mask:
            y = y * mask_ref[...]          # mask already scaled by 1/keep_p
        o_ref[...] = y.astype(o_ref.dtype)


def feed_forward(x, w1, b1, w2, b2, *, training=False, seed=0, tm=256, th=768):
    """x: (B, T, C) float32. w1: (C, 4C), w2: (4C, C). Returns (B, T, C)."""
    B, T, C = x.shape
    Cw, H = w1.shape
    assert Cw == C and w2.shape == (H, C) and b1.shape == (H,) and b2.shape == (C,)
    assert C % 128 == 0, "n_embd must be a multiple of 128 (lane width)"

    # Hidden-dim chunk: multiple of 128 that divides H.
    th = max(128, (min(th, H) // 128) * 128)
    while H % th != 0:
        th -= 128

    # Row tile: multiple of 8; pad the token dim up to a multiple of tm.
    M = B * T
    tm = max(8, (tm // 8) * 8)
    tm = min(tm, ((M + 7) // 8) * 8)
    Mp = pl.cdiv(M, tm) * tm

    x2d = x.reshape(M, C)
    if Mp != M:
        x2d = jnp.pad(x2d, ((0, Mp - M), (0, 0)))

    # bf16 weights for the MXU; biases stay f32.
    w1_bf = w1.astype(jnp.bfloat16)
    w2_bf = w2.astype(jnp.bfloat16)
    b1_2d = b1.reshape(1, H).astype(jnp.float32)
    b2_2d = b2.reshape(1, C).astype(jnp.float32)

    inputs = [x2d, w1_bf, b1_2d, w2_bf, b2_2d]
    in_specs = [
        pl.BlockSpec((tm, C), lambda i, k: (i, 0)),   # x rows (resident over k)
        pl.BlockSpec((C, th), lambda i, k: (0, k)),   # W1 column chunk
        pl.BlockSpec((1, th), lambda i, k: (0, k)),   # b1 chunk
        pl.BlockSpec((th, C), lambda i, k: (k, 0)),   # W2 row chunk
        pl.BlockSpec((1, C), lambda i, k: (0, 0)),    # b2
    ]

    use_mask = bool(training) and DROPOUT_P > 0.0
    if use_mask:
        keep_p = 1.0 - DROPOUT_P
        keep = jax.random.bernoulli(jax.random.PRNGKey(seed), keep_p, (Mp, C))
        mask = keep.astype(jnp.float32) * jnp.float32(1.0 / keep_p)
        inputs.append(mask)
        in_specs.append(pl.BlockSpec((tm, C), lambda i, k: (i, 0)))

    kernel = functools.partial(_ffn_kernel, use_mask)

    out2d = pl.pallas_call(
        kernel,
        out_shape=jax.ShapeDtypeStruct((Mp, C), x.dtype),
        grid=(Mp // tm, H // th),
        in_specs=in_specs,
        out_specs=pl.BlockSpec((tm, C), lambda i, k: (i, 0)),
        scratch_shapes=[pltpu.VMEM((tm, C), jnp.float32)],
        compiler_params=pltpu.CompilerParams(
            dimension_semantics=("parallel", "arbitrary")),
    )(*inputs)

    return out2d[:M].reshape(B, T, C)


def init_params(key, n_embd):
    """Match torch.nn.Linear default init: U(-1/sqrt(fan_in), 1/sqrt(fan_in))."""
    hidden = 4 * n_embd
    k1, k2, k3, k4 = jax.random.split(key, 4)
    bound1 = 1.0 / (n_embd ** 0.5)
    bound2 = 1.0 / (hidden ** 0.5)
    # stored as (in, out) so the kernel does x @ W directly
    w1 = jax.random.uniform(k1, (n_embd, hidden), jnp.float32, -bound1, bound1)
    b1 = jax.random.uniform(k2, (hidden,), jnp.float32, -bound1, bound1)
    w2 = jax.random.uniform(k3, (hidden, n_embd), jnp.float32, -bound2, bound2)
    b2 = jax.random.uniform(k4, (n_embd,), jnp.float32, -bound2, bound2)
    return w1, b1, w2, b2


if __name__ == "__main__":
    n_embd = 768          # matches the module spec
    B, T = 2, 60          # M = 120 -> exercises the token-padding path

    key = jax.random.PRNGKey(0)
    kx, kp = jax.random.split(key)
    x = jax.random.normal(kx, (B, T, n_embd), jnp.float32)
    w1, b1, w2, b2 = init_params(kp, n_embd)

    # Eval mode (dropout = identity), matching module.eval() semantics.
    y = jax.block_until_ready(feed_forward(x, w1, b1, w2, b2, training=False))
    assert y.shape == (B, T, n_embd)

    # Reference with matching mixed precision (bf16 matmuls, f32 accumulate).
    x2 = x.reshape(-1, n_embd).astype(jnp.bfloat16)
    h_ref = jnp.maximum(
        jnp.dot(x2, w1.astype(jnp.bfloat16),
                preferred_element_type=jnp.float32) + b1, 0.0)
    ref = jnp.dot(h_ref.astype(jnp.bfloat16), w2.astype(jnp.bfloat16),
                  preferred_element_type=jnp.float32) + b2
    ref = ref.reshape(B, T, n_embd)
    assert jnp.allclose(y, ref, atol=1e-2, rtol=1e-2), \
        float(jnp.max(jnp.abs(y - ref)))

    # Training-mode dropout path (deterministic per seed, not torch-RNG-matched).
    y_train = jax.block_until_ready(
        feed_forward(x, w1, b1, w2, b2, training=True, seed=123))
    assert y_train.shape == (B, T, n_embd)
    zero_frac = float(jnp.mean(y_train == 0.0))
    assert 0.25 < zero_frac < 0.55, zero_frac

    print("KERNEL_OK")
</pallas_src>

<mosaic_0001>
module attributes {stable_mosaic.version = 11 : i64} {
  func.func @_ffn_kernel(%arg0: i32, %arg1: i32, %arg2: memref<120x768xf32, #tpu.memory_space<vmem>>, %arg3: memref<768x768xbf16, #tpu.memory_space<vmem>>, %arg4: memref<1x768xf32, #tpu.memory_space<vmem>>, %arg5: memref<768x768xbf16, #tpu.memory_space<vmem>>, %arg6: memref<1x768xf32, #tpu.memory_space<vmem>>, %arg7: memref<120x768xf32, #tpu.memory_space<vmem>>, %arg8: memref<120x768xf32, #tpu.memory_space<vmem>>) attributes {dimension_semantics = [#tpu.dimension_semantics<parallel>, #tpu.dimension_semantics<arbitrary>], iteration_bounds = array<i64: 1, 4>, scalar_prefetch = 0 : i64, scratch_operands = 1 : i64, tpu.core_type = #tpu.core_type<tc>, window_params = [{transform_indices = @transform_0, window_bounds = array<i64: 120, 768>}, {transform_indices = @transform_1, window_bounds = array<i64: 768, 768>}, {transform_indices = @transform_2, window_bounds = array<i64: 1, 768>}, {transform_indices = @transform_3, window_bounds = array<i64: 768, 768>}, {pipeline_mode = #tpu.pipeline_mode<synchronous>, transform_indices = @transform_4, window_bounds = array<i64: 1, 768>}, {transform_indices = @transform_5, window_bounds = array<i64: 120, 768>}]} {
    %c0_i32 = arith.constant 0 : i32
    %0 = arith.cmpi eq, %arg1, %c0_i32 : i32
    %1 = arith.extui %0 : i1 to i32
    %c0_i32_0 = arith.constant 0 : i32
    %2 = arith.cmpi ne, %1, %c0_i32_0 : i32
    scf.if %2 {
      %cst_15 = arith.constant 0.000000e+00 : f32
      %21 = vector.broadcast %cst_15 : f32 to vector<120x768xf32>
      %c0_16 = arith.constant 0 : index
      %c0_17 = arith.constant 0 : index
      %22 = vector.load %arg8[%c0_16, %c0_17] : memref<120x768xf32, #tpu.memory_space<vmem>>, vector<120x768xf32>
      tpu.vector_store %arg8[%c0_16, %c0_17], %21 {strides = array<i32>} : memref<120x768xf32, #tpu.memory_space<vmem>>, vector<120x768xf32>,
    } else {
    }
    %c0 = arith.constant 0 : index
    %c0_1 = arith.constant 0 : index
    %3 = vector.load %arg2[%c0, %c0_1] : memref<120x768xf32, #tpu.memory_space<vmem>>, vector<120x768xf32>
    %4 = arith.truncf %3 : vector<120x768xf32> to vector<120x768xbf16>
    %c0_2 = arith.constant 0 : index
    %c0_3 = arith.constant 0 : index
    %5 = vector.load %arg3[%c0_2, %c0_3] : memref<768x768xbf16, #tpu.memory_space<vmem>>, vector<768x768xbf16>
    %cst = arith.constant dense<0.000000e+00> : vector<120x768xf32>
    %6 = tpu.matmul %4, %5, %cst {dimension_numbers = #tpu.dot_dimension_numbers<[1], [0], [0], [1], [0, 0, 1, 1], [], []>} : vector<120x768xbf16>, vector<768x768xbf16>, vector<120x768xf32> -> vector<120x768xf32>
    %c0_4 = arith.constant 0 : index
    %c0_5 = arith.constant 0 : index
    %7 = vector.load %arg4[%c0_4, %c0_5] : memref<1x768xf32, #tpu.memory_space<vmem>>, vector<1x768xf32>
    %8 = vector.broadcast %7 : vector<1x768xf32> to vector<120x768xf32>
    %9 = arith.addf %6, %8 : vector<120x768xf32>
    %cst_6 = arith.constant 0.000000e+00 : f32
    %10 = vector.broadcast %cst_6 : f32 to vector<120x768xf32>
    %11 = arith.maximumf %9, %10 : vector<120x768xf32>
    %c0_7 = arith.constant 0 : index
    %c0_8 = arith.constant 0 : index
    %12 = vector.load %arg8[%c0_7, %c0_8] : memref<120x768xf32, #tpu.memory_space<vmem>>, vector<120x768xf32>
    %13 = arith.truncf %11 : vector<120x768xf32> to vector<120x768xbf16>
    %c0_9 = arith.constant 0 : index
    %c0_10 = arith.constant 0 : index
    %14 = vector.load %arg5[%c0_9, %c0_10] : memref<768x768xbf16, #tpu.memory_space<vmem>>, vector<768x768xbf16>
    %cst_11 = arith.constant dense<0.000000e+00> : vector<120x768xf32>
    %15 = tpu.matmul %13, %14, %cst_11 {dimension_numbers = #tpu.dot_dimension_numbers<[1], [0], [0], [1], [0, 0, 1, 1], [], []>} : vector<120x768xbf16>, vector<768x768xbf16>, vector<120x768xf32> -> vector<120x768xf32>
    %16 = arith.addf %12, %15 : vector<120x768xf32>
    %c0_12 = arith.constant 0 : index
    %c0_13 = arith.constant 0 : index
    %17 = vector.load %arg8[%c0_12, %c0_13] : memref<120x768xf32, #tpu.memory_space<vmem>>, vector<120x768xf32>
    tpu.vector_store %arg8[%c0_12, %c0_13], %16 {strides = array<i32>} : memref<120x768xf32, #tpu.memory_space<vmem>>, vector<120x768xf32>,
    %c3_i32 = arith.constant 3 : i32
    %18 = arith.cmpi eq, %arg1, %c3_i32 : i32
    %19 = arith.extui %18 : i1 to i32
    %c0_i32_14 = arith.constant 0 : i32
    %20 = arith.cmpi ne, %19, %c0_i32_14 : i32
    scf.if %20 {
      %c0_15 = arith.constant 0 : index
      %c0_16 = arith.constant 0 : index
      %21 = vector.load %arg8[%c0_15, %c0_16] : memref<120x768xf32, #tpu.memory_space<vmem>>, vector<120x768xf32>
      %c0_17 = arith.constant 0 : index
      %c0_18 = arith.constant 0 : index
      %22 = vector.load %arg6[%c0_17, %c0_18] : memref<1x768xf32, #tpu.memory_space<vmem>>, vector<1x768xf32>
      %23 = vector.broadcast %22 : vector<1x768xf32> to vector<120x768xf32>
      %24 = arith.addf %21, %23 : vector<120x768xf32>
      %c0_19 = arith.constant 0 : index
      %c0_20 = arith.constant 0 : index
      %25 = vector.load %arg7[%c0_19, %c0_20] : memref<120x768xf32, #tpu.memory_space<vmem>>, vector<120x768xf32>
      tpu.vector_store %arg7[%c0_19, %c0_20], %24 {strides = array<i32>} : memref<120x768xf32, #tpu.memory_space<vmem>>, vector<120x768xf32>,
    } else {
    }
    return
  }
  func.func @transform_0(%arg0: i32, %arg1: i32) -> (i32, i32) {
    %c0_i32 = arith.constant 0 : i32
    %c0_i32_0 = arith.constant 0 : i32
    return %arg0, %c0_i32 : i32, i32
  }
  func.func @transform_1(%arg0: i32, %arg1: i32) -> (i32, i32) {
    %c0_i32 = arith.constant 0 : i32
    %c0_i32_0 = arith.constant 0 : i32
    return %c0_i32, %arg1 : i32, i32
  }
  func.func @transform_2(%arg0: i32, %arg1: i32) -> (i32, i32) {
    %c0_i32 = arith.constant 0 : i32
    %c0_i32_0 = arith.constant 0 : i32
    return %c0_i32, %arg1 : i32, i32
  }
  func.func @transform_3(%arg0: i32, %arg1: i32) -> (i32, i32) {
    %c0_i32 = arith.constant 0 : i32
    %c0_i32_0 = arith.constant 0 : i32
    return %arg1, %c0_i32 : i32, i32
  }
  func.func @transform_4(%arg0: i32, %arg1: i32) -> (i32, i32) {
    %c0_i32 = arith.constant 0 : i32
    %c0_i32_0 = arith.constant 0 : i32
    %c0_i32_1 = arith.constant 0 : i32
    return %c0_i32, %c0_i32_0 : i32, i32
  }
  func.func @transform_5(%arg0: i32, %arg1: i32) -> (i32, i32) {
    %c0_i32 = arith.constant 0 : i32
    %c0_i32_0 = arith.constant 0 : i32
    return %arg0, %c0_i32 : i32, i32
  }
}

</mosaic_0001>

<llo_original>
// kernel: tpu_custom_call.1
$region0: #{tpu_custom_call.1}
  #allocation0 [shape = 'u32[]', space=smem, size = 0x4, offset = 0x4, fixed_abs, tag = 'smem constant byte address 0x4 - core index']
  #allocation1 [shape = 'u32[144,128]{1,0:T(1,128)}', space=vmem, size = 0x12000, scoped, tag = 'internal scratch']
  #allocation2 [shape = 'f32[120,768]{1,0:T(8,128)}', space=vmem, size = 0x5a000, scoped, tag = 'scratch operand']
  %s0 = inlined_call_operand.hbm [shape: f32[120,768], index: 0, kind: input, shape index: {}]
  %s1 = inlined_call_operand.hbm [shape: bf16[768,3072], index: 1, kind: input, shape index: {}]
  %s2 = inlined_call_operand.hbm [shape: f32[1,3072], index: 2, kind: input, shape index: {}]
  %s3 = inlined_call_operand.hbm [shape: bf16[3072,768], index: 3, kind: input, shape index: {}]
  %s4 = inlined_call_operand.hbm [shape: f32[1,768], index: 4, kind: input, shape index: {}]
  %s5 = inlined_call_operand.hbm [shape: f32[120,768], index: 5, kind: output, shape index: {}]
  %s6 = sld [smem:[#allocation0]]
  $region81: #{tpu_custom_call.1} parent=0
    _
  %s8 = ssub.s32 1, %s6
  %s9 = scalar_select 0, %s8, %s6
  $region1: #{tpu_custom_call.1} parent=0
    #allocation3 [shape = 'u8[368640]{0}', space=vmem, size = 0x5a000, scoped, tag = 'input window, operand 0, single buffered']
    #allocation4 [shape = 's32[2]{0}', space=sflag, size = 0x8, scoped, tag = 'scoped memory for tpu_custom_call.1']
    #allocation5 [shape = 's32[2]{0}', space=sflag, size = 0x8, scoped, tag = 'scoped memory for tpu_custom_call.1']
    #allocation6 [shape = 'u8[2359296]{0}', space=vmem, size = 0x240000, scoped, tag = 'input window, operand 1']
    #allocation7 [shape = 's32[2]{0}', space=sflag, size = 0x8, scoped, tag = 'scoped memory for tpu_custom_call.1']
    #allocation8 [shape = 'u8[6144]{0}', space=vmem, size = 0x1800, scoped, tag = 'input window, operand 2']
    #allocation9 [shape = 'u8[2359296]{0}', space=vmem, size = 0x240000, scoped, tag = 'input window, operand 3']
    #allocation10 [shape = 's32[2]{0}', space=sflag, size = 0x8, scoped, tag = 'scoped memory for tpu_custom_call.1']
    #allocation11 [shape = 'u8[3072]{0}', space=vmem, size = 0xc00, scoped, tag = 'input window, operand 4, single buffered']
    #allocation12 [shape = 'u8[368640]{0}', space=vmem, size = 0x5a000, scoped, tag = 'output window, operand 0, single buffered']
    %10 = vsyncpa [#allocation4], 0
    %11 = vsyncpa [#allocation7], 0
    %s12 = scalar_lea.sflag [#allocation7], 1
    %13 = vsyncpa %s12, 0
    %14 = vsyncpa [#allocation10], 0
    %s15 = scalar_lea.sflag [#allocation10], 1
    %16 = vsyncpa %s15, 0
    %17 = vsyncpa [#allocation5], 0
    loop: start=0, step=1, limit=6
    $region2: #{tpu_custom_call.1} parent=1 // loop_pre_header
      _
    $region3: #{tpu_custom_call.1} parent=1 // loop_header
      %s19 = sphi 0, %s23
      %p20 = scmp.ge.s32.totalorder %s19, 6
      %s26 = sphi 0, %s38
      %s27 = sphi 0, %s34
      %s28 = sphi 0, %s26
      %s29 = sphi 0, %s27
      %s30 = sphi 0, %s28
      %s31 = sphi 0, %s29
      %s41 = sphi 0, %s43
      %s44 = sphi 0, %s41
      %s45 = sphi 0, %s44
      %s61 = sphi 0, %s45
      %s67 = sphi 0, %s69
      %s70 = sphi 0, %s67
      %s71 = sphi 0, %s70
      %s87 = sphi 0, %s71
      %s93 = sphi 0, %s95
      %s96 = sphi 0, %s93
      %s97 = sphi 0, %s96
      %s113 = sphi 0, %s97
      %s119 = sphi 0, %s121
      %s122 = sphi 0, %s119
      %s123 = sphi 0, %s122
      %s139 = sphi 0, %s123
      %s143 = sphi 0, %s143
      %s145 = sphi 0, %s143
      %s146 = sphi 0, %s145
      %s160 = sphi 0, %s146
      %s166 = sphi 0, %s168
      %s169 = sphi 0, %s166
      %s170 = sphi 0, %s169
      %s186 = sphi 0, %s170
    $region4: #{tpu_custom_call.1} parent=1 // loop_header_branch
      %22 = sbr.rel (%p20) target = $region8
    $region5: #{tpu_custom_call.1} parent=1 // loop_body
      %s24 = ssub.s32 %s19, 1
      %s25 = ssub.s32 %s19, 2
      %s32 = sadd.s32 1, %s27
      %p33 = scmp.ge.s32.totalorder %s32, 4
      %s34 = scalar_select %p33, 0, %s32
      %s35 = sadd.s32 1, %s26
      %s36 = scalar_select %p33, %s35, %s26
      %p37 = scmp.ge.s32.totalorder %s36, 1
      %s38 = scalar_select %p37, 0, %s36
      %s39 = ssub.s32 %s26, %s38
      %p40 = scmp.eq.s32.totalorder %s39, 0
      %s42 = sadd.s32 %s41, 1
      %s43 = scalar_select %p40, %s41, %s42
      %p46 = pneg %p40
      %p47 = scmp.eq.s32.totalorder %s19, 3
      %p48 = por %p46, %p47
      %p49 = scmp.ne.s32.totalorder %s41, %s44
      %p50 = scmp.eq.s32.totalorder %s19, 0
      %p51 = por %p49, %p50
      %p52 = scmp.ne.s32.totalorder %s41, %s44
      %p53 = scmp.eq.s32.totalorder %s24, 3
      %p54 = por %p52, %p53
      %p55 = scmp.ne.s32.totalorder %s44, %s45
      %p56 = scmp.eq.s32.totalorder %s24, 0
      %p57 = por %p55, %p56
      %p58 = scmp.ne.s32.totalorder %s44, %s45
      %p59 = scmp.eq.s32.totalorder %s25, 3
      %p60 = por %p58, %p59
      %p62 = scmp.ne.s32.totalorder %s45, %s61
      %p63 = scmp.eq.s32.totalorder %s25, 0
      %p64 = por %p62, %p63
      %s65 = ssub.s32 %s27, %s34
      %p66 = scmp.eq.s32.totalorder %s65, 0
      %s68 = sadd.s32 %s67, 1
      %s69 = scalar_select %p66, %s67, %s68
      %p72 = pneg %p66
      %p73 = scmp.eq.s32.totalorder %s19, 3
      %p74 = por %p72, %p73
      %p75 = scmp.ne.s32.totalorder %s67, %s70
      %p76 = scmp.eq.s32.totalorder %s19, 0
      %p77 = por %p75, %p76
      %p78 = scmp.ne.s32.totalorder %s67, %s70
      %p79 = scmp.eq.s32.totalorder %s24, 3
      %p80 = por %p78, %p79
      %p81 = scmp.ne.s32.totalorder %s70, %s71
      %p82 = scmp.eq.s32.totalorder %s24, 0
      %p83 = por %p81, %p82
      %p84 = scmp.ne.s32.totalorder %s70, %s71
      %p85 = scmp.eq.s32.totalorder %s25, 3
      %p86 = por %p84, %p85
      %p88 = scmp.ne.s32.totalorder %s71, %s87
      %p89 = scmp.eq.s32.totalorder %s25, 0
      %p90 = por %p88, %p89
      %s91 = ssub.s32 %s27, %s34
      %p92 = scmp.eq.s32.totalorder %s91, 0
      %s94 = sadd.s32 %s93, 1
      %s95 = scalar_select %p92, %s93, %s94
      %p98 = pneg %p92
      %p99 = scmp.eq.s32.totalorder %s19, 3
      %p100 = por %p98, %p99
      %p101 = scmp.ne.s32.totalorder %s93, %s96
      %p102 = scmp.eq.s32.totalorder %s19, 0
      %p103 = por %p101, %p102
      %p104 = scmp.ne.s32.totalorder %s93, %s96
      %p105 = scmp.eq.s32.totalorder %s24, 3
      %p106 = por %p104, %p105
      %p107 = scmp.ne.s32.totalorder %s96, %s97
      %p108 = scmp.eq.s32.totalorder %s24, 0
      %p109 = por %p107, %p108
      %p110 = scmp.ne.s32.totalorder %s96, %s97
      %p111 = scmp.eq.s32.totalorder %s25, 3
      %p112 = por %p110, %p111
      %p114 = scmp.ne.s32.totalorder %s97, %s113
      %p115 = scmp.eq.s32.totalorder %s25, 0
      %p116 = por %p114, %p115
      %s117 = ssub.s32 %s27, %s34
      %p118 = scmp.eq.s32.totalorder %s117, 0
      %s120 = sadd.s32 %s119, 1
      %s121 = scalar_select %p118, %s119, %s120
      %p124 = pneg %p118
      %p125 = scmp.eq.s32.totalorder %s19, 3
      %p126 = por %p124, %p125
      %p127 = scmp.ne.s32.totalorder %s119, %s122
      %p128 = scmp.eq.s32.totalorder %s19, 0
      %p129 = por %p127, %p128
      %p130 = scmp.ne.s32.totalorder %s119, %s122
      %p131 = scmp.eq.s32.totalorder %s24, 3
      %p132 = por %p130, %p131
      %p133 = scmp.ne.s32.totalorder %s122, %s123
      %p134 = scmp.eq.s32.totalorder %s24, 0
      %p135 = por %p133, %p134
      %p136 = scmp.ne.s32.totalorder %s122, %s123
      %p137 = scmp.eq.s32.totalorder %s25, 3
      %p138 = por %p136, %p137
      %p140 = scmp.ne.s32.totalorder %s123, %s139
      %p141 = scmp.eq.s32.totalorder %s25, 0
      %p142 = por %p140, %p141
      %s144 = sadd.s32 %s143, 1
      %p147 = scmp.eq.s32.totalorder %s19, 3
      %p148 = scmp.ne.s32.totalorder %s143, %s145
      %p149 = scmp.eq.s32.totalorder %s19, 0
      %p150 = por %p148, %p149
      %p151 = scmp.ne.s32.totalorder %s143, %s145
      %p152 = scmp.eq.s32.totalorder %s24, 3
      %p153 = por %p151, %p152
      %p154 = scmp.ne.s32.totalorder %s145, %s146
      %p155 = scmp.eq.s32.totalorder %s24, 0
      %p156 = por %p154, %p155
      %p157 = scmp.ne.s32.totalorder %s145, %s146
      %p158 = scmp.eq.s32.totalorder %s25, 3
      %p159 = por %p157, %p158
      %p161 = scmp.ne.s32.totalorder %s146, %s160
      %p162 = scmp.eq.s32.totalorder %s25, 0
      %p163 = por %p161, %p162
      %s164 = ssub.s32 %s26, %s38
      %p165 = scmp.eq.s32.totalorder %s164, 0
      %s167 = sadd.s32 %s166, 1
      %s168 = scalar_select %p165, %s166, %s167
      %p171 = pneg %p165
      %p172 = scmp.eq.s32.totalorder %s19, 3
      %p173 = por %p171, %p172
      %p174 = scmp.ne.s32.totalorder %s166, %s169
      %p175 = scmp.eq.s32.totalorder %s19, 0
      %p176 = por %p174, %p175
      %p177 = scmp.ne.s32.totalorder %s166, %s169
      %p178 = scmp.eq.s32.totalorder %s24, 3
      %p179 = por %p177, %p178
      %p180 = scmp.ne.s32.totalorder %s169, %s170
      %p181 = scmp.eq.s32.totalorder %s24, 0
      %p182 = por %p180, %p181
      %p183 = scmp.ne.s32.totalorder %s169, %s170
      %p184 = scmp.eq.s32.totalorder %s25, 3
      %p185 = por %p183, %p184
      %p187 = scmp.ne.s32.totalorder %s170, %s186
      %p188 = scmp.eq.s32.totalorder %s25, 0
      %p189 = por %p187, %p188
      %p190 = scmp.le.s32.totalorder 1, %s19
      %p191 = scmp.lt.s32.totalorder %s19, 5
      %p192 = pnand %p190, %p191
      %p193 = pneg %p192
      // Predicated region
      $region9: #{tpu_custom_call.1} parent=5 // pred_check
        _
      $region10: #{tpu_custom_call.1} parent=5 // pred_check_branch
        %195 = sbr.rel (%p192) target = $region12
      $region11: #{tpu_custom_call.1} parent=5 // pred_region
        %s196 = ssub.s32 %s19, 1
        // Predicated region
        $region13: #{tpu_custom_call.1} parent=11 // pred_check
          %p197 = pneg %p57
        $region14: #{tpu_custom_call.1} parent=11 // pred_check_branch
          %199 = sbr.rel (%p197) target = $region16
        $region15: #{tpu_custom_call.1} parent=11 // pred_region
          %s200 = smul.u32 15, %s28
          %s202 = ssub.s32 11520, 11520
          %203 = vsyncadd [#allocation4], %s202
          %s204 = smul.addr %s200, 6
          %s205 = smul.addr %s204, 128
          %s206 = scalar_lea.hbm %s0, %s205
          %s207 = sshll.u32 [#allocation3], 4
          %s208 = int_to_ptr.vmem [resolvable:$true] %s207
          %213 = dma.hbm_to_vmem [thread:$0]  %s206, 11520, %s208, [#allocation4], 768, 768, 48
        $region16: #{tpu_custom_call.1} parent=11 // pred_fallthru
          _
        // Predicated region
        $region17: #{tpu_custom_call.1} parent=11 // pred_check
          %p214 = pneg %p156
        $region18: #{tpu_custom_call.1} parent=11 // pred_check_branch
          %216 = sbr.rel (%p214) target = $region20
        $region19: #{tpu_custom_call.1} parent=11 // pred_region
          %s218 = ssub.s32 96, 96
          %219 = vsyncadd [#allocation10], %s218
          %s221 = sshll.u32 [#allocation11], 4
          %s222 = int_to_ptr.vmem [resolvable:$true] %s221
          %224 = dma.hbm_to_vmem [thread:$0]  %s4, 96, %s222, [#allocation10]
        $region20: #{tpu_custom_call.1} parent=11 // pred_fallthru
          _
      $region12: #{tpu_custom_call.1} parent=5 // pred_fallthru
        _
      %p225 = scmp.lt.s32.totalorder %s19, 4
      // Predicated region
      $region21: #{tpu_custom_call.1} parent=5 // pred_check
        %p226 = pneg %p225
      $region22: #{tpu_custom_call.1} parent=5 // pred_check_branch
        %228 = sbr.rel (%p226) target = $region24
      $region23: #{tpu_custom_call.1} parent=5 // pred_region
        // Predicated region
        $region25: #{tpu_custom_call.1} parent=23 // pred_check
          %p229 = pneg %p77
        $region26: #{tpu_custom_call.1} parent=23 // pred_check_branch
          %231 = sbr.rel (%p229) target = $region28
        $region27: #{tpu_custom_call.1} parent=23 // pred_region
          %s232 = sand.u32 %s19, 1
          %s233 = scalar_lea.sflag [#allocation7], %s232
          %s234 = sand.u32 %s67, 1
          %s235 = smul.addr %s234, 2304
          %s236 = scalar_lea.vmem [#allocation6], %s235
          %s237 = smul.u32 6, %s27
          %s239 = ssub.s32 36864, 36864
          %240 = vsyncadd %s233, %s239
          %s241 = smul.addr %s237, 64
          %s242 = scalar_lea.hbm %s1, %s241
          %s243 = sshll.u32 %s236, 4
          %s244 = int_to_ptr.vmem [resolvable:$true] %s243
          %249 = dma.hbm_to_vmem [thread:$0]  %s242, 36864, %s244, %s233, 1536, 384, 24
        $region28: #{tpu_custom_call.1} parent=23 // pred_fallthru
          _
        // Predicated region
        $region29: #{tpu_custom_call.1} parent=23 // pred_check
          %p250 = pneg %p103
        $region30: #{tpu_custom_call.1} parent=23 // pred_check_branch
          %252 = sbr.rel (%p250) target = $region32
        $region31: #{tpu_custom_call.1} parent=23 // pred_region
          %s253 = sand.u32 %s19, 1
          %s254 = scalar_lea.sflag [#allocation7], %s253
          %s255 = sand.u32 %s93, 1
          %s256 = smul.addr %s255, 6
          %s257 = scalar_lea.vmem [#allocation8], %s256
          %s258 = smul.u32 6, %s27
          %s260 = ssub.s32 96, 96
          %261 = vsyncadd %s254, %s260
          %s262 = smul.addr %s258, 16
          %s263 = scalar_lea.hbm %s2, %s262
          %s265 = sshll.u32 %s257, 4
          %s266 = int_to_ptr.vmem [resolvable:$true] %s265
          %268 = dma.hbm_to_vmem [thread:$0]  %s263, 96, %s266, %s254
        $region32: #{tpu_custom_call.1} parent=23 // pred_fallthru
          _
        // Predicated region
        $region33: #{tpu_custom_call.1} parent=23 // pred_check
          %p269 = pneg %p129
        $region34: #{tpu_custom_call.1} parent=23 // pred_check_branch
          %271 = sbr.rel (%p269) target = $region36
        $region35: #{tpu_custom_call.1} parent=23 // pred_region
          %s272 = sand.u32 %s19, 1
          %s273 = scalar_lea.sflag [#allocation10], %s272
          %s274 = sand.u32 %s119, 1
          %s275 = smul.addr %s274, 2304
          %s276 = scalar_lea.vmem [#allocation9], %s275
          %s277 = smul.u32 96, %s27
          %s279 = ssub.s32 36864, 36864
          %280 = vsyncadd %s273, %s279
          %s281 = smul.addr %s277, 6
          %s282 = smul.addr %s281, 64
          %s283 = scalar_lea.hbm %s3, %s282
          %s284 = sshll.u32 %s276, 4
          %s285 = int_to_ptr.vmem [resolvable:$true] %s284
          %290 = dma.hbm_to_vmem [thread:$0]  %s283, 36864, %s285, %s273, 384, 384, 24
        $region36: #{tpu_custom_call.1} parent=23 // pred_fallthru
          _
      $region24: #{tpu_custom_call.1} parent=5 // pred_fallthru
        _
      %p291 = scmp.le.s32.totalorder 1, %s19
      %p292 = scmp.lt.s32.totalorder %s19, 5
      %p293 = pnand %p291, %p292
      %p294 = pneg %p293
      // Predicated region
      $region37: #{tpu_custom_call.1} parent=5 // pred_check
        _
      $region38: #{tpu_custom_call.1} parent=5 // pred_check_branch
        %296 = sbr.rel (%p293) target = $region40
      $region39: #{tpu_custom_call.1} parent=5 // pred_region
        %s297 = ssub.s32 %s19, 1
        // Predicated region
        $region41: #{tpu_custom_call.1} parent=39 // pred_check
          %p298 = pneg %p57
        $region42: #{tpu_custom_call.1} parent=39 // pred_check_branch
          %300 = sbr.rel (%p298) target = $region44
        $region43: #{tpu_custom_call.1} parent=39 // pred_region
          %301 = dma.done [#allocation4], 11520
        $region44: #{tpu_custom_call.1} parent=39 // pred_fallthru
          _
        %s302 = sand.u32 %s24, 1
        %s303 = scalar_lea.sflag [#allocation7], %s302
        %s304 = sand.u32 %s70, 1
        %s305 = smul.addr %s304, 2304
        %s306 = scalar_lea.vmem [#allocation6], %s305
        // Predicated region
        $region45: #{tpu_custom_call.1} parent=39 // pred_check
          %p307 = pneg %p83
        $region46: #{tpu_custom_call.1} parent=39 // pred_check_branch
          %309 = sbr.rel (%p307) target = $region48
        $region47: #{tpu_custom_call.1} parent=39 // pred_region
          %310 = dma.done %s303, 36864
        $region48: #{tpu_custom_call.1} parent=39 // pred_fallthru
          _
        %s311 = sand.u32 %s24, 1
        %s312 = scalar_lea.sflag [#allocation7], %s311
        %s313 = sand.u32 %s96, 1
        %s314 = smul.addr %s313, 6
        %s315 = scalar_lea.vmem [#allocation8], %s314
        // Predicated region
        $region49: #{tpu_custom_call.1} parent=39 // pred_check
          %p316 = pneg %p109
        $region50: #{tpu_custom_call.1} parent=39 // pred_check_branch
          %318 = sbr.rel (%p316) target = $region52
        $region51: #{tpu_custom_call.1} parent=39 // pred_region
          %319 = dma.done %s312, 96
        $region52: #{tpu_custom_call.1} parent=39 // pred_fallthru
          _
        %s320 = sand.u32 %s24, 1
        %s321 = scalar_lea.sflag [#allocation10], %s320
        %s322 = sand.u32 %s122, 1
        %s323 = smul.addr %s322, 2304
        %s324 = scalar_lea.vmem [#allocation9], %s323
        // Predicated region
        $region53: #{tpu_custom_call.1} parent=39 // pred_check
          %p325 = pneg %p135
        $region54: #{tpu_custom_call.1} parent=39 // pred_check_branch
          %327 = sbr.rel (%p325) target = $region56
        $region55: #{tpu_custom_call.1} parent=39 // pred_region
          %328 = dma.done %s321, 36864
        $region56: #{tpu_custom_call.1} parent=39 // pred_fallthru
          _
        // Predicated region
        $region57: #{tpu_custom_call.1} parent=39 // pred_check
          %p329 = pneg %p156
        $region58: #{tpu_custom_call.1} parent=39 // pred_check_branch
          %331 = sbr.rel (%p329) target = $region60
        $region59: #{tpu_custom_call.1} parent=39 // pred_region
          %332 = dma.done [#allocation10], 96
        $region60: #{tpu_custom_call.1} parent=39 // pred_fallthru
          _
        %p333 = pneg %p57
        %p334 = pneg %p54
        %s335 = sand.u32 %s24, 1
        %s336 = scalar_lea.sflag [#allocation7], %s335
        %s337 = sand.u32 %s70, 1
        %s338 = smul.addr %s337, 2304
        %s339 = scalar_lea.vmem [#allocation6], %s338
        %p340 = pneg %p83
        %p341 = pneg %p80
        %s342 = sand.u32 %s24, 1
        %s343 = scalar_lea.sflag [#allocation7], %s342
        %s344 = sand.u32 %s96, 1
        %s345 = smul.addr %s344, 6
        %s346 = scalar_lea.vmem [#allocation8], %s345
        %p347 = pneg %p109
        %p348 = pneg %p106
        %s349 = sand.u32 %s24, 1
        %s350 = scalar_lea.sflag [#allocation10], %s349
        %s351 = sand.u32 %s122, 1
        %s352 = smul.addr %s351, 2304
        %s353 = scalar_lea.vmem [#allocation9], %s352
        %p354 = pneg %p135
        %p355 = pneg %p132
        %p356 = pneg %p156
        %p357 = pneg %p153
        %p358 = pneg %p182
        %p359 = pneg %p179
        %s360 = smul.u32 15, %s28
        %s361 = smul.u32 6, %s29
        %s362 = smul.u32 6, %s29
        %s363 = smul.u32 96, %s29
        %s364 = smul.u32 15, %s28
        %p365 = scmp.eq.s32.totalorder %s29, 0
        // Predicated region
        $region61: #{tpu_custom_call.1} parent=39 // pred_check
          %p366 = pneg %p365
        $region62: #{tpu_custom_call.1} parent=39 // pred_check_branch
          %368 = sbr.rel (%p366) target = $region64
        $region63: #{tpu_custom_call.1} parent=39 // pred_region
          %369 = vst [vmem:[#allocation2] sm:$0xff] 0.0
          %370 = vst [vmem:[#allocation2 + $0x8] sm:$0xff] 0.0
          %371 = vst [vmem:[#allocation2 + $0x10] sm:$0xff] 0.0
          %372 = vst [vmem:[#allocation2 + $0x18] sm:$0xff] 0.0
          %373 = vst [vmem:[#allocation2 + $0x20] sm:$0xff] 0.0
          %374 = vst [vmem:[#allocation2 + $0x28] sm:$0xff] 0.0
          %375 = vst [vmem:[#allocation2 + $0x30] sm:$0xff] 0.0
          %376 = vst [vmem:[#allocation2 + $0x38] sm:$0xff] 0.0
          %377 = vst [vmem:[#allocation2 + $0x40] sm:$0xff] 0.0
          %378 = vst [vmem:[#allocation2 + $0x48] sm:$0xff] 0.0
          %379 = vst [vmem:[#allocation2 + $0x50] sm:$0xff] 0.0
          %380 = vst [vmem:[#allocation2 + $0x58] sm:$0xff] 0.0
          %381 = vst [vmem:[#allocation2 + $0x60] sm:$0xff] 0.0
          %382 = vst [vmem:[#allocation2 + $0x68] sm:$0xff] 0.0
          %383 = vst [vmem:[#allocation2 + $0x70] sm:$0xff] 0.0
          %384 = vst [vmem:[#allocation2 + $0x78] sm:$0xff] 0.0
          %385 = vst [vmem:[#allocation2 + $0x80] sm:$0xff] 0.0
          %386 = vst [vmem:[#allocation2 + $0x88] sm:$0xff] 0.0
          %387 = vst [vmem:[#allocation2 + $0x90] sm:$0xff] 0.0
          %388 = vst [vmem:[#allocation2 + $0x98] sm:$0xff] 0.0
          %389 = vst [vmem:[#allocation2 + $0xa0] sm:$0xff] 0.0
          %390 = vst [vmem:[#allocation2 + $0xa8] sm:$0xff] 0.0
          %391 = vst [vmem:[#allocation2 + $0xb0] sm:$0xff] 0.0
          %392 = vst [vmem:[#allocation2 + $0xb8] sm:$0xff] 0.0
          %393 = vst [vmem:[#allocation2 + $0xc0] sm:$0xff] 0.0
          %394 = vst [vmem:[#allocation2 + $0xc8] sm:$0xff] 0.0
          %395 = vst [vmem:[#allocation2 + $0xd0] sm:$0xff] 0.0
          %396 = vst [vmem:[#allocation2 + $0xd8] sm:$0xff] 0.0
          %397 = vst [vmem:[#allocation2 + $0xe0] sm:$0xff] 0.0
          %398 = vst [vmem:[#allocation2 + $0xe8] sm:$0xff] 0.0
          %399 = vst [vmem:[#allocation2 + $0xf0] sm:$0xff] 0.0
          %400 = vst [vmem:[#allocation2 + $0xf8] sm:$0xff] 0.0
          %401 = vst [vmem:[#allocation2 + $0x100] sm:$0xff] 0.0
          %402 = vst [vmem:[#allocation2 + $0x108] sm:$0xff] 0.0
          %403 = vst [vmem:[#allocation2 + $0x110] sm:$0xff] 0.0
          %404 = vst [vmem:[#allocation2 + $0x118] sm:$0xff] 0.0
          %405 = vst [vmem:[#allocation2 + $0x120] sm:$0xff] 0.0
          %406 = vst [vmem:[#allocation2 + $0x128] sm:$0xff] 0.0
          %407 = vst [vmem:[#allocation2 + $0x130] sm:$0xff] 0.0
          %408 = vst [vmem:[#allocation2 + $0x138] sm:$0xff] 0.0
          %409 = vst [vmem:[#allocation2 + $0x140] sm:$0xff] 0.0
          %410 = vst [vmem:[#allocation2 + $0x148] sm:$0xff] 0.0
          %411 = vst [vmem:[#allocation2 + $0x150] sm:$0xff] 0.0
          %412 = vst [vmem:[#allocation2 + $0x158] sm:$0xff] 0.0
          %413 = vst [vmem:[#allocation2 + $0x160] sm:$0xff] 0.0
          %414 = vst [vmem:[#allocation2 + $0x168] sm:$0xff] 0.0
          %415 = vst [vmem:[#allocation2 + $0x170] sm:$0xff] 0.0
          %416 = vst [vmem:[#allocation2 + $0x178] sm:$0xff] 0.0
          %417 = vst [vmem:[#allocation2 + $0x180] sm:$0xff] 0.0
          %418 = vst [vmem:[#allocation2 + $0x188] sm:$0xff] 0.0
          %419 = vst [vmem:[#allocation2 + $0x190] sm:$0xff] 0.0
          %420 = vst [vmem:[#allocation2 + $0x198] sm:$0xff] 0.0
          %421 = vst [vmem:[#allocation2 + $0x1a0] sm:$0xff] 0.0
          %422 = vst [vmem:[#allocation2 + $0x1a8] sm:$0xff] 0.0
          %423 = vst [vmem:[#allocation2 + $0x1b0] sm:$0xff] 0.0
          %424 = vst [vmem:[#allocation2 + $0x1b8] sm:$0xff] 0.0
          %425 = vst [vmem:[#allocation2 + $0x1c0] sm:$0xff] 0.0
          %426 = vst [vmem:[#allocation2 + $0x1c8] sm:$0xff] 0.0
          %427 = vst [vmem:[#allocation2 + $0x1d0] sm:$0xff] 0.0
          %428 = vst [vmem:[#allocation2 + $0x1d8] sm:$0xff] 0.0
          %429 = vst [vmem:[#allocation2 + $0x1e0] sm:$0xff] 0.0
          %430 = vst [vmem:[#allocation2 + $0x1e8] sm:$0xff] 0.0
          %431 = vst [vmem:[#allocation2 + $0x1f0] sm:$0xff] 0.0
          %432 = vst [vmem:[#allocation2 + $0x1f8] sm:$0xff] 0.0
          %433 = vst [vmem:[#allocation2 + $0x200] sm:$0xff] 0.0
          %434 = vst [vmem:[#allocation2 + $0x208] sm:$0xff] 0.0
          %435 = vst [vmem:[#allocation2 + $0x210] sm:$0xff] 0.0
          %436 = vst [vmem:[#allocation2 + $0x218] sm:$0xff] 0.0
          %437 = vst [vmem:[#allocation2 + $0x220] sm:$0xff] 0.0
          %438 = vst [vmem:[#allocation2 + $0x228] sm:$0xff] 0.0
          %439 = vst [vmem:[#allocation2 + $0x230] sm:$0xff] 0.0
          %440 = vst [vmem:[#allocation2 + $0x238] sm:$0xff] 0.0
          %441 = vst [vmem:[#allocation2 + $0x240] sm:$0xff] 0.0
          %442 = vst [vmem:[#allocation2 + $0x248] sm:$0xff] 0.0
          %443 = vst [vmem:[#allocation2 + $0x250] sm:$0xff] 0.0
          %444 = vst [vmem:[#allocation2 + $0x258] sm:$0xff] 0.0
          %445 = vst [vmem:[#allocation2 + $0x260] sm:$0xff] 0.0
          %446 = vst [vmem:[#allocation2 + $0x268] sm:$0xff] 0.0
          %447 = vst [vmem:[#allocation2 + $0x270] sm:$0xff] 0.0
          %448 = vst [vmem:[#allocation2 + $0x278] sm:$0xff] 0.0
          %449 = vst [vmem:[#allocation2 + $0x280] sm:$0xff] 0.0
          %450 = vst [vmem:[#allocation2 + $0x288] sm:$0xff] 0.0
          %451 = vst [vmem:[#allocation2 + $0x290] sm:$0xff] 0.0
          %452 = vst [vmem:[#allocation2 + $0x298] sm:$0xff] 0.0
          %453 = vst [vmem:[#allocation2 + $0x2a0] sm:$0xff] 0.0
          %454 = vst [vmem:[#allocation2 + $0x2a8] sm:$0xff] 0.0
          %455 = vst [vmem:[#allocation2 + $0x2b0] sm:$0xff] 0.0
          %456 = vst [vmem:[#allocation2 + $0x2b8] sm:$0xff] 0.0
          %457 = vst [vmem:[#allocation2 + $0x2c0] sm:$0xff] 0.0
          %458 = vst [vmem:[#allocation2 + $0x2c8] sm:$0xff] 0.0
        $region64: #{tpu_custom_call.1} parent=39 // pred_fallthru
          _
        %v459 = vld [vmem:[#allocation3] sm:$0xff]
        %v460 = vld [vmem:[#allocation3 + $0x8] sm:$0xff]
        %v461 = vld [vmem:[#allocation3 + $0x10] sm:$0xff]
        %v462 = vld [vmem:[#allocation3 + $0x18] sm:$0xff]
        %v463 = vld [vmem:[#allocation3 + $0x20] sm:$0xff]
        %v464 = vld [vmem:[#allocation3 + $0x28] sm:$0xff]
        %v465 = vld [vmem:[#allocation3 + $0x30] sm:$0xff]
        %v466 = vld [vmem:[#allocation3 + $0x38] sm:$0xff]
        %v467 = vld [vmem:[#allocation3 + $0x40] sm:$0xff]
        %v468 = vld [vmem:[#allocation3 + $0x48] sm:$0xff]
        %v469 = vld [vmem:[#allocation3 + $0x50] sm:$0xff]
        %v470 = vld [vmem:[#allocation3 + $0x58] sm:$0xff]
        %v471 = vld [vmem:[#allocation3 + $0x60] sm:$0xff]
        %v472 = vld [vmem:[#allocation3 + $0x68] sm:$0xff]
        %v473 = vld [vmem:[#allocation3 + $0x70] sm:$0xff]
        %v474 = vld [vmem:[#allocation3 + $0x78] sm:$0xff]
        %v475 = vld [vmem:[#allocation3 + $0x80] sm:$0xff]
        %v476 = vld [vmem:[#allocation3 + $0x88] sm:$0xff]
        %v477 = vld [vmem:[#allocation3 + $0x90] sm:$0xff]
        %v478 = vld [vmem:[#allocation3 + $0x98] sm:$0xff]
        %v479 = vld [vmem:[#allocation3 + $0xa0] sm:$0xff]
        %v480 = vld [vmem:[#allocation3 + $0xa8] sm:$0xff]
        %v481 = vld [vmem:[#allocation3 + $0xb0] sm:$0xff]
        %v482 = vld [vmem:[#allocation3 + $0xb8] sm:$0xff]
        %v483 = vld [vmem:[#allocation3 + $0xc0] sm:$0xff]
        %v484 = vld [vmem:[#allocation3 + $0xc8] sm:$0xff]
        %v485 = vld [vmem:[#allocation3 + $0xd0] sm:$0xff]
        %v486 = vld [vmem:[#allocation3 + $0xd8] sm:$0xff]
        %v487 = vld [vmem:[#allocation3 + $0xe0] sm:$0xff]
        %v488 = vld [vmem:[#allocation3 + $0xe8] sm:$0xff]
        %v489 = vld [vmem:[#allocation3 + $0xf0] sm:$0xff]
        %v490 = vld [vmem:[#allocation3 + $0xf8] sm:$0xff]
        %v491 = vld [vmem:[#allocation3 + $0x100] sm:$0xff]
        %v492 = vld [vmem:[#allocation3 + $0x108] sm:$0xff]
        %v493 = vld [vmem:[#allocation3 + $0x110] sm:$0xff]
        %v494 = vld [vmem:[#allocation3 + $0x118] sm:$0xff]
        %v495 = vld [vmem:[#allocation3 + $0x120] sm:$0xff]
        %v496 = vld [vmem:[#allocation3 + $0x128] sm:$0xff]
        %v497 = vld [vmem:[#allocation3 + $0x130] sm:$0xff]
        %v498 = vld [vmem:[#allocation3 + $0x138] sm:$0xff]
        %v499 = vld [vmem:[#allocation3 + $0x140] sm:$0xff]
        %v500 = vld [vmem:[#allocation3 + $0x148] sm:$0xff]
        %v501 = vld [vmem:[#allocation3 + $0x150] sm:$0xff]
        %v502 = vld [vmem:[#allocation3 + $0x158] sm:$0xff]
        %v503 = vld [vmem:[#allocation3 + $0x160] sm:$0xff]
        %v504 = vld [vmem:[#allocation3 + $0x168] sm:$0xff]
        %v505 = vld [vmem:[#allocation3 + $0x170] sm:$0xff]
        %v506 = vld [vmem:[#allocation3 + $0x178] sm:$0xff]
        %v507 = vld [vmem:[#allocation3 + $0x180] sm:$0xff]
        %v508 = vld [vmem:[#allocation3 + $0x188] sm:$0xff]
        %v509 = vld [vmem:[#allocation3 + $0x190] sm:$0xff]
        %v510 = vld [vmem:[#allocation3 + $0x198] sm:$0xff]
        %v511 = vld [vmem:[#allocation3 + $0x1a0] sm:$0xff]
        %v512 = vld [vmem:[#allocation3 + $0x1a8] sm:$0xff]
        %v513 = vld [vmem:[#allocation3 + $0x1b0] sm:$0xff]
        %v514 = vld [vmem:[#allocation3 + $0x1b8] sm:$0xff]
        %v515 = vld [vmem:[#allocation3 + $0x1c0] sm:$0xff]
        %v516 = vld [vmem:[#allocation3 + $0x1c8] sm:$0xff]
        %v517 = vld [vmem:[#allocation3 + $0x1d0] sm:$0xff]
        %v518 = vld [vmem:[#allocation3 + $0x1d8] sm:$0xff]
        %v519 = vld [vmem:[#allocation3 + $0x1e0] sm:$0xff]
        %v520 = vld [vmem:[#allocation3 + $0x1e8] sm:$0xff]
        %v521 = vld [vmem:[#allocation3 + $0x1f0] sm:$0xff]
        %v522 = vld [vmem:[#allocation3 + $0x1f8] sm:$0xff]
        %v523 = vld [vmem:[#allocation3 + $0x200] sm:$0xff]
        %v524 = vld [vmem:[#allocation3 + $0x208] sm:$0xff]
        %v525 = vld [vmem:[#allocation3 + $0x210] sm:$0xff]
        %v526 = vld [vmem:[#allocation3 + $0x218] sm:$0xff]
        %v527 = vld [vmem:[#allocation3 + $0x220] sm:$0xff]
        %v528 = vld [vmem:[#allocation3 + $0x228] sm:$0xff]
        %v529 = vld [vmem:[#allocation3 + $0x230] sm:$0xff]
        %v530 = vld [vmem:[#allocation3 + $0x238] sm:$0xff]
        %v531 = vld [vmem:[#allocation3 + $0x240] sm:$0xff]
        %v532 = vld [vmem:[#allocation3 + $0x248] sm:$0xff]
        %v533 = vld [vmem:[#allocation3 + $0x250] sm:$0xff]
        %v534 = vld [vmem:[#allocation3 + $0x258] sm:$0xff]
        %v535 = vld [vmem:[#allocation3 + $0x260] sm:$0xff]
        %v536 = vld [vmem:[#allocation3 + $0x268] sm:$0xff]
        %v537 = vld [vmem:[#allocation3 + $0x270] sm:$0xff]
        %v538 = vld [vmem:[#allocation3 + $0x278] sm:$0xff]
        %v539 = vld [vmem:[#allocation3 + $0x280] sm:$0xff]
        %v540 = vld [vmem:[#allocation3 + $0x288] sm:$0xff]
        %v541 = vld [vmem:[#allocation3 + $0x290] sm:$0xff]
        %v542 = vld [vmem:[#allocation3 + $0x298] sm:$0xff]
        %v543 = vld [vmem:[#allocation3 + $0x2a0] sm:$0xff]
        %v544 = vld [vmem:[#allocation3 + $0x2a8] sm:$0xff]
        %v545 = vld [vmem:[#allocation3 + $0x2b0] sm:$0xff]
        %v546 = vld [vmem:[#allocation3 + $0x2b8] sm:$0xff]
        %v547 = vld [vmem:[#allocation3 + $0x2c0] sm:$0xff]
        %v548 = vld [vmem:[#allocation3 + $0x2c8] sm:$0xff]
        %v549 = vpack.c.bf16 %v465, %v459
        %v550 = vpack.c.bf16 %v466, %v460
        %v551 = vpack.c.bf16 %v467, %v461
        %v552 = vpack.c.bf16 %v468, %v462
        %v553 = vpack.c.bf16 %v469, %v463
        %v554 = vpack.c.bf16 %v470, %v464
        %v555 = vpack.c.bf16 %v477, %v471
        %v556 = vpack.c.bf16 %v478, %v472
        %v557 = vpack.c.bf16 %v479, %v473
        %v558 = vpack.c.bf16 %v480, %v474
        %v559 = vpack.c.bf16 %v481, %v475
        %v560 = vpack.c.bf16 %v482, %v476
        %v561 = vpack.c.bf16 %v489, %v483
        %v562 = vpack.c.bf16 %v490, %v484
        %v563 = vpack.c.bf16 %v491, %v485
        %v564 = vpack.c.bf16 %v492, %v486
        %v565 = vpack.c.bf16 %v493, %v487
        %v566 = vpack.c.bf16 %v494, %v488
        %v567 = vpack.c.bf16 %v501, %v495
        %v568 = vpack.c.bf16 %v502, %v496
        %v569 = vpack.c.bf16 %v503, %v497
        %v570 = vpack.c.bf16 %v504, %v498
        %v571 = vpack.c.bf16 %v505, %v499
        %v572 = vpack.c.bf16 %v506, %v500
        %v573 = vpack.c.bf16 %v513, %v507
        %v574 = vpack.c.bf16 %v514, %v508
        %v575 = vpack.c.bf16 %v515, %v509
        %v576 = vpack.c.bf16 %v516, %v510
        %v577 = vpack.c.bf16 %v517, %v511
        %v578 = vpack.c.bf16 %v518, %v512
        %v579 = vpack.c.bf16 %v525, %v519
        %v580 = vpack.c.bf16 %v526, %v520
        %v581 = vpack.c.bf16 %v527, %v521
        %v582 = vpack.c.bf16 %v528, %v522
        %v583 = vpack.c.bf16 %v529, %v523
        %v584 = vpack.c.bf16 %v530, %v524
        %v585 = vpack.c.bf16 %v537, %v531
        %v586 = vpack.c.bf16 %v538, %v532
        %v587 = vpack.c.bf16 %v539, %v533
        %v588 = vpack.c.bf16 %v540, %v534
        %v589 = vpack.c.bf16 %v541, %v535
        %v590 = vpack.c.bf16 %v542, %v536
        %v591 = vpack.c.bf16 %v543, %v543
        %v592 = vpack.c.bf16 %v544, %v544
        %v593 = vpack.c.bf16 %v545, %v545
        %v594 = vpack.c.bf16 %v546, %v546
        %v595 = vpack.c.bf16 %v547, %v547
        %v596 = vpack.c.bf16 %v548, %v548
        %v597 = vld [vmem:[%s306] sm:$0xff]
        %v598 = vld [vmem:[%s306 + $0x8] sm:$0xff]
        %v599 = vld [vmem:[%s306 + $0x10] sm:$0xff]
        %v600 = vld [vmem:[%s306 + $0x18] sm:$0xff]
        %v601 = vld [vmem:[%s306 + $0x20] sm:$0xff]
        %v602 = vld [vmem:[%s306 + $0x28] sm:$0xff]
        %v603 = vld [vmem:[%s306 + $0x30] sm:$0xff]
        %v604 = vld [vmem:[%s306 + $0x38] sm:$0xff]
        %v605 = vld [vmem:[%s306 + $0x40] sm:$0xff]
        %v606 = vld [vmem:[%s306 + $0x48] sm:$0xff]
        %v607 = vld [vmem:[%s306 + $0x50] sm:$0xff]
        %v608 = vld [vmem:[%s306 + $0x58] sm:$0xff]
        %v609 = vld [vmem:[%s306 + $0x60] sm:$0xff]
        %v610 = vld [vmem:[%s306 + $0x68] sm:$0xff]
        %v611 = vld [vmem:[%s306 + $0x70] sm:$0xff]
        %v612 = vld [vmem:[%s306 + $0x78] sm:$0xff]
        %v613 = vld [vmem:[%s306 + $0x80] sm:$0xff]
        %v614 = vld [vmem:[%s306 + $0x88] sm:$0xff]
        %v615 = vld [vmem:[%s306 + $0x90] sm:$0xff]
        %v616 = vld [vmem:[%s306 + $0x98] sm:$0xff]
        %v617 = vld [vmem:[%s306 + $0xa0] sm:$0xff]
        %v618 = vld [vmem:[%s306 + $0xa8] sm:$0xff]
        %v619 = vld [vmem:[%s306 + $0xb0] sm:$0xff]
        %v620 = vld [vmem:[%s306 + $0xb8] sm:$0xff]
        %v621 = vld [vmem:[%s306 + $0xc0] sm:$0xff]
        %v622 = vld [vmem:[%s306 + $0xc8] sm:$0xff]
        %v623 = vld [vmem:[%s306 + $0xd0] sm:$0xff]
        %v624 = vld [vmem:[%s306 + $0xd8] sm:$0xff]
        %v625 = vld [vmem:[%s306 + $0xe0] sm:$0xff]
        %v626 = vld [vmem:[%s306 + $0xe8] sm:$0xff]
        %v627 = vld [vmem:[%s306 + $0xf0] sm:$0xff]
        %v628 = vld [vmem:[%s306 + $0xf8] sm:$0xff]
        %v629 = vld [vmem:[%s306 + $0x100] sm:$0xff]
        %v630 = vld [vmem:[%s306 + $0x108] sm:$0xff]
        %v631 = vld [vmem:[%s306 + $0x110] sm:$0xff]
        %v632 = vld [vmem:[%s306 + $0x118] sm:$0xff]
        %v633 = vld [vmem:[%s306 + $0x120] sm:$0xff]
        %v634 = vld [vmem:[%s306 + $0x128] sm:$0xff]
        %v635 = vld [vmem:[%s306 + $0x130] sm:$0xff]
        %v636 = vld [vmem:[%s306 + $0x138] sm:$0xff]
        %v637 = vld [vmem:[%s306 + $0x140] sm:$0xff]
        %v638 = vld [vmem:[%s306 + $0x148] sm:$0xff]
        %v639 = vld [vmem:[%s306 + $0x150] sm:$0xff]
        %v640 = vld [vmem:[%s306 + $0x158] sm:$0xff]
        %v641 = vld [vmem:[%s306 + $0x160] sm:$0xff]
        %v642 = vld [vmem:[%s306 + $0x168] sm:$0xff]
        %v643 = vld [vmem:[%s306 + $0x170] sm:$0xff]
        %v644 = vld [vmem:[%s306 + $0x178] sm:$0xff]
        %v645 = vld [vmem:[%s306 + $0x180] sm:$0xff]
        %v646 = vld [vmem:[%s306 + $0x188] sm:$0xff]
        %v647 = vld [vmem:[%s306 + $0x190] sm:$0xff]
        %v648 = vld [vmem:[%s306 + $0x198] sm:$0xff]
        %v649 = vld [vmem:[%s306 + $0x1a0] sm:$0xff]
        %v650 = vld [vmem:[%s306 + $0x1a8] sm:$0xff]
        %v651 = vld [vmem:[%s306 + $0x1b0] sm:$0xff]
        %v652 = vld [vmem:[%s306 + $0x1b8] sm:$0xff]
        %v653 = vld [vmem:[%s306 + $0x1c0] sm:$0xff]
        %v654 = vld [vmem:[%s306 + $0x1c8] sm:$0xff]
        %v655 = vld [vmem:[%s306 + $0x1d0] sm:$0xff]
        %v656 = vld [vmem:[%s306 + $0x1d8] sm:$0xff]
        %v657 = vld [vmem:[%s306 + $0x1e0] sm:$0xff]
        %v658 = vld [vmem:[%s306 + $0x1e8] sm:$0xff]
        %v659 = vld [vmem:[%s306 + $0x1f0] sm:$0xff]
        %v660 = vld [vmem:[%s306 + $0x1f8] sm:$0xff]
        %v661 = vld [vmem:[%s306 + $0x200] sm:$0xff]
        %v662 = vld [vmem:[%s306 + $0x208] sm:$0xff]
        %v663 = vld [vmem:[%s306 + $0x210] sm:$0xff]
        %v664 = vld [vmem:[%s306 + $0x218] sm:$0xff]
        %v665 = vld [vmem:[%s306 + $0x220] sm:$0xff]
        %v666 = vld [vmem:[%s306 + $0x228] sm:$0xff]
        %v667 = vld [vmem:[%s306 + $0x230] sm:$0xff]
        %v668 = vld [vmem:[%s306 + $0x238] sm:$0xff]
        %v669 = vld [vmem:[%s306 + $0x240] sm:$0xff]
        %v670 = vld [vmem:[%s306 + $0x248] sm:$0xff]
        %v671 = vld [vmem:[%s306 + $0x250] sm:$0xff]
        %v672 = vld [vmem:[%s306 + $0x258] sm:$0xff]
        %v673 = vld [vmem:[%s306 + $0x260] sm:$0xff]
        %v674 = vld [vmem:[%s306 + $0x268] sm:$0xff]
        %v675 = vld [vmem:[%s306 + $0x270] sm:$0xff]
        %v676 = vld [vmem:[%s306 + $0x278] sm:$0xff]
        %v677 = vld [vmem:[%s306 + $0x280] sm:$0xff]
        %v678 = vld [vmem:[%s306 + $0x288] sm:$0xff]
        %v679 = vld [vmem:[%s306 + $0x290] sm:$0xff]
        %v680 = vld [vmem:[%s306 + $0x298] sm:$0xff]
        %v681 = vld [vmem:[%s306 + $0x2a0] sm:$0xff]
        %v682 = vld [vmem:[%s306 + $0x2a8] sm:$0xff]
        %v683 = vld [vmem:[%s306 + $0x2b0] sm:$0xff]
        %v684 = vld [vmem:[%s306 + $0x2b8] sm:$0xff]
        %v685 = vld [vmem:[%s306 + $0x2c0] sm:$0xff]
        %v686 = vld [vmem:[%s306 + $0x2c8] sm:$0xff]
        %v687 = vld [vmem:[%s306 + $0x2d0] sm:$0xff]
        %v688 = vld [vmem:[%s306 + $0x2d8] sm:$0xff]
        %v689 = vld [vmem:[%s306 + $0x2e0] sm:$0xff]
        %v690 = vld [vmem:[%s306 + $0x2e8] sm:$0xff]
        %v691 = vld [vmem:[%s306 + $0x2f0] sm:$0xff]
        %v692 = vld [vmem:[%s306 + $0x2f8] sm:$0xff]
        %v693 = vld [vmem:[%s306 + $0x300] sm:$0xff]
        %v694 = vld [vmem:[%s306 + $0x308] sm:$0xff]
        %v695 = vld [vmem:[%s306 + $0x310] sm:$0xff]
        %v696 = vld [vmem:[%s306 + $0x318] sm:$0xff]
        %v697 = vld [vmem:[%s306 + $0x320] sm:$0xff]
        %v698 = vld [vmem:[%s306 + $0x328] sm:$0xff]
        %v699 = vld [vmem:[%s306 + $0x330] sm:$0xff]
        %v700 = vld [vmem:[%s306 + $0x338] sm:$0xff]
        %v701 = vld [vmem:[%s306 + $0x340] sm:$0xff]
        %v702 = vld [vmem:[%s306 + $0x348] sm:$0xff]
        %v703 = vld [vmem:[%s306 + $0x350] sm:$0xff]
        %v704 = vld [vmem:[%s306 + $0x358] sm:$0xff]
        %v705 = vld [vmem:[%s306 + $0x360] sm:$0xff]
        %v706 = vld [vmem:[%s306 + $0x368] sm:$0xff]
        %v707 = vld [vmem:[%s306 + $0x370] sm:$0xff]
        %v708 = vld [vmem:[%s306 + $0x378] sm:$0xff]
        %v709 = vld [vmem:[%s306 + $0x380] sm:$0xff]
        %v710 = vld [vmem:[%s306 + $0x388] sm:$0xff]
        %v711 = vld [vmem:[%s306 + $0x390] sm:$0xff]
        %v712 = vld [vmem:[%s306 + $0x398] sm:$0xff]
        %v713 = vld [vmem:[%s306 + $0x3a0] sm:$0xff]
        %v714 = vld [vmem:[%s306 + $0x3a8] sm:$0xff]
        %v715 = vld [vmem:[%s306 + $0x3b0] sm:$0xff]
        %v716 = vld [vmem:[%s306 + $0x3b8] sm:$0xff]
        %v717 = vld [vmem:[%s306 + $0x3c0] sm:$0xff]
        %v718 = vld [vmem:[%s306 + $0x3c8] sm:$0xff]
        %v719 = vld [vmem:[%s306 + $0x3d0] sm:$0xff]
        %v720 = vld [vmem:[%s306 + $0x3d8] sm:$0xff]
        %v721 = vld [vmem:[%s306 + $0x3e0] sm:$0xff]
        %v722 = vld [vmem:[%s306 + $0x3e8] sm:$0xff]
        %v723 = vld [vmem:[%s306 + $0x3f0] sm:$0xff]
        %v724 = vld [vmem:[%s306 + $0x3f8] sm:$0xff]
        %v725 = vld [vmem:[%s306 + $0x400] sm:$0xff]
        %v726 = vld [vmem:[%s306 + $0x408] sm:$0xff]
        %v727 = vld [vmem:[%s306 + $0x410] sm:$0xff]
        %v728 = vld [vmem:[%s306 + $0x418] sm:$0xff]
        %v729 = vld [vmem:[%s306 + $0x420] sm:$0xff]
        %v730 = vld [vmem:[%s306 + $0x428] sm:$0xff]
        %v731 = vld [vmem:[%s306 + $0x430] sm:$0xff]
        %v732 = vld [vmem:[%s306 + $0x438] sm:$0xff]
        %v733 = vld [vmem:[%s306 + $0x440] sm:$0xff]
        %v734 = vld [vmem:[%s306 + $0x448] sm:$0xff]
        %v735 = vld [vmem:[%s306 + $0x450] sm:$0xff]
        %v736 = vld [vmem:[%s306 + $0x458] sm:$0xff]
        %v737 = vld [vmem:[%s306 + $0x460] sm:$0xff]
        %v738 = vld [vmem:[%s306 + $0x468] sm:$0xff]
        %v739 = vld [vmem:[%s306 + $0x470] sm:$0xff]
        %v740 = vld [vmem:[%s306 + $0x478] sm:$0xff]
        %v741 = vld [vmem:[%s306 + $0x480] sm:$0xff]
        %v742 = vld [vmem:[%s306 + $0x488] sm:$0xff]
        %v743 = vld [vmem:[%s306 + $0x490] sm:$0xff]
        %v744 = vld [vmem:[%s306 + $0x498] sm:$0xff]
        %v745 = vld [vmem:[%s306 + $0x4a0] sm:$0xff]
        %v746 = vld [vmem:[%s306 + $0x4a8] sm:$0xff]
        %v747 = vld [vmem:[%s306 + $0x4b0] sm:$0xff]
        %v748 = vld [vmem:[%s306 + $0x4b8] sm:$0xff]
        %v749 = vld [vmem:[%s306 + $0x4c0] sm:$0xff]
        %v750 = vld [vmem:[%s306 + $0x4c8] sm:$0xff]
        %v751 = vld [vmem:[%s306 + $0x4d0] sm:$0xff]
        %v752 = vld [vmem:[%s306 + $0x4d8] sm:$0xff]
        %v753 = vld [vmem:[%s306 + $0x4e0] sm:$0xff]
        %v754 = vld [vmem:[%s306 + $0x4e8] sm:$0xff]
        %v755 = vld [vmem:[%s306 + $0x4f0] sm:$0xff]
        %v756 = vld [vmem:[%s306 + $0x4f8] sm:$0xff]
        %v757 = vld [vmem:[%s306 + $0x500] sm:$0xff]
        %v758 = vld [vmem:[%s306 + $0x508] sm:$0xff]
        %v759 = vld [vmem:[%s306 + $0x510] sm:$0xff]
        %v760 = vld [vmem:[%s306 + $0x518] sm:$0xff]
        %v761 = vld [vmem:[%s306 + $0x520] sm:$0xff]
        %v762 = vld [vmem:[%s306 + $0x528] sm:$0xff]
        %v763 = vld [vmem:[%s306 + $0x530] sm:$0xff]
        %v764 = vld [vmem:[%s306 + $0x538] sm:$0xff]
        %v765 = vld [vmem:[%s306 + $0x540] sm:$0xff]
        %v766 = vld [vmem:[%s306 + $0x548] sm:$0xff]
        %v767 = vld [vmem:[%s306 + $0x550] sm:$0xff]
        %v768 = vld [vmem:[%s306 + $0x558] sm:$0xff]
        %v769 = vld [vmem:[%s306 + $0x560] sm:$0xff]
        %v770 = vld [vmem:[%s306 + $0x568] sm:$0xff]
        %v771 = vld [vmem:[%s306 + $0x570] sm:$0xff]
        %v772 = vld [vmem:[%s306 + $0x578] sm:$0xff]
        %v773 = vld [vmem:[%s306 + $0x580] sm:$0xff]
        %v774 = vld [vmem:[%s306 + $0x588] sm:$0xff]
        %v775 = vld [vmem:[%s306 + $0x590] sm:$0xff]
        %v776 = vld [vmem:[%s306 + $0x598] sm:$0xff]
        %v777 = vld [vmem:[%s306 + $0x5a0] sm:$0xff]
        %v778 = vld [vmem:[%s306 + $0x5a8] sm:$0xff]
        %v779 = vld [vmem:[%s306 + $0x5b0] sm:$0xff]
        %v780 = vld [vmem:[%s306 + $0x5b8] sm:$0xff]
        %v781 = vld [vmem:[%s306 + $0x5c0] sm:$0xff]
        %v782 = vld [vmem:[%s306 + $0x5c8] sm:$0xff]
        %v783 = vld [vmem:[%s306 + $0x5d0] sm:$0xff]
        %v784 = vld [vmem:[%s306 + $0x5d8] sm:$0xff]
        %v785 = vld [vmem:[%s306 + $0x5e0] sm:$0xff]
        %v786 = vld [vmem:[%s306 + $0x5e8] sm:$0xff]
        %v787 = vld [vmem:[%s306 + $0x5f0] sm:$0xff]
        %v788 = vld [vmem:[%s306 + $0x5f8] sm:$0xff]
        %v789 = vld [vmem:[%s306 + $0x600] sm:$0xff]
        %v790 = vld [vmem:[%s306 + $0x608] sm:$0xff]
        %v791 = vld [vmem:[%s306 + $0x610] sm:$0xff]
        %v792 = vld [vmem:[%s306 + $0x618] sm:$0xff]
        %v793 = vld [vmem:[%s306 + $0x620] sm:$0xff]
        %v794 = vld [vmem:[%s306 + $0x628] sm:$0xff]
        %v795 = vld [vmem:[%s306 + $0x630] sm:$0xff]
        %v796 = vld [vmem:[%s306 + $0x638] sm:$0xff]
        %v797 = vld [vmem:[%s306 + $0x640] sm:$0xff]
        %v798 = vld [vmem:[%s306 + $0x648] sm:$0xff]
        %v799 = vld [vmem:[%s306 + $0x650] sm:$0xff]
        %v800 = vld [vmem:[%s306 + $0x658] sm:$0xff]
        %v801 = vld [vmem:[%s306 + $0x660] sm:$0xff]
        %v802 = vld [vmem:[%s306 + $0x668] sm:$0xff]
        %v803 = vld [vmem:[%s306 + $0x670] sm:$0xff]
        %v804 = vld [vmem:[%s306 + $0x678] sm:$0xff]
        %v805 = vld [vmem:[%s306 + $0x680] sm:$0xff]
        %v806 = vld [vmem:[%s306 + $0x688] sm:$0xff]
        %v807 = vld [vmem:[%s306 + $0x690] sm:$0xff]
        %v808 = vld [vmem:[%s306 + $0x698] sm:$0xff]
        %v809 = vld [vmem:[%s306 + $0x6a0] sm:$0xff]
        %v810 = vld [vmem:[%s306 + $0x6a8] sm:$0xff]
        %v811 = vld [vmem:[%s306 + $0x6b0] sm:$0xff]
        %v812 = vld [vmem:[%s306 + $0x6b8] sm:$0xff]
        %v813 = vld [vmem:[%s306 + $0x6c0] sm:$0xff]
        %v814 = vld [vmem:[%s306 + $0x6c8] sm:$0xff]
        %v815 = vld [vmem:[%s306 + $0x6d0] sm:$0xff]
        %v816 = vld [vmem:[%s306 + $0x6d8] sm:$0xff]
        %v817 = vld [vmem:[%s306 + $0x6e0] sm:$0xff]
        %v818 = vld [vmem:[%s306 + $0x6e8] sm:$0xff]
        %v819 = vld [vmem:[%s306 + $0x6f0] sm:$0xff]
        %v820 = vld [vmem:[%s306 + $0x6f8] sm:$0xff]
        %v821 = vld [vmem:[%s306 + $0x700] sm:$0xff]
        %v822 = vld [vmem:[%s306 + $0x708] sm:$0xff]
        %v823 = vld [vmem:[%s306 + $0x710] sm:$0xff]
        %v824 = vld [vmem:[%s306 + $0x718] sm:$0xff]
        %v825 = vld [vmem:[%s306 + $0x720] sm:$0xff]
        %v826 = vld [vmem:[%s306 + $0x728] sm:$0xff]
        %v827 = vld [vmem:[%s306 + $0x730] sm:$0xff]
        %v828 = vld [vmem:[%s306 + $0x738] sm:$0xff]
        %v829 = vld [vmem:[%s306 + $0x740] sm:$0xff]
        %v830 = vld [vmem:[%s306 + $0x748] sm:$0xff]
        %v831 = vld [vmem:[%s306 + $0x750] sm:$0xff]
        %v832 = vld [vmem:[%s306 + $0x758] sm:$0xff]
        %v833 = vld [vmem:[%s306 + $0x760] sm:$0xff]
        %v834 = vld [vmem:[%s306 + $0x768] sm:$0xff]
        %v835 = vld [vmem:[%s306 + $0x770] sm:$0xff]
        %v836 = vld [vmem:[%s306 + $0x778] sm:$0xff]
        %v837 = vld [vmem:[%s306 + $0x780] sm:$0xff]
        %v838 = vld [vmem:[%s306 + $0x788] sm:$0xff]
        %v839 = vld [vmem:[%s306 + $0x790] sm:$0xff]
        %v840 = vld [vmem:[%s306 + $0x798] sm:$0xff]
        %v841 = vld [vmem:[%s306 + $0x7a0] sm:$0xff]
        %v842 = vld [vmem:[%s306 + $0x7a8] sm:$0xff]
        %v843 = vld [vmem:[%s306 + $0x7b0] sm:$0xff]
        %v844 = vld [vmem:[%s306 + $0x7b8] sm:$0xff]
        %v845 = vld [vmem:[%s306 + $0x7c0] sm:$0xff]
        %v846 = vld [vmem:[%s306 + $0x7c8] sm:$0xff]
        %v847 = vld [vmem:[%s306 + $0x7d0] sm:$0xff]
        %v848 = vld [vmem:[%s306 + $0x7d8] sm:$0xff]
        %v849 = vld [vmem:[%s306 + $0x7e0] sm:$0xff]
        %v850 = vld [vmem:[%s306 + $0x7e8] sm:$0xff]
        %v851 = vld [vmem:[%s306 + $0x7f0] sm:$0xff]
        %v852 = vld [vmem:[%s306 + $0x7f8] sm:$0xff]
        %v853 = vld [vmem:[%s306 + $0x800] sm:$0xff]
        %v854 = vld [vmem:[%s306 + $0x808] sm:$0xff]
        %v855 = vld [vmem:[%s306 + $0x810] sm:$0xff]
        %v856 = vld [vmem:[%s306 + $0x818] sm:$0xff]
        %v857 = vld [vmem:[%s306 + $0x820] sm:$0xff]
        %v858 = vld [vmem:[%s306 + $0x828] sm:$0xff]
        %v859 = vld [vmem:[%s306 + $0x830] sm:$0xff]
        %v860 = vld [vmem:[%s306 + $0x838] sm:$0xff]
        %v861 = vld [vmem:[%s306 + $0x840] sm:$0xff]
        %v862 = vld [vmem:[%s306 + $0x848] sm:$0xff]
        %v863 = vld [vmem:[%s306 + $0x850] sm:$0xff]
        %v864 = vld [vmem:[%s306 + $0x858] sm:$0xff]
        %v865 = vld [vmem:[%s306 + $0x860] sm:$0xff]
        %v866 = vld [vmem:[%s306 + $0x868] sm:$0xff]
        %v867 = vld [vmem:[%s306 + $0x870] sm:$0xff]
        %v868 = vld [vmem:[%s306 + $0x878] sm:$0xff]
        %v869 = vld [vmem:[%s306 + $0x880] sm:$0xff]
        %v870 = vld [vmem:[%s306 + $0x888] sm:$0xff]
        %v871 = vld [vmem:[%s306 + $0x890] sm:$0xff]
        %v872 = vld [vmem:[%s306 + $0x898] sm:$0xff]
        %v873 = vld [vmem:[%s306 + $0x8a0] sm:$0xff]
        %v874 = vld [vmem:[%s306 + $0x8a8] sm:$0xff]
        %v875 = vld [vmem:[%s306 + $0x8b0] sm:$0xff]
        %v876 = vld [vmem:[%s306 + $0x8b8] sm:$0xff]
        %v877 = vld [vmem:[%s306 + $0x8c0] sm:$0xff]
        %v878 = vld [vmem:[%s306 + $0x8c8] sm:$0xff]
        %v879 = vld [vmem:[%s306 + $0x8d0] sm:$0xff]
        %v880 = vld [vmem:[%s306 + $0x8d8] sm:$0xff]
        %v881 = vld [vmem:[%s306 + $0x8e0] sm:$0xff]
        %v882 = vld [vmem:[%s306 + $0x8e8] sm:$0xff]
        %v883 = vld [vmem:[%s306 + $0x8f0] sm:$0xff]
        %v884 = vld [vmem:[%s306 + $0x8f8] sm:$0xff]
        %v885 = vld [vmem:[%s315] sm:$0x3f]
        %v887 = vlaneseq
        %v888 = vshrl.u32 %v887, 7
        %v889 = vsub.s32 0, %v888
        %v890 = vrot.slane %v885, %v889
        %v891 = vlaneseq
        %v892 = vshrl.u32 %v891, 7
        %v893 = vsub.s32 1, %v892
        %v894 = vrot.slane %v885, %v893
        %v895 = vlaneseq
        %v896 = vshrl.u32 %v895, 7
        %v897 = vsub.s32 2, %v896
        %v898 = vrot.slane %v885, %v897
        %v899 = vlaneseq
        %v900 = vshrl.u32 %v899, 7
        %v901 = vsub.s32 3, %v900
        %v902 = vrot.slane %v885, %v901
        %v903 = vlaneseq
        %v904 = vshrl.u32 %v903, 7
        %v905 = vsub.s32 4, %v904
        %v906 = vrot.slane %v885, %v905
        %v907 = vlaneseq
        %v908 = vshrl.u32 %v907, 7
        %v909 = vsub.s32 5, %v908
        %v910 = vrot.slane %v885, %v909
        %v1205 = vunpack.c.l.b16 %v597
        %v1206 = vunpack.c.h.b16 %v597
        %v1207 = vunpack.c.l.b16 %v598
        %v1208 = vunpack.c.h.b16 %v598
        %v1209 = vunpack.c.l.b16 %v599
        %v1210 = vunpack.c.h.b16 %v599
        %v1211 = vunpack.c.l.b16 %v600
        %v1212 = vunpack.c.h.b16 %v600
        %v1213 = vunpack.c.l.b16 %v601
        %v1214 = vunpack.c.h.b16 %v601
        %v1215 = vunpack.c.l.b16 %v602
        %v1216 = vunpack.c.h.b16 %v602
        %v1217 = vunpack.c.l.b16 %v603
        %v1218 = vunpack.c.h.b16 %v603
        %v1219 = vunpack.c.l.b16 %v604
        %v1220 = vunpack.c.h.b16 %v604
        %v1221 = vunpack.c.l.b16 %v605
        %v1222 = vunpack.c.h.b16 %v605
        %v1223 = vunpack.c.l.b16 %v606
        %v1224 = vunpack.c.h.b16 %v606
        %v1225 = vunpack.c.l.b16 %v607
        %v1226 = vunpack.c.h.b16 %v607
        %v1227 = vunpack.c.l.b16 %v608
        %v1228 = vunpack.c.h.b16 %v608
        %v1229 = vunpack.c.l.b16 %v609
        %v1230 = vunpack.c.h.b16 %v609
        %v1231 = vunpack.c.l.b16 %v610
        %v1232 = vunpack.c.h.b16 %v610
        %v1233 = vunpack.c.l.b16 %v611
        %v1234 = vunpack.c.h.b16 %v611
        %v1235 = vunpack.c.l.b16 %v612
        %v1236 = vunpack.c.h.b16 %v612
        %v1237 = vunpack.c.l.b16 %v613
        %v1238 = vunpack.c.h.b16 %v613
        %v1239 = vunpack.c.l.b16 %v614
        %v1240 = vunpack.c.h.b16 %v614
        %v1241 = vunpack.c.l.b16 %v615
        %v1242 = vunpack.c.h.b16 %v615
        %v1243 = vunpack.c.l.b16 %v616
        %v1244 = vunpack.c.h.b16 %v616
        %v1245 = vunpack.c.l.b16 %v617
        %v1246 = vunpack.c.h.b16 %v617
        %v1247 = vunpack.c.l.b16 %v618
        %v1248 = vunpack.c.h.b16 %v618
        %v1249 = vunpack.c.l.b16 %v619
        %v1250 = vunpack.c.h.b16 %v619
        %v1251 = vunpack.c.l.b16 %v620
        %v1252 = vunpack.c.h.b16 %v620
        %v1253 = vunpack.c.l.b16 %v621
        %v1254 = vunpack.c.h.b16 %v621
        %v1255 = vunpack.c.l.b16 %v622
        %v1256 = vunpack.c.h.b16 %v622
        %v1257 = vunpack.c.l.b16 %v623
        %v1258 = vunpack.c.h.b16 %v623
        %v1259 = vunpack.c.l.b16 %v624
        %v1260 = vunpack.c.h.b16 %v624
        %v1261 = vunpack.c.l.b16 %v625
        %v1262 = vunpack.c.h.b16 %v625
        %v1263 = vunpack.c.l.b16 %v626
        %v1264 = vunpack.c.h.b16 %v626
        %v1265 = vunpack.c.l.b16 %v627
        %v1266 = vunpack.c.h.b16 %v627
        %v1267 = vunpack.c.l.b16 %v628
        %v1268 = vunpack.c.h.b16 %v628
        %v1269 = vunpack.c.l.b16 %v629
        %v1270 = vunpack.c.h.b16 %v629
        %v1271 = vunpack.c.l.b16 %v630
        %v1272 = vunpack.c.h.b16 %v630
        %v1273 = vunpack.c.l.b16 %v631
        %v1274 = vunpack.c.h.b16 %v631
        %v1275 = vunpack.c.l.b16 %v632
        %v1276 = vunpack.c.h.b16 %v632
        %v1277 = vunpack.c.l.b16 %v633
        %v1278 = vunpack.c.h.b16 %v633
        %v1279 = vunpack.c.l.b16 %v634
        %v1280 = vunpack.c.h.b16 %v634
        %v1281 = vunpack.c.l.b16 %v635
        %v1282 = vunpack.c.h.b16 %v635
        %v1283 = vunpack.c.l.b16 %v636
        %v1284 = vunpack.c.h.b16 %v636
        %v1285 = vunpack.c.l.b16 %v637
        %v1286 = vunpack.c.h.b16 %v637
        %v1287 = vunpack.c.l.b16 %v638
        %v1288 = vunpack.c.h.b16 %v638
        %v1289 = vunpack.c.l.b16 %v639
        %v1290 = vunpack.c.h.b16 %v639
        %v1291 = vunpack.c.l.b16 %v640
        %v1292 = vunpack.c.h.b16 %v640
        %v1293 = vunpack.c.l.b16 %v641
        %v1294 = vunpack.c.h.b16 %v641
        %v1295 = vunpack.c.l.b16 %v642
        %v1296 = vunpack.c.h.b16 %v642
        %v1297 = vunpack.c.l.b16 %v643
        %v1298 = vunpack.c.h.b16 %v643
        %v1299 = vunpack.c.l.b16 %v644
        %v1300 = vunpack.c.h.b16 %v644
        %v1301 = vunpack.c.l.b16 %v645
        %v1302 = vunpack.c.h.b16 %v645
        %v1303 = vunpack.c.l.b16 %v646
        %v1304 = vunpack.c.h.b16 %v646
        %v1305 = vunpack.c.l.b16 %v647
        %v1306 = vunpack.c.h.b16 %v647
        %v1307 = vunpack.c.l.b16 %v648
        %v1308 = vunpack.c.h.b16 %v648
        %v1309 = vunpack.c.l.b16 %v649
        %v1310 = vunpack.c.h.b16 %v649
        %v1311 = vunpack.c.l.b16 %v650
        %v1312 = vunpack.c.h.b16 %v650
        %v1313 = vunpack.c.l.b16 %v651
        %v1314 = vunpack.c.h.b16 %v651
        %v1315 = vunpack.c.l.b16 %v652
        %v1316 = vunpack.c.h.b16 %v652
        %v1317 = vunpack.c.l.b16 %v653
        %v1318 = vunpack.c.h.b16 %v653
        %v1319 = vunpack.c.l.b16 %v654
        %v1320 = vunpack.c.h.b16 %v654
        %v1321 = vunpack.c.l.b16 %v655
        %v1322 = vunpack.c.h.b16 %v655
        %v1323 = vunpack.c.l.b16 %v656
        %v1324 = vunpack.c.h.b16 %v656
        %v1325 = vunpack.c.l.b16 %v657
        %v1326 = vunpack.c.h.b16 %v657
        %v1327 = vunpack.c.l.b16 %v658
        %v1328 = vunpack.c.h.b16 %v658
        %v1329 = vunpack.c.l.b16 %v659
        %v1330 = vunpack.c.h.b16 %v659
        %v1331 = vunpack.c.l.b16 %v660
        %v1332 = vunpack.c.h.b16 %v660
        %v1333 = vunpack.c.l.b16 %v661
        %v1334 = vunpack.c.h.b16 %v661
        %v1335 = vunpack.c.l.b16 %v662
        %v1336 = vunpack.c.h.b16 %v662
        %v1337 = vunpack.c.l.b16 %v663
        %v1338 = vunpack.c.h.b16 %v663
        %v1339 = vunpack.c.l.b16 %v664
        %v1340 = vunpack.c.h.b16 %v664
        %v1341 = vunpack.c.l.b16 %v665
        %v1342 = vunpack.c.h.b16 %v665
        %v1343 = vunpack.c.l.b16 %v666
        %v1344 = vunpack.c.h.b16 %v666
        %v1345 = vunpack.c.l.b16 %v667
        %v1346 = vunpack.c.h.b16 %v667
        %v1347 = vunpack.c.l.b16 %v668
        %v1348 = vunpack.c.h.b16 %v668
        %v1349 = vunpack.c.l.b16 %v669
        %v1350 = vunpack.c.h.b16 %v669
        %v1351 = vunpack.c.l.b16 %v670
        %v1352 = vunpack.c.h.b16 %v670
        %v1353 = vunpack.c.l.b16 %v671
        %v1354 = vunpack.c.h.b16 %v671
        %v1355 = vunpack.c.l.b16 %v672
        %v1356 = vunpack.c.h.b16 %v672
        %v1357 = vunpack.c.l.b16 %v673
        %v1358 = vunpack.c.h.b16 %v673
        %v1359 = vunpack.c.l.b16 %v674
        %v1360 = vunpack.c.h.b16 %v674
        %v1361 = vunpack.c.l.b16 %v675
        %v1362 = vunpack.c.h.b16 %v675
        %v1363 = vunpack.c.l.b16 %v676
        %v1364 = vunpack.c.h.b16 %v676
        %v1365 = vunpack.c.l.b16 %v677
        %v1366 = vunpack.c.h.b16 %v677
        %v1367 = vunpack.c.l.b16 %v678
        %v1368 = vunpack.c.h.b16 %v678
        %v1369 = vunpack.c.l.b16 %v679
        %v1370 = vunpack.c.h.b16 %v679
        %v1371 = vunpack.c.l.b16 %v680
        %v1372 = vunpack.c.h.b16 %v680
        %v1373 = vunpack.c.l.b16 %v681
        %v1374 = vunpack.c.h.b16 %v681
        %v1375 = vunpack.c.l.b16 %v682
        %v1376 = vunpack.c.h.b16 %v682
        %v1377 = vunpack.c.l.b16 %v683
        %v1378 = vunpack.c.h.b16 %v683
        %v1379 = vunpack.c.l.b16 %v684
        %v1380 = vunpack.c.h.b16 %v684
        %v1381 = vunpack.c.l.b16 %v685
        %v1382 = vunpack.c.h.b16 %v685
        %v1383 = vunpack.c.l.b16 %v686
        %v1384 = vunpack.c.h.b16 %v686
        %v1385 = vunpack.c.l.b16 %v687
        %v1386 = vunpack.c.h.b16 %v687
        %v1387 = vunpack.c.l.b16 %v688
        %v1388 = vunpack.c.h.b16 %v688
        %v1389 = vunpack.c.l.b16 %v689
        %v1390 = vunpack.c.h.b16 %v689
        %v1391 = vunpack.c.l.b16 %v690
        %v1392 = vunpack.c.h.b16 %v690
        %v1393 = vunpack.c.l.b16 %v691
        %v1394 = vunpack.c.h.b16 %v691
        %v1395 = vunpack.c.l.b16 %v692
        %v1396 = vunpack.c.h.b16 %v692
        %v1397 = vunpack.c.l.b16 %v693
        %v1398 = vunpack.c.h.b16 %v693
        %v1399 = vunpack.c.l.b16 %v694
        %v1400 = vunpack.c.h.b16 %v694
        %v1401 = vunpack.c.l.b16 %v695
        %v1402 = vunpack.c.h.b16 %v695
        %v1403 = vunpack.c.l.b16 %v696
        %v1404 = vunpack.c.h.b16 %v696
        %v1405 = vunpack.c.l.b16 %v697
        %v1406 = vunpack.c.h.b16 %v697
        %v1407 = vunpack.c.l.b16 %v698
        %v1408 = vunpack.c.h.b16 %v698
        %v1409 = vunpack.c.l.b16 %v699
        %v1410 = vunpack.c.h.b16 %v699
        %v1411 = vunpack.c.l.b16 %v700
        %v1412 = vunpack.c.h.b16 %v700
        %v1413 = vunpack.c.l.b16 %v701
        %v1414 = vunpack.c.h.b16 %v701
        %v1415 = vunpack.c.l.b16 %v702
        %v1416 = vunpack.c.h.b16 %v702
        %v1417 = vunpack.c.l.b16 %v703
        %v1418 = vunpack.c.h.b16 %v703
        %v1419 = vunpack.c.l.b16 %v704
        %v1420 = vunpack.c.h.b16 %v704
        %v1421 = vunpack.c.l.b16 %v705
        %v1422 = vunpack.c.h.b16 %v705
        %v1423 = vunpack.c.l.b16 %v706
        %v1424 = vunpack.c.h.b16 %v706
        %v1425 = vunpack.c.l.b16 %v707
        %v1426 = vunpack.c.h.b16 %v707
        %v1427 = vunpack.c.l.b16 %v708
        %v1428 = vunpack.c.h.b16 %v708
        %v1429 = vunpack.c.l.b16 %v709
        %v1430 = vunpack.c.h.b16 %v709
        %v1431 = vunpack.c.l.b16 %v710
        %v1432 = vunpack.c.h.b16 %v710
        %v1433 = vunpack.c.l.b16 %v711
        %v1434 = vunpack.c.h.b16 %v711
        %v1435 = vunpack.c.l.b16 %v712
        %v1436 = vunpack.c.h.b16 %v712
        %v1437 = vunpack.c.l.b16 %v713
        %v1438 = vunpack.c.h.b16 %v713
        %v1439 = vunpack.c.l.b16 %v714
        %v1440 = vunpack.c.h.b16 %v714
        %v1441 = vunpack.c.l.b16 %v715
        %v1442 = vunpack.c.h.b16 %v715
        %v1443 = vunpack.c.l.b16 %v716
        %v1444 = vunpack.c.h.b16 %v716
        %v1445 = vunpack.c.l.b16 %v717
        %v1446 = vunpack.c.h.b16 %v717
        %v1447 = vunpack.c.l.b16 %v718
        %v1448 = vunpack.c.h.b16 %v718
        %v1449 = vunpack.c.l.b16 %v719
        %v1450 = vunpack.c.h.b16 %v719
        %v1451 = vunpack.c.l.b16 %v720
        %v1452 = vunpack.c.h.b16 %v720
        %v1453 = vunpack.c.l.b16 %v721
        %v1454 = vunpack.c.h.b16 %v721
        %v1455 = vunpack.c.l.b16 %v722
        %v1456 = vunpack.c.h.b16 %v722
        %v1457 = vunpack.c.l.b16 %v723
        %v1458 = vunpack.c.h.b16 %v723
        %v1459 = vunpack.c.l.b16 %v724
        %v1460 = vunpack.c.h.b16 %v724
        %v1461 = vunpack.c.l.b16 %v725
        %v1462 = vunpack.c.h.b16 %v725
        %v1463 = vunpack.c.l.b16 %v726
        %v1464 = vunpack.c.h.b16 %v726
        %v1465 = vunpack.c.l.b16 %v727
        %v1466 = vunpack.c.h.b16 %v727
        %v1467 = vunpack.c.l.b16 %v728
        %v1468 = vunpack.c.h.b16 %v728
        %v1469 = vunpack.c.l.b16 %v729
        %v1470 = vunpack.c.h.b16 %v729
        %v1471 = vunpack.c.l.b16 %v730
        %v1472 = vunpack.c.h.b16 %v730
        %v1473 = vunpack.c.l.b16 %v731
        %v1474 = vunpack.c.h.b16 %v731
        %v1475 = vunpack.c.l.b16 %v732
        %v1476 = vunpack.c.h.b16 %v732
        %v1477 = vunpack.c.l.b16 %v733
        %v1478 = vunpack.c.h.b16 %v733
        %v1479 = vunpack.c.l.b16 %v734
        %v1480 = vunpack.c.h.b16 %v734
        %v1481 = vunpack.c.l.b16 %v735
        %v1482 = vunpack.c.h.b16 %v735
        %v1483 = vunpack.c.l.b16 %v736
        %v1484 = vunpack.c.h.b16 %v736
        %v1485 = vunpack.c.l.b16 %v737
        %v1486 = vunpack.c.h.b16 %v737
        %v1487 = vunpack.c.l.b16 %v738
        %v1488 = vunpack.c.h.b16 %v738
        %v1489 = vunpack.c.l.b16 %v739
        %v1490 = vunpack.c.h.b16 %v739
        %v1491 = vunpack.c.l.b16 %v740
        %v1492 = vunpack.c.h.b16 %v740
        %v1493 = vunpack.c.l.b16 %v741
        %v1494 = vunpack.c.h.b16 %v741
        %v1495 = vunpack.c.l.b16 %v742
        %v1496 = vunpack.c.h.b16 %v742
        %v1497 = vunpack.c.l.b16 %v743
        %v1498 = vunpack.c.h.b16 %v743
        %v1499 = vunpack.c.l.b16 %v744
        %v1500 = vunpack.c.h.b16 %v744
        %v1501 = vunpack.c.l.b16 %v745
        %v1502 = vunpack.c.h.b16 %v745
        %v1503 = vunpack.c.l.b16 %v746
        %v1504 = vunpack.c.h.b16 %v746
        %v1505 = vunpack.c.l.b16 %v747
        %v1506 = vunpack.c.h.b16 %v747
        %v1507 = vunpack.c.l.b16 %v748
        %v1508 = vunpack.c.h.b16 %v748
        %v1509 = vunpack.c.l.b16 %v749
        %v1510 = vunpack.c.h.b16 %v749
        %v1511 = vunpack.c.l.b16 %v750
        %v1512 = vunpack.c.h.b16 %v750
        %v1513 = vunpack.c.l.b16 %v751
        %v1514 = vunpack.c.h.b16 %v751
        %v1515 = vunpack.c.l.b16 %v752
        %v1516 = vunpack.c.h.b16 %v752
        %v1517 = vunpack.c.l.b16 %v753
        %v1518 = vunpack.c.h.b16 %v753
        %v1519 = vunpack.c.l.b16 %v754
        %v1520 = vunpack.c.h.b16 %v754
        %v1521 = vunpack.c.l.b16 %v755
        %v1522 = vunpack.c.h.b16 %v755
        %v1523 = vunpack.c.l.b16 %v756
        %v1524 = vunpack.c.h.b16 %v756
        %v1525 = vunpack.c.l.b16 %v757
        %v1526 = vunpack.c.h.b16 %v757
        %v1527 = vunpack.c.l.b16 %v758
        %v1528 = vunpack.c.h.b16 %v758
        %v1529 = vunpack.c.l.b16 %v759
        %v1530 = vunpack.c.h.b16 %v759
        %v1531 = vunpack.c.l.b16 %v760
        %v1532 = vunpack.c.h.b16 %v760
        %v1533 = vunpack.c.l.b16 %v761
        %v1534 = vunpack.c.h.b16 %v761
        %v1535 = vunpack.c.l.b16 %v762
        %v1536 = vunpack.c.h.b16 %v762
        %v1537 = vunpack.c.l.b16 %v763
        %v1538 = vunpack.c.h.b16 %v763
        %v1539 = vunpack.c.l.b16 %v764
        %v1540 = vunpack.c.h.b16 %v764
        %v1541 = vunpack.c.l.b16 %v765
        %v1542 = vunpack.c.h.b16 %v765
        %v1543 = vunpack.c.l.b16 %v766
        %v1544 = vunpack.c.h.b16 %v766
        %v1545 = vunpack.c.l.b16 %v767
        %v1546 = vunpack.c.h.b16 %v767
        %v1547 = vunpack.c.l.b16 %v768
        %v1548 = vunpack.c.h.b16 %v768
        %v1549 = vunpack.c.l.b16 %v769
        %v1550 = vunpack.c.h.b16 %v769
        %v1551 = vunpack.c.l.b16 %v770
        %v1552 = vunpack.c.h.b16 %v770
        %v1553 = vunpack.c.l.b16 %v771
        %v1554 = vunpack.c.h.b16 %v771
        %v1555 = vunpack.c.l.b16 %v772
        %v1556 = vunpack.c.h.b16 %v772
        %v1557 = vunpack.c.l.b16 %v773
        %v1558 = vunpack.c.h.b16 %v773
        %v1559 = vunpack.c.l.b16 %v774
        %v1560 = vunpack.c.h.b16 %v774
        %v1561 = vunpack.c.l.b16 %v775
        %v1562 = vunpack.c.h.b16 %v775
        %v1563 = vunpack.c.l.b16 %v776
        %v1564 = vunpack.c.h.b16 %v776
        %v1565 = vunpack.c.l.b16 %v777
        %v1566 = vunpack.c.h.b16 %v777
        %v1567 = vunpack.c.l.b16 %v778
        %v1568 = vunpack.c.h.b16 %v778
        %v1569 = vunpack.c.l.b16 %v779
        %v1570 = vunpack.c.h.b16 %v779
        %v1571 = vunpack.c.l.b16 %v780
        %v1572 = vunpack.c.h.b16 %v780
        %v1573 = vunpack.c.l.b16 %v781
        %v1574 = vunpack.c.h.b16 %v781
        %v1575 = vunpack.c.l.b16 %v782
        %v1576 = vunpack.c.h.b16 %v782
        %v1577 = vunpack.c.l.b16 %v783
        %v1578 = vunpack.c.h.b16 %v783
        %v1579 = vunpack.c.l.b16 %v784
        %v1580 = vunpack.c.h.b16 %v784
        %v1581 = vunpack.c.l.b16 %v785
        %v1582 = vunpack.c.h.b16 %v785
        %v1583 = vunpack.c.l.b16 %v786
        %v1584 = vunpack.c.h.b16 %v786
        %v1585 = vunpack.c.l.b16 %v787
        %v1586 = vunpack.c.h.b16 %v787
        %v1587 = vunpack.c.l.b16 %v788
        %v1588 = vunpack.c.h.b16 %v788
        %v1589 = vunpack.c.l.b16 %v789
        %v1590 = vunpack.c.h.b16 %v789
        %v1591 = vunpack.c.l.b16 %v790
        %v1592 = vunpack.c.h.b16 %v790
        %v1593 = vunpack.c.l.b16 %v791
        %v1594 = vunpack.c.h.b16 %v791
        %v1595 = vunpack.c.l.b16 %v792
        %v1596 = vunpack.c.h.b16 %v792
        %v1597 = vunpack.c.l.b16 %v793
        %v1598 = vunpack.c.h.b16 %v793
        %v1599 = vunpack.c.l.b16 %v794
        %v1600 = vunpack.c.h.b16 %v794
        %v1601 = vunpack.c.l.b16 %v795
        %v1602 = vunpack.c.h.b16 %v795
        %v1603 = vunpack.c.l.b16 %v796
        %v1604 = vunpack.c.h.b16 %v796
        %v1605 = vunpack.c.l.b16 %v797
        %v1606 = vunpack.c.h.b16 %v797
        %v1607 = vunpack.c.l.b16 %v798
        %v1608 = vunpack.c.h.b16 %v798
        %v1609 = vunpack.c.l.b16 %v799
        %v1610 = vunpack.c.h.b16 %v799
        %v1611 = vunpack.c.l.b16 %v800
        %v1612 = vunpack.c.h.b16 %v800
        %v1613 = vunpack.c.l.b16 %v801
        %v1614 = vunpack.c.h.b16 %v801
        %v1615 = vunpack.c.l.b16 %v802
        %v1616 = vunpack.c.h.b16 %v802
        %v1617 = vunpack.c.l.b16 %v803
        %v1618 = vunpack.c.h.b16 %v803
        %v1619 = vunpack.c.l.b16 %v804
        %v1620 = vunpack.c.h.b16 %v804
        %v1621 = vunpack.c.l.b16 %v805
        %v1622 = vunpack.c.h.b16 %v805
        %v1623 = vunpack.c.l.b16 %v806
        %v1624 = vunpack.c.h.b16 %v806
        %v1625 = vunpack.c.l.b16 %v807
        %v1626 = vunpack.c.h.b16 %v807
        %v1627 = vunpack.c.l.b16 %v808
        %v1628 = vunpack.c.h.b16 %v808
        %v1629 = vunpack.c.l.b16 %v809
        %v1630 = vunpack.c.h.b16 %v809
        %v1631 = vunpack.c.l.b16 %v810
        %v1632 = vunpack.c.h.b16 %v810
        %v1633 = vunpack.c.l.b16 %v811
        %v1634 = vunpack.c.h.b16 %v811
        %v1635 = vunpack.c.l.b16 %v812
        %v1636 = vunpack.c.h.b16 %v812
        %v1637 = vunpack.c.l.b16 %v813
        %v1638 = vunpack.c.h.b16 %v813
        %v1639 = vunpack.c.l.b16 %v814
        %v1640 = vunpack.c.h.b16 %v814
        %v1641 = vunpack.c.l.b16 %v815
        %v1642 = vunpack.c.h.b16 %v815
        %v1643 = vunpack.c.l.b16 %v816
        %v1644 = vunpack.c.h.b16 %v816
        %v1645 = vunpack.c.l.b16 %v817
        %v1646 = vunpack.c.h.b16 %v817
        %v1647 = vunpack.c.l.b16 %v818
        %v1648 = vunpack.c.h.b16 %v818
        %v1649 = vunpack.c.l.b16 %v819
        %v1650 = vunpack.c.h.b16 %v819
        %v1651 = vunpack.c.l.b16 %v820
        %v1652 = vunpack.c.h.b16 %v820
        %v1653 = vunpack.c.l.b16 %v821
        %v1654 = vunpack.c.h.b16 %v821
        %v1655 = vunpack.c.l.b16 %v822
        %v1656 = vunpack.c.h.b16 %v822
        %v1657 = vunpack.c.l.b16 %v823
        %v1658 = vunpack.c.h.b16 %v823
        %v1659 = vunpack.c.l.b16 %v824
        %v1660 = vunpack.c.h.b16 %v824
        %v1661 = vunpack.c.l.b16 %v825
        %v1662 = vunpack.c.h.b16 %v825
        %v1663 = vunpack.c.l.b16 %v826
        %v1664 = vunpack.c.h.b16 %v826
        %v1665 = vunpack.c.l.b16 %v827
        %v1666 = vunpack.c.h.b16 %v827
        %v1667 = vunpack.c.l.b16 %v828
        %v1668 = vunpack.c.h.b16 %v828
        %v1669 = vunpack.c.l.b16 %v829
        %v1670 = vunpack.c.h.b16 %v829
        %v1671 = vunpack.c.l.b16 %v830
        %v1672 = vunpack.c.h.b16 %v830
        %v1673 = vunpack.c.l.b16 %v831
        %v1674 = vunpack.c.h.b16 %v831
        %v1675 = vunpack.c.l.b16 %v832
        %v1676 = vunpack.c.h.b16 %v832
        %v1677 = vunpack.c.l.b16 %v833
        %v1678 = vunpack.c.h.b16 %v833
        %v1679 = vunpack.c.l.b16 %v834
        %v1680 = vunpack.c.h.b16 %v834
        %v1681 = vunpack.c.l.b16 %v835
        %v1682 = vunpack.c.h.b16 %v835
        %v1683 = vunpack.c.l.b16 %v836
        %v1684 = vunpack.c.h.b16 %v836
        %v1685 = vunpack.c.l.b16 %v837
        %v1686 = vunpack.c.h.b16 %v837
        %v1687 = vunpack.c.l.b16 %v838
        %v1688 = vunpack.c.h.b16 %v838
        %v1689 = vunpack.c.l.b16 %v839
        %v1690 = vunpack.c.h.b16 %v839
        %v1691 = vunpack.c.l.b16 %v840
        %v1692 = vunpack.c.h.b16 %v840
        %v1693 = vunpack.c.l.b16 %v841
        %v1694 = vunpack.c.h.b16 %v841
        %v1695 = vunpack.c.l.b16 %v842
        %v1696 = vunpack.c.h.b16 %v842
        %v1697 = vunpack.c.l.b16 %v843
        %v1698 = vunpack.c.h.b16 %v843
        %v1699 = vunpack.c.l.b16 %v844
        %v1700 = vunpack.c.h.b16 %v844
        %v1701 = vunpack.c.l.b16 %v845
        %v1702 = vunpack.c.h.b16 %v845
        %v1703 = vunpack.c.l.b16 %v846
        %v1704 = vunpack.c.h.b16 %v846
        %v1705 = vunpack.c.l.b16 %v847
        %v1706 = vunpack.c.h.b16 %v847
        %v1707 = vunpack.c.l.b16 %v848
        %v1708 = vunpack.c.h.b16 %v848
        %v1709 = vunpack.c.l.b16 %v849
        %v1710 = vunpack.c.h.b16 %v849
        %v1711 = vunpack.c.l.b16 %v850
        %v1712 = vunpack.c.h.b16 %v850
        %v1713 = vunpack.c.l.b16 %v851
        %v1714 = vunpack.c.h.b16 %v851
        %v1715 = vunpack.c.l.b16 %v852
        %v1716 = vunpack.c.h.b16 %v852
        %v1717 = vunpack.c.l.b16 %v853
        %v1718 = vunpack.c.h.b16 %v853
        %v1719 = vunpack.c.l.b16 %v854
        %v1720 = vunpack.c.h.b16 %v854
        %v1721 = vunpack.c.l.b16 %v855
        %v1722 = vunpack.c.h.b16 %v855
        %v1723 = vunpack.c.l.b16 %v856
        %v1724 = vunpack.c.h.b16 %v856
        %v1725 = vunpack.c.l.b16 %v857
        %v1726 = vunpack.c.h.b16 %v857
        %v1727 = vunpack.c.l.b16 %v858
        %v1728 = vunpack.c.h.b16 %v858
        %v1729 = vunpack.c.l.b16 %v859
        %v1730 = vunpack.c.h.b16 %v859
        %v1731 = vunpack.c.l.b16 %v860
        %v1732 = vunpack.c.h.b16 %v860
        %v1733 = vunpack.c.l.b16 %v861
        %v1734 = vunpack.c.h.b16 %v861
        %v1735 = vunpack.c.l.b16 %v862
        %v1736 = vunpack.c.h.b16 %v862
        %v1737 = vunpack.c.l.b16 %v863
        %v1738 = vunpack.c.h.b16 %v863
        %v1739 = vunpack.c.l.b16 %v864
        %v1740 = vunpack.c.h.b16 %v864
        %v1741 = vunpack.c.l.b16 %v865
        %v1742 = vunpack.c.h.b16 %v865
        %v1743 = vunpack.c.l.b16 %v866
        %v1744 = vunpack.c.h.b16 %v866
        %v1745 = vunpack.c.l.b16 %v867
        %v1746 = vunpack.c.h.b16 %v867
        %v1747 = vunpack.c.l.b16 %v868
        %v1748 = vunpack.c.h.b16 %v868
        %v1749 = vunpack.c.l.b16 %v869
        %v1750 = vunpack.c.h.b16 %v869
        %v1751 = vunpack.c.l.b16 %v870
        %v1752 = vunpack.c.h.b16 %v870
        %v1753 = vunpack.c.l.b16 %v871
        %v1754 = vunpack.c.h.b16 %v871
        %v1755 = vunpack.c.l.b16 %v872
        %v1756 = vunpack.c.h.b16 %v872
        %v1757 = vunpack.c.l.b16 %v873
        %v1758 = vunpack.c.h.b16 %v873
        %v1759 = vunpack.c.l.b16 %v874
        %v1760 = vunpack.c.h.b16 %v874
        %v1761 = vunpack.c.l.b16 %v875
        %v1762 = vunpack.c.h.b16 %v875
        %v1763 = vunpack.c.l.b16 %v876
        %v1764 = vunpack.c.h.b16 %v876
        %v1765 = vunpack.c.l.b16 %v877
        %v1766 = vunpack.c.h.b16 %v877
        %v1767 = vunpack.c.l.b16 %v878
        %v1768 = vunpack.c.h.b16 %v878
        %v1769 = vunpack.c.l.b16 %v879
        %v1770 = vunpack.c.h.b16 %v879
        %v1771 = vunpack.c.l.b16 %v880
        %v1772 = vunpack.c.h.b16 %v880
        %v1773 = vunpack.c.l.b16 %v881
        %v1774 = vunpack.c.h.b16 %v881
        %v1775 = vunpack.c.l.b16 %v882
        %v1776 = vunpack.c.h.b16 %v882
        %v1777 = vunpack.c.l.b16 %v883
        %v1778 = vunpack.c.h.b16 %v883
        %v1779 = vunpack.c.l.b16 %v884
        %v1780 = vunpack.c.h.b16 %v884
        %v1781 = vpack.c.b16 %v1211, %v1205
        %v1782 = vpack.c.b16 %v1212, %v1206
        %v1783 = vpack.c.b16 %v1213, %v1207
        %v1784 = vpack.c.b16 %v1214, %v1208
        %v1785 = vpack.c.b16 %v1215, %v1209
        %v1786 = vpack.c.b16 %v1216, %v1210
        %v1787 = vpack.c.b16 %v1223, %v1217
        %v1788 = vpack.c.b16 %v1224, %v1218
        %v1789 = vpack.c.b16 %v1225, %v1219
        %v1790 = vpack.c.b16 %v1226, %v1220
        %v1791 = vpack.c.b16 %v1227, %v1221
        %v1792 = vpack.c.b16 %v1228, %v1222
        %v1793 = vpack.c.b16 %v1235, %v1229
        %v1794 = vpack.c.b16 %v1236, %v1230
        %v1795 = vpack.c.b16 %v1237, %v1231
        %v1796 = vpack.c.b16 %v1238, %v1232
        %v1797 = vpack.c.b16 %v1239, %v1233
        %v1798 = vpack.c.b16 %v1240, %v1234
        %v1799 = vpack.c.b16 %v1247, %v1241
        %v1800 = vpack.c.b16 %v1248, %v1242
        %v1801 = vpack.c.b16 %v1249, %v1243
        %v1802 = vpack.c.b16 %v1250, %v1244
        %v1803 = vpack.c.b16 %v1251, %v1245
        %v1804 = vpack.c.b16 %v1252, %v1246
        %v1805 = vpack.c.b16 %v1259, %v1253
        %v1806 = vpack.c.b16 %v1260, %v1254
        %v1807 = vpack.c.b16 %v1261, %v1255
        %v1808 = vpack.c.b16 %v1262, %v1256
        %v1809 = vpack.c.b16 %v1263, %v1257
        %v1810 = vpack.c.b16 %v1264, %v1258
        %v1811 = vpack.c.b16 %v1271, %v1265
        %v1812 = vpack.c.b16 %v1272, %v1266
        %v1813 = vpack.c.b16 %v1273, %v1267
        %v1814 = vpack.c.b16 %v1274, %v1268
        %v1815 = vpack.c.b16 %v1275, %v1269
        %v1816 = vpack.c.b16 %v1276, %v1270
        %v1817 = vpack.c.b16 %v1283, %v1277
        %v1818 = vpack.c.b16 %v1284, %v1278
        %v1819 = vpack.c.b16 %v1285, %v1279
        %v1820 = vpack.c.b16 %v1286, %v1280
        %v1821 = vpack.c.b16 %v1287, %v1281
        %v1822 = vpack.c.b16 %v1288, %v1282
        %v1823 = vpack.c.b16 %v1295, %v1289
        %v1824 = vpack.c.b16 %v1296, %v1290
        %v1825 = vpack.c.b16 %v1297, %v1291
        %v1826 = vpack.c.b16 %v1298, %v1292
        %v1827 = vpack.c.b16 %v1299, %v1293
        %v1828 = vpack.c.b16 %v1300, %v1294
        %v1829 = vpack.c.b16 %v1307, %v1301
        %v1830 = vpack.c.b16 %v1308, %v1302
        %v1831 = vpack.c.b16 %v1309, %v1303
        %v1832 = vpack.c.b16 %v1310, %v1304
        %v1833 = vpack.c.b16 %v1311, %v1305
        %v1834 = vpack.c.b16 %v1312, %v1306
        %v1835 = vpack.c.b16 %v1319, %v1313
        %v1836 = vpack.c.b16 %v1320, %v1314
        %v1837 = vpack.c.b16 %v1321, %v1315
        %v1838 = vpack.c.b16 %v1322, %v1316
        %v1839 = vpack.c.b16 %v1323, %v1317
        %v1840 = vpack.c.b16 %v1324, %v1318
        %v1841 = vpack.c.b16 %v1331, %v1325
        %v1842 = vpack.c.b16 %v1332, %v1326
        %v1843 = vpack.c.b16 %v1333, %v1327
        %v1844 = vpack.c.b16 %v1334, %v1328
        %v1845 = vpack.c.b16 %v1335, %v1329
        %v1846 = vpack.c.b16 %v1336, %v1330
        %v1847 = vpack.c.b16 %v1343, %v1337
        %v1848 = vpack.c.b16 %v1344, %v1338
        %v1849 = vpack.c.b16 %v1345, %v1339
        %v1850 = vpack.c.b16 %v1346, %v1340
        %v1851 = vpack.c.b16 %v1347, %v1341
        %v1852 = vpack.c.b16 %v1348, %v1342
        %v1853 = vpack.c.b16 %v1355, %v1349
        %v1854 = vpack.c.b16 %v1356, %v1350
        %v1855 = vpack.c.b16 %v1357, %v1351
        %v1856 = vpack.c.b16 %v1358, %v1352
        %v1857 = vpack.c.b16 %v1359, %v1353
        %v1858 = vpack.c.b16 %v1360, %v1354
        %v1859 = vpack.c.b16 %v1367, %v1361
        %v1860 = vpack.c.b16 %v1368, %v1362
        %v1861 = vpack.c.b16 %v1369, %v1363
        %v1862 = vpack.c.b16 %v1370, %v1364
        %v1863 = vpack.c.b16 %v1371, %v1365
        %v1864 = vpack.c.b16 %v1372, %v1366
        %v1865 = vpack.c.b16 %v1379, %v1373
        %v1866 = vpack.c.b16 %v1380, %v1374
        %v1867 = vpack.c.b16 %v1381, %v1375
        %v1868 = vpack.c.b16 %v1382, %v1376
        %v1869 = vpack.c.b16 %v1383, %v1377
        %v1870 = vpack.c.b16 %v1384, %v1378
        %v1871 = vpack.c.b16 %v1391, %v1385
        %v1872 = vpack.c.b16 %v1392, %v1386
        %v1873 = vpack.c.b16 %v1393, %v1387
        %v1874 = vpack.c.b16 %v1394, %v1388
        %v1875 = vpack.c.b16 %v1395, %v1389
        %v1876 = vpack.c.b16 %v1396, %v1390
        %v1877 = vpack.c.b16 %v1403, %v1397
        %v1878 = vpack.c.b16 %v1404, %v1398
        %v1879 = vpack.c.b16 %v1405, %v1399
        %v1880 = vpack.c.b16 %v1406, %v1400
        %v1881 = vpack.c.b16 %v1407, %v1401
        %v1882 = vpack.c.b16 %v1408, %v1402
        %v1883 = vpack.c.b16 %v1415, %v1409
        %v1884 = vpack.c.b16 %v1416, %v1410
        %v1885 = vpack.c.b16 %v1417, %v1411
        %v1886 = vpack.c.b16 %v1418, %v1412
        %v1887 = vpack.c.b16 %v1419, %v1413
        %v1888 = vpack.c.b16 %v1420, %v1414
        %v1889 = vpack.c.b16 %v1427, %v1421
        %v1890 = vpack.c.b16 %v1428, %v1422
        %v1891 = vpack.c.b16 %v1429, %v1423
        %v1892 = vpack.c.b16 %v1430, %v1424
        %v1893 = vpack.c.b16 %v1431, %v1425
        %v1894 = vpack.c.b16 %v1432, %v1426
        %v1895 = vpack.c.b16 %v1439, %v1433
        %v1896 = vpack.c.b16 %v1440, %v1434
        %v1897 = vpack.c.b16 %v1441, %v1435
        %v1898 = vpack.c.b16 %v1442, %v1436
        %v1899 = vpack.c.b16 %v1443, %v1437
        %v1900 = vpack.c.b16 %v1444, %v1438
        %v1901 = vpack.c.b16 %v1451, %v1445
        %v1902 = vpack.c.b16 %v1452, %v1446
        %v1903 = vpack.c.b16 %v1453, %v1447
        %v1904 = vpack.c.b16 %v1454, %v1448
        %v1905 = vpack.c.b16 %v1455, %v1449
        %v1906 = vpack.c.b16 %v1456, %v1450
        %v1907 = vpack.c.b16 %v1463, %v1457
        %v1908 = vpack.c.b16 %v1464, %v1458
        %v1909 = vpack.c.b16 %v1465, %v1459
        %v1910 = vpack.c.b16 %v1466, %v1460
        %v1911 = vpack.c.b16 %v1467, %v1461
        %v1912 = vpack.c.b16 %v1468, %v1462
        %v1913 = vpack.c.b16 %v1475, %v1469
        %v1914 = vpack.c.b16 %v1476, %v1470
        %v1915 = vpack.c.b16 %v1477, %v1471
        %v1916 = vpack.c.b16 %v1478, %v1472
        %v1917 = vpack.c.b16 %v1479, %v1473
        %v1918 = vpack.c.b16 %v1480, %v1474
        %v1919 = vpack.c.b16 %v1487, %v1481
        %v1920 = vpack.c.b16 %v1488, %v1482
        %v1921 = vpack.c.b16 %v1489, %v1483
        %v1922 = vpack.c.b16 %v1490, %v1484
        %v1923 = vpack.c.b16 %v1491, %v1485
        %v1924 = vpack.c.b16 %v1492, %v1486
        %v1925 = vpack.c.b16 %v1499, %v1493
        %v1926 = vpack.c.b16 %v1500, %v1494
        %v1927 = vpack.c.b16 %v1501, %v1495
        %v1928 = vpack.c.b16 %v1502, %v1496
        %v1929 = vpack.c.b16 %v1503, %v1497
        %v1930 = vpack.c.b16 %v1504, %v1498
        %v1931 = vpack.c.b16 %v1511, %v1505
        %v1932 = vpack.c.b16 %v1512, %v1506
        %v1933 = vpack.c.b16 %v1513, %v1507
        %v1934 = vpack.c.b16 %v1514, %v1508
        %v1935 = vpack.c.b16 %v1515, %v1509
        %v1936 = vpack.c.b16 %v1516, %v1510
        %v1937 = vpack.c.b16 %v1523, %v1517
        %v1938 = vpack.c.b16 %v1524, %v1518
        %v1939 = vpack.c.b16 %v1525, %v1519
        %v1940 = vpack.c.b16 %v1526, %v1520
        %v1941 = vpack.c.b16 %v1527, %v1521
        %v1942 = vpack.c.b16 %v1528, %v1522
        %v1943 = vpack.c.b16 %v1535, %v1529
        %v1944 = vpack.c.b16 %v1536, %v1530
        %v1945 = vpack.c.b16 %v1537, %v1531
        %v1946 = vpack.c.b16 %v1538, %v1532
        %v1947 = vpack.c.b16 %v1539, %v1533
        %v1948 = vpack.c.b16 %v1540, %v1534
        %v1949 = vpack.c.b16 %v1547, %v1541
        %v1950 = vpack.c.b16 %v1548, %v1542
        %v1951 = vpack.c.b16 %v1549, %v1543
        %v1952 = vpack.c.b16 %v1550, %v1544
        %v1953 = vpack.c.b16 %v1551, %v1545
        %v1954 = vpack.c.b16 %v1552, %v1546
        %v1955 = vpack.c.b16 %v1559, %v1553
        %v1956 = vpack.c.b16 %v1560, %v1554
        %v1957 = vpack.c.b16 %v1561, %v1555
        %v1958 = vpack.c.b16 %v1562, %v1556
        %v1959 = vpack.c.b16 %v1563, %v1557
        %v1960 = vpack.c.b16 %v1564, %v1558
        %v1961 = vpack.c.b16 %v1571, %v1565
        %v1962 = vpack.c.b16 %v1572, %v1566
        %v1963 = vpack.c.b16 %v1573, %v1567
        %v1964 = vpack.c.b16 %v1574, %v1568
        %v1965 = vpack.c.b16 %v1575, %v1569
        %v1966 = vpack.c.b16 %v1576, %v1570
        %v1967 = vpack.c.b16 %v1583, %v1577
        %v1968 = vpack.c.b16 %v1584, %v1578
        %v1969 = vpack.c.b16 %v1585, %v1579
        %v1970 = vpack.c.b16 %v1586, %v1580
        %v1971 = vpack.c.b16 %v1587, %v1581
        %v1972 = vpack.c.b16 %v1588, %v1582
        %v1973 = vpack.c.b16 %v1595, %v1589
        %v1974 = vpack.c.b16 %v1596, %v1590
        %v1975 = vpack.c.b16 %v1597, %v1591
        %v1976 = vpack.c.b16 %v1598, %v1592
        %v1977 = vpack.c.b16 %v1599, %v1593
        %v1978 = vpack.c.b16 %v1600, %v1594
        %v1979 = vpack.c.b16 %v1607, %v1601
        %v1980 = vpack.c.b16 %v1608, %v1602
        %v1981 = vpack.c.b16 %v1609, %v1603
        %v1982 = vpack.c.b16 %v1610, %v1604
        %v1983 = vpack.c.b16 %v1611, %v1605
        %v1984 = vpack.c.b16 %v1612, %v1606
        %v1985 = vpack.c.b16 %v1619, %v1613
        %v1986 = vpack.c.b16 %v1620, %v1614
        %v1987 = vpack.c.b16 %v1621, %v1615
        %v1988 = vpack.c.b16 %v1622, %v1616
        %v1989 = vpack.c.b16 %v1623, %v1617
        %v1990 = vpack.c.b16 %v1624, %v1618
        %v1991 = vpack.c.b16 %v1631, %v1625
        %v1992 = vpack.c.b16 %v1632, %v1626
        %v1993 = vpack.c.b16 %v1633, %v1627
        %v1994 = vpack.c.b16 %v1634, %v1628
        %v1995 = vpack.c.b16 %v1635, %v1629
        %v1996 = vpack.c.b16 %v1636, %v1630
        %v1997 = vpack.c.b16 %v1643, %v1637
        %v1998 = vpack.c.b16 %v1644, %v1638
        %v1999 = vpack.c.b16 %v1645, %v1639
        %v2000 = vpack.c.b16 %v1646, %v1640
        %v2001 = vpack.c.b16 %v1647, %v1641
        %v2002 = vpack.c.b16 %v1648, %v1642
        %v2003 = vpack.c.b16 %v1655, %v1649
        %v2004 = vpack.c.b16 %v1656, %v1650
        %v2005 = vpack.c.b16 %v1657, %v1651
        %v2006 = vpack.c.b16 %v1658, %v1652
        %v2007 = vpack.c.b16 %v1659, %v1653
        %v2008 = vpack.c.b16 %v1660, %v1654
        %v2009 = vpack.c.b16 %v1667, %v1661
        %v2010 = vpack.c.b16 %v1668, %v1662
        %v2011 = vpack.c.b16 %v1669, %v1663
        %v2012 = vpack.c.b16 %v1670, %v1664
        %v2013 = vpack.c.b16 %v1671, %v1665
        %v2014 = vpack.c.b16 %v1672, %v1666
        %v2015 = vpack.c.b16 %v1679, %v1673
        %v2016 = vpack.c.b16 %v1680, %v1674
        %v2017 = vpack.c.b16 %v1681, %v1675
        %v2018 = vpack.c.b16 %v1682, %v1676
        %v2019 = vpack.c.b16 %v1683, %v1677
        %v2020 = vpack.c.b16 %v1684, %v1678
        %v2021 = vpack.c.b16 %v1691, %v1685
        %v2022 = vpack.c.b16 %v1692, %v1686
        %v2023 = vpack.c.b16 %v1693, %v1687
        %v2024 = vpack.c.b16 %v1694, %v1688
        %v2025 = vpack.c.b16 %v1695, %v1689
        %v2026 = vpack.c.b16 %v1696, %v1690
        %v2027 = vpack.c.b16 %v1703, %v1697
        %v2028 = vpack.c.b16 %v1704, %v1698
        %v2029 = vpack.c.b16 %v1705, %v1699
        %v2030 = vpack.c.b16 %v1706, %v1700
        %v2031 = vpack.c.b16 %v1707, %v1701
        %v2032 = vpack.c.b16 %v1708, %v1702
        %v2033 = vpack.c.b16 %v1715, %v1709
        %v2034 = vpack.c.b16 %v1716, %v1710
        %v2035 = vpack.c.b16 %v1717, %v1711
        %v2036 = vpack.c.b16 %v1718, %v1712
        %v2037 = vpack.c.b16 %v1719, %v1713
        %v2038 = vpack.c.b16 %v1720, %v1714
        %v2039 = vpack.c.b16 %v1727, %v1721
        %v2040 = vpack.c.b16 %v1728, %v1722
        %v2041 = vpack.c.b16 %v1729, %v1723
        %v2042 = vpack.c.b16 %v1730, %v1724
        %v2043 = vpack.c.b16 %v1731, %v1725
        %v2044 = vpack.c.b16 %v1732, %v1726
        %v2045 = vpack.c.b16 %v1739, %v1733
        %v2046 = vpack.c.b16 %v1740, %v1734
        %v2047 = vpack.c.b16 %v1741, %v1735
        %v2048 = vpack.c.b16 %v1742, %v1736
        %v2049 = vpack.c.b16 %v1743, %v1737
        %v2050 = vpack.c.b16 %v1744, %v1738
        %v2051 = vpack.c.b16 %v1751, %v1745
        %v2052 = vpack.c.b16 %v1752, %v1746
        %v2053 = vpack.c.b16 %v1753, %v1747
        %v2054 = vpack.c.b16 %v1754, %v1748
        %v2055 = vpack.c.b16 %v1755, %v1749
        %v2056 = vpack.c.b16 %v1756, %v1750
        %v2057 = vpack.c.b16 %v1763, %v1757
        %v2058 = vpack.c.b16 %v1764, %v1758
        %v2059 = vpack.c.b16 %v1765, %v1759
        %v2060 = vpack.c.b16 %v1766, %v1760
        %v2061 = vpack.c.b16 %v1767, %v1761
        %v2062 = vpack.c.b16 %v1768, %v1762
        %v2063 = vpack.c.b16 %v1775, %v1769
        %v2064 = vpack.c.b16 %v1776, %v1770
        %v2065 = vpack.c.b16 %v1777, %v1771
        %v2066 = vpack.c.b16 %v1778, %v1772
        %v2067 = vpack.c.b16 %v1779, %v1773
        %v2068 = vpack.c.b16 %v1780, %v1774
        %2357 = vmatprep.subr.bf16.mxu0 %v1782
        %2358 = vmatpush1.bf16.msra.mxu0 %v1781
        %2359 = vmatprep.subr.bf16.mxu0 %v1788
        %2360 = vmatpush1.bf16.msra.mxu0 %v1787
        %2361 = vmatprep.subr.bf16.mxu0 %v1794
        %2362 = vmatpush1.bf16.msra.mxu0 %v1793
        %2363 = vmatprep.subr.bf16.mxu0 %v1800
        %2364 = vmatpush1.bf16.msra.mxu0 %v1799
        %2365 = vmatprep.subr.bf16.mxu0 %v1806
        %2366 = vmatpush1.bf16.msra.mxu0 %v1805
        %2367 = vmatprep.subr.bf16.mxu0 %v1812
        %2368 = vmatpush1.bf16.msra.mxu0 %v1811
        %2369 = vmatprep.subr.bf16.mxu0 %v1818
        %2370 = vmatpush1.bf16.msra.mxu0 %v1817
        %2371 = vmatprep.subr.bf16.mxu0 %v1824
        %2372 = vmatpush1.bf16.msra.mxu0 %v1823
        %2373 = vmatprep.subr.bf16.mxu0 %v1830
        %2374 = vmatpush1.bf16.msra.mxu0 %v1829
        %2375 = vmatprep.subr.bf16.mxu0 %v1836
        %2376 = vmatpush1.bf16.msra.mxu0 %v1835
        %2377 = vmatprep.subr.bf16.mxu0 %v1842
        %2378 = vmatpush1.bf16.msra.mxu0 %v1841
        %2379 = vmatprep.subr.bf16.mxu0 %v1848
        %2380 = vmatpush1.bf16.msra.mxu0 %v1847
        %2381 = vmatprep.subr.bf16.mxu0 %v1854
        %2382 = vmatpush1.bf16.msra.mxu0 %v1853
        %2383 = vmatprep.subr.bf16.mxu0 %v1860
        %2384 = vmatpush1.bf16.msra.mxu0 %v1859
        %2385 = vmatprep.subr.bf16.mxu0 %v1866
        %2386 = vmatpush1.bf16.msra.mxu0 %v1865
        %2387 = vmatprep.subr.bf16.mxu0 %v1872
        %2388 = vmatpush1.bf16.msra.mxu0 %v1871
        %2389 = vmatprep.mubr.bf16.mxu0 %v550
        %2390 = vmatmul.mubr.bf16.gmra.mrb[0].mxu0 %v549
        %v2391 = vpop.f32.mrb[0].mxu0
        %v2392 = vadd.f32 %v890, %v2391
        %v2393 = vpop.f32.mrb[0].mxu0
        %v2394 = vadd.f32 %v894, %v2393
        %v2395 = vpop.f32.mrb[0].mxu0
        %v2396 = vadd.f32 %v890, %v2395
        %v2397 = vpop.f32.mrb[0].mxu0
        %v2398 = vadd.f32 %v894, %v2397
        %2399 = vmatprep.mubr.bf16.mxu0 %v556
        %2400 = vmatmul.mubr.bf16.gmra.mrb[0].mxu0 %v555
        %v2401 = vpop.f32.mrb[0].mxu0
        %v2402 = vadd.f32 %v890, %v2401
        %v2403 = vpop.f32.mrb[0].mxu0
        %v2404 = vadd.f32 %v894, %v2403
        %v2405 = vpop.f32.mrb[0].mxu0
        %v2406 = vadd.f32 %v890, %v2405
        %v2407 = vpop.f32.mrb[0].mxu0
        %v2408 = vadd.f32 %v894, %v2407
        %2409 = vmatprep.mubr.bf16.mxu0 %v562
        %2410 = vmatmul.mubr.bf16.gmra.mrb[0].mxu0 %v561
        %v2411 = vpop.f32.mrb[0].mxu0
        %v2412 = vadd.f32 %v890, %v2411
        %v2413 = vpop.f32.mrb[0].mxu0
        %v2414 = vadd.f32 %v894, %v2413
        %v2415 = vpop.f32.mrb[0].mxu0
        %v2416 = vadd.f32 %v890, %v2415
        %v2417 = vpop.f32.mrb[0].mxu0
        %v2418 = vadd.f32 %v894, %v2417
        %2419 = vmatprep.mubr.bf16.mxu0 %v568
        %2420 = vmatmul.mubr.bf16.gmra.mrb[0].mxu0 %v567
        %v2421 = vpop.f32.mrb[0].mxu0
        %v2422 = vadd.f32 %v890, %v2421
        %v2423 = vpop.f32.mrb[0].mxu0
        %v2424 = vadd.f32 %v894, %v2423
        %v2425 = vpop.f32.mrb[0].mxu0
        %v2426 = vadd.f32 %v890, %v2425
        %v2427 = vpop.f32.mrb[0].mxu0
        %v2428 = vadd.f32 %v894, %v2427
        %2429 = vmatprep.mubr.bf16.mxu0 %v574
        %2430 = vmatmul.mubr.bf16.gmra.mrb[0].mxu0 %v573
        %v2431 = vpop.f32.mrb[0].mxu0
        %v2432 = vadd.f32 %v890, %v2431
        %v2433 = vpop.f32.mrb[0].mxu0
        %v2434 = vadd.f32 %v894, %v2433
        %v2435 = vpop.f32.mrb[0].mxu0
        %v2436 = vadd.f32 %v890, %v2435
        %v2437 = vpop.f32.mrb[0].mxu0
        %v2438 = vadd.f32 %v894, %v2437
        %2439 = vmatprep.mubr.bf16.mxu0 %v580
        %2440 = vmatmul.mubr.bf16.gmra.mrb[0].mxu0 %v579
        %v2441 = vpop.f32.mrb[0].mxu0
        %v2442 = vadd.f32 %v890, %v2441
        %v2443 = vpop.f32.mrb[0].mxu0
        %v2444 = vadd.f32 %v894, %v2443
        %v2445 = vpop.f32.mrb[0].mxu0
        %v2446 = vadd.f32 %v890, %v2445
        %v2447 = vpop.f32.mrb[0].mxu0
        %v2448 = vadd.f32 %v894, %v2447
        %2449 = vmatprep.mubr.bf16.mxu0 %v586
        %2450 = vmatmul.mubr.bf16.gmra.mrb[0].mxu0 %v585
        %v2451 = vpop.f32.mrb[0].mxu0
        %v2452 = vadd.f32 %v890, %v2451
        %v2453 = vpop.f32.mrb[0].mxu0
        %v2454 = vadd.f32 %v894, %v2453
        %v2455 = vpop.f32.mrb[0].mxu0
        %v2456 = vadd.f32 %v890, %v2455
        %v2457 = vpop.f32.mrb[0].mxu0
        %v2458 = vadd.f32 %v894, %v2457
        %2459 = vmatprep.mubr.bf16.mxu0 %v592
        %2460 = vmatmul.mubr.bf16.gmra.mrb[0].mxu0 %v591
        %v2461 = vpop.f32.mrb[0].mxu0
        %v2462 = vadd.f32 %v890, %v2461
        %v2463 = vpop.f32.mrb[0].mxu0
        %v2464 = vadd.f32 %v894, %v2463
        %v2465 = vpop.f32.mrb[0].mxu0
        %v2466 = vpop.f32.mrb[0].mxu0
        %2467 = vdwg.mxu0
        %2468 = vmatprep.subr.bf16.mxu0 %v1878
        %2469 = vmatpush1.bf16.msra.mxu0 %v1877
        %2470 = vmatprep.subr.bf16.mxu0 %v1884
        %2471 = vmatpush1.bf16.msra.mxu0 %v1883
        %2472 = vmatprep.subr.bf16.mxu0 %v1890
        %2473 = vmatpush1.bf16.msra.mxu0 %v1889
        %2474 = vmatprep.subr.bf16.mxu0 %v1896
        %2475 = vmatpush1.bf16.msra.mxu0 %v1895
        %2476 = vmatprep.subr.bf16.mxu0 %v1902
        %2477 = vmatpush1.bf16.msra.mxu0 %v1901
        %2478 = vmatprep.subr.bf16.mxu0 %v1908
        %2479 = vmatpush1.bf16.msra.mxu0 %v1907
        %2480 = vmatprep.subr.bf16.mxu0 %v1914
        %2481 = vmatpush1.bf16.msra.mxu0 %v1913
        %2482 = vmatprep.subr.bf16.mxu0 %v1920
        %2483 = vmatpush1.bf16.msra.mxu0 %v1919
        %2484 = vmatprep.subr.bf16.mxu0 %v1926
        %2485 = vmatpush1.bf16.msra.mxu0 %v1925
        %2486 = vmatprep.subr.bf16.mxu0 %v1932
        %2487 = vmatpush1.bf16.msra.mxu0 %v1931
        %2488 = vmatprep.subr.bf16.mxu0 %v1938
        %2489 = vmatpush1.bf16.msra.mxu0 %v1937
        %2490 = vmatprep.subr.bf16.mxu0 %v1944
        %2491 = vmatpush1.bf16.msra.mxu0 %v1943
        %2492 = vmatprep.subr.bf16.mxu0 %v1950
        %2493 = vmatpush1.bf16.msra.mxu0 %v1949
        %2494 = vmatprep.subr.bf16.mxu0 %v1956
        %2495 = vmatpush1.bf16.msra.mxu0 %v1955
        %2496 = vmatprep.subr.bf16.mxu0 %v1962
        %2497 = vmatpush1.bf16.msra.mxu0 %v1961
        %2498 = vmatprep.subr.bf16.mxu0 %v1968
        %2499 = vmatpush1.bf16.msra.mxu0 %v1967
        %2500 = vmatprep.mubr.bf16.mxu0 %v552
        %2501 = vmatmul.mubr.bf16.gmra.mrb[0].mxu0 %v551
        %v2502 = vpop.f32.mrb[0].mxu0
        %v2503 = vadd.f32 %v2392, %v2502
        %v2504 = vpop.f32.mrb[0].mxu0
        %v2505 = vadd.f32 %v2394, %v2504
        %v2506 = vpop.f32.mrb[0].mxu0
        %v2507 = vadd.f32 %v2396, %v2506
        %v2508 = vpop.f32.mrb[0].mxu0
        %v2509 = vadd.f32 %v2398, %v2508
        %2510 = vmatprep.mubr.bf16.mxu0 %v558
        %2511 = vmatmul.mubr.bf16.gmra.mrb[0].mxu0 %v557
        %v2512 = vpop.f32.mrb[0].mxu0
        %v2513 = vadd.f32 %v2402, %v2512
        %v2514 = vpop.f32.mrb[0].mxu0
        %v2515 = vadd.f32 %v2404, %v2514
        %v2516 = vpop.f32.mrb[0].mxu0
        %v2517 = vadd.f32 %v2406, %v2516
        %v2518 = vpop.f32.mrb[0].mxu0
        %v2519 = vadd.f32 %v2408, %v2518
        %2520 = vmatprep.mubr.bf16.mxu0 %v564
        %2521 = vmatmul.mubr.bf16.gmra.mrb[0].mxu0 %v563
        %v2522 = vpop.f32.mrb[0].mxu0
        %v2523 = vadd.f32 %v2412, %v2522
        %v2524 = vpop.f32.mrb[0].mxu0
        %v2525 = vadd.f32 %v2414, %v2524
        %v2526 = vpop.f32.mrb[0].mxu0
        %v2527 = vadd.f32 %v2416, %v2526
        %v2528 = vpop.f32.mrb[0].mxu0
        %v2529 = vadd.f32 %v2418, %v2528
        %2530 = vmatprep.mubr.bf16.mxu0 %v570
        %2531 = vmatmul.mubr.bf16.gmra.mrb[0].mxu0 %v569
        %v2532 = vpop.f32.mrb[0].mxu0
        %v2533 = vadd.f32 %v2422, %v2532
        %v2534 = vpop.f32.mrb[0].mxu0
        %v2535 = vadd.f32 %v2424, %v2534
        %v2536 = vpop.f32.mrb[0].mxu0
        %v2537 = vadd.f32 %v2426, %v2536
        %v2538 = vpop.f32.mrb[0].mxu0
        %v2539 = vadd.f32 %v2428, %v2538
        %2540 = vmatprep.mubr.bf16.mxu0 %v576
        %2541 = vmatmul.mubr.bf16.gmra.mrb[0].mxu0 %v575
        %v2542 = vpop.f32.mrb[0].mxu0
        %v2543 = vadd.f32 %v2432, %v2542
        %v2544 = vpop.f32.mrb[0].mxu0
        %v2545 = vadd.f32 %v2434, %v2544
        %v2546 = vpop.f32.mrb[0].mxu0
        %v2547 = vadd.f32 %v2436, %v2546
        %v2548 = vpop.f32.mrb[0].mxu0
        %v2549 = vadd.f32 %v2438, %v2548
        %2550 = vmatprep.mubr.bf16.mxu0 %v582
        %2551 = vmatmul.mubr.bf16.gmra.mrb[0].mxu0 %v581
        %v2552 = vpop.f32.mrb[0].mxu0
        %v2553 = vadd.f32 %v2442, %v2552
        %v2554 = vpop.f32.mrb[0].mxu0
        %v2555 = vadd.f32 %v2444, %v2554
        %v2556 = vpop.f32.mrb[0].mxu0
        %v2557 = vadd.f32 %v2446, %v2556
        %v2558 = vpop.f32.mrb[0].mxu0
        %v2559 = vadd.f32 %v2448, %v2558
        %2560 = vmatprep.mubr.bf16.mxu0 %v588
        %2561 = vmatmul.mubr.bf16.gmra.mrb[0].mxu0 %v587
        %v2562 = vpop.f32.mrb[0].mxu0
        %v2563 = vadd.f32 %v2452, %v2562
        %v2564 = vpop.f32.mrb[0].mxu0
        %v2565 = vadd.f32 %v2454, %v2564
        %v2566 = vpop.f32.mrb[0].mxu0
        %v2567 = vadd.f32 %v2456, %v2566
        %v2568 = vpop.f32.mrb[0].mxu0
        %v2569 = vadd.f32 %v2458, %v2568
        %2570 = vmatprep.mubr.bf16.mxu0 %v594
        %2571 = vmatmul.mubr.bf16.gmra.mrb[0].mxu0 %v593
        %v2572 = vpop.f32.mrb[0].mxu0
        %v2573 = vadd.f32 %v2462, %v2572
        %v2574 = vpop.f32.mrb[0].mxu0
        %v2575 = vadd.f32 %v2464, %v2574
        %v2576 = vpop.f32.mrb[0].mxu0
        %v2577 = vpop.f32.mrb[0].mxu0
        %2578 = vdwg.mxu0
        %2579 = vmatprep.subr.bf16.mxu0 %v1974
        %2580 = vmatpush1.bf16.msra.mxu0 %v1973
        %2581 = vmatprep.subr.bf16.mxu0 %v1980
        %2582 = vmatpush1.bf16.msra.mxu0 %v1979
        %2583 = vmatprep.subr.bf16.mxu0 %v1986
        %2584 = vmatpush1.bf16.msra.mxu0 %v1985
        %2585 = vmatprep.subr.bf16.mxu0 %v1992
        %2586 = vmatpush1.bf16.msra.mxu0 %v1991
        %2587 = vmatprep.subr.bf16.mxu0 %v1998
        %2588 = vmatpush1.bf16.msra.mxu0 %v1997
        %2589 = vmatprep.subr.bf16.mxu0 %v2004
        %2590 = vmatpush1.bf16.msra.mxu0 %v2003
        %2591 = vmatprep.subr.bf16.mxu0 %v2010
        %2592 = vmatpush1.bf16.msra.mxu0 %v2009
        %2593 = vmatprep.subr.bf16.mxu0 %v2016
        %2594 = vmatpush1.bf16.msra.mxu0 %v2015
        %2595 = vmatprep.subr.bf16.mxu0 %v2022
        %2596 = vmatpush1.bf16.msra.mxu0 %v2021
        %2597 = vmatprep.subr.bf16.mxu0 %v2028
        %2598 = vmatpush1.bf16.msra.mxu0 %v2027
        %2599 = vmatprep.subr.bf16.mxu0 %v2034
        %2600 = vmatpush1.bf16.msra.mxu0 %v2033
        %2601 = vmatprep.subr.bf16.mxu0 %v2040
        %2602 = vmatpush1.bf16.msra.mxu0 %v2039
        %2603 = vmatprep.subr.bf16.mxu0 %v2046
        %2604 = vmatpush1.bf16.msra.mxu0 %v2045
        %2605 = vmatprep.subr.bf16.mxu0 %v2052
        %2606 = vmatpush1.bf16.msra.mxu0 %v2051
        %2607 = vmatprep.subr.bf16.mxu0 %v2058
        %2608 = vmatpush1.bf16.msra.mxu0 %v2057
        %2609 = vmatprep.subr.bf16.mxu0 %v2064
        %2610 = vmatpush1.bf16.msra.mxu0 %v2063
        %2611 = vmatprep.mubr.bf16.mxu0 %v554
        %2612 = vmatmul.mubr.bf16.gmra.mrb[0].mxu0 %v553
        %v2613 = vpop.f32.mrb[0].mxu0
        %v2614 = vadd.f32 %v2503, %v2613
        %v2615 = vpop.f32.mrb[0].mxu0
        %v2616 = vadd.f32 %v2505, %v2615
        %v2617 = vpop.f32.mrb[0].mxu0
        %v2618 = vadd.f32 %v2507, %v2617
        %v2619 = vpop.f32.mrb[0].mxu0
        %v2620 = vadd.f32 %v2509, %v2619
        %2621 = vmatprep.mubr.bf16.mxu0 %v560
        %2622 = vmatmul.mubr.bf16.gmra.mrb[0].mxu0 %v559
        %v2623 = vpop.f32.mrb[0].mxu0
        %v2624 = vadd.f32 %v2513, %v2623
        %v2625 = vpop.f32.mrb[0].mxu0
        %v2626 = vadd.f32 %v2515, %v2625
        %v2627 = vpop.f32.mrb[0].mxu0
        %v2628 = vadd.f32 %v2517, %v2627
        %v2629 = vpop.f32.mrb[0].mxu0
        %v2630 = vadd.f32 %v2519, %v2629
        %2631 = vmatprep.mubr.bf16.mxu0 %v566
        %2632 = vmatmul.mubr.bf16.gmra.mrb[0].mxu0 %v565
        %v2633 = vpop.f32.mrb[0].mxu0
        %v2634 = vadd.f32 %v2523, %v2633
        %v2635 = vpop.f32.mrb[0].mxu0
        %v2636 = vadd.f32 %v2525, %v2635
        %v2637 = vpop.f32.mrb[0].mxu0
        %v2638 = vadd.f32 %v2527, %v2637
        %v2639 = vpop.f32.mrb[0].mxu0
        %v2640 = vadd.f32 %v2529, %v2639
        %2641 = vmatprep.mubr.bf16.mxu0 %v572
        %2642 = vmatmul.mubr.bf16.gmra.mrb[0].mxu0 %v571
        %v2643 = vpop.f32.mrb[0].mxu0
        %v2644 = vadd.f32 %v2533, %v2643
        %v2645 = vpop.f32.mrb[0].mxu0
        %v2646 = vadd.f32 %v2535, %v2645
        %v2647 = vpop.f32.mrb[0].mxu0
        %v2648 = vadd.f32 %v2537, %v2647
        %v2649 = vpop.f32.mrb[0].mxu0
        %v2650 = vadd.f32 %v2539, %v2649
        %2651 = vmatprep.mubr.bf16.mxu0 %v578
        %2652 = vmatmul.mubr.bf16.gmra.mrb[0].mxu0 %v577
        %v2653 = vpop.f32.mrb[0].mxu0
        %v2654 = vadd.f32 %v2543, %v2653
        %v2655 = vpop.f32.mrb[0].mxu0
        %v2656 = vadd.f32 %v2545, %v2655
        %v2657 = vpop.f32.mrb[0].mxu0
        %v2658 = vadd.f32 %v2547, %v2657
        %v2659 = vpop.f32.mrb[0].mxu0
        %v2660 = vadd.f32 %v2549, %v2659
        %2661 = vmatprep.mubr.bf16.mxu0 %v584
        %2662 = vmatmul.mubr.bf16.gmra.mrb[0].mxu0 %v583
        %v2663 = vpop.f32.mrb[0].mxu0
        %v2664 = vadd.f32 %v2553, %v2663
        %v2665 = vpop.f32.mrb[0].mxu0
        %v2666 = vadd.f32 %v2555, %v2665
        %v2667 = vpop.f32.mrb[0].mxu0
        %v2668 = vadd.f32 %v2557, %v2667
        %v2669 = vpop.f32.mrb[0].mxu0
        %v2670 = vadd.f32 %v2559, %v2669
        %2671 = vmatprep.mubr.bf16.mxu0 %v590
        %2672 = vmatmul.mubr.bf16.gmra.mrb[0].mxu0 %v589
        %v2673 = vpop.f32.mrb[0].mxu0
        %v2674 = vadd.f32 %v2563, %v2673
        %v2675 = vpop.f32.mrb[0].mxu0
        %v2676 = vadd.f32 %v2565, %v2675
        %v2677 = vpop.f32.mrb[0].mxu0
        %v2678 = vadd.f32 %v2567, %v2677
        %v2679 = vpop.f32.mrb[0].mxu0
        %v2680 = vadd.f32 %v2569, %v2679
        %2681 = vmatprep.mubr.bf16.mxu0 %v596
        %2682 = vmatmul.mubr.bf16.gmra.mrb[0].mxu0 %v595
        %v2683 = vpop.f32.mrb[0].mxu0
        %v2684 = vadd.f32 %v2573, %v2683
        %v2685 = vpop.f32.mrb[0].mxu0
        %v2686 = vadd.f32 %v2575, %v2685
        %v2687 = vpop.f32.mrb[0].mxu0
        %v2688 = vpop.f32.mrb[0].mxu0
        %2689 = vdwg.mxu0
        %2690 = vmatprep.subr.bf16.mxu0 %v1784
        %2691 = vmatpush1.bf16.msra.mxu0 %v1783
        %2692 = vmatprep.subr.bf16.mxu0 %v1790
        %2693 = vmatpush1.bf16.msra.mxu0 %v1789
        %2694 = vmatprep.subr.bf16.mxu0 %v1796
        %2695 = vmatpush1.bf16.msra.mxu0 %v1795
        %2696 = vmatprep.subr.bf16.mxu0 %v1802
        %2697 = vmatpush1.bf16.msra.mxu0 %v1801
        %2698 = vmatprep.subr.bf16.mxu0 %v1808
        %2699 = vmatpush1.bf16.msra.mxu0 %v1807
        %2700 = vmatprep.subr.bf16.mxu0 %v1814
        %2701 = vmatpush1.bf16.msra.mxu0 %v1813
        %2702 = vmatprep.subr.bf16.mxu0 %v1820
        %2703 = vmatpush1.bf16.msra.mxu0 %v1819
        %2704 = vmatprep.subr.bf16.mxu0 %v1826
        %2705 = vmatpush1.bf16.msra.mxu0 %v1825
        %2706 = vmatprep.subr.bf16.mxu0 %v1832
        %2707 = vmatpush1.bf16.msra.mxu0 %v1831
        %2708 = vmatprep.subr.bf16.mxu0 %v1838
        %2709 = vmatpush1.bf16.msra.mxu0 %v1837
        %2710 = vmatprep.subr.bf16.mxu0 %v1844
        %2711 = vmatpush1.bf16.msra.mxu0 %v1843
        %2712 = vmatprep.subr.bf16.mxu0 %v1850
        %2713 = vmatpush1.bf16.msra.mxu0 %v1849
        %2714 = vmatprep.subr.bf16.mxu0 %v1856
        %2715 = vmatpush1.bf16.msra.mxu0 %v1855
        %2716 = vmatprep.subr.bf16.mxu0 %v1862
        %2717 = vmatpush1.bf16.msra.mxu0 %v1861
        %2718 = vmatprep.subr.bf16.mxu0 %v1868
        %2719 = vmatpush1.bf16.msra.mxu0 %v1867
        %2720 = vmatprep.subr.bf16.mxu0 %v1874
        %2721 = vmatpush1.bf16.msra.mxu0 %v1873
        %2722 = vmatprep.mubr.bf16.mxu0 %v550
        %2723 = vmatmul.mubr.bf16.gmra.mrb[0].mxu0 %v549
        %v2724 = vpop.f32.mrb[0].mxu0
        %v2725 = vadd.f32 %v898, %v2724
        %v2726 = vpop.f32.mrb[0].mxu0
        %v2727 = vadd.f32 %v902, %v2726
        %v2728 = vpop.f32.mrb[0].mxu0
        %v2729 = vadd.f32 %v898, %v2728
        %v2730 = vpop.f32.mrb[0].mxu0
        %v2731 = vadd.f32 %v902, %v2730
        %2732 = vmatprep.mubr.bf16.mxu0 %v556
        %2733 = vmatmul.mubr.bf16.gmra.mrb[0].mxu0 %v555
        %v2734 = vpop.f32.mrb[0].mxu0
        %v2735 = vadd.f32 %v898, %v2734
        %v2736 = vpop.f32.mrb[0].mxu0
        %v2737 = vadd.f32 %v902, %v2736
        %v2738 = vpop.f32.mrb[0].mxu0
        %v2739 = vadd.f32 %v898, %v2738
        %v2740 = vpop.f32.mrb[0].mxu0
        %v2741 = vadd.f32 %v902, %v2740
        %2742 = vmatprep.mubr.bf16.mxu0 %v562
        %2743 = vmatmul.mubr.bf16.gmra.mrb[0].mxu0 %v561
        %v2744 = vpop.f32.mrb[0].mxu0
        %v2745 = vadd.f32 %v898, %v2744
        %v2746 = vpop.f32.mrb[0].mxu0
        %v2747 = vadd.f32 %v902, %v2746
        %v2748 = vpop.f32.mrb[0].mxu0
        %v2749 = vadd.f32 %v898, %v2748
        %v2750 = vpop.f32.mrb[0].mxu0
        %v2751 = vadd.f32 %v902, %v2750
        %2752 = vmatprep.mubr.bf16.mxu0 %v568
        %2753 = vmatmul.mubr.bf16.gmra.mrb[0].mxu0 %v567
        %v2754 = vpop.f32.mrb[0].mxu0
        %v2755 = vadd.f32 %v898, %v2754
        %v2756 = vpop.f32.mrb[0].mxu0
        %v2757 = vadd.f32 %v902, %v2756
        %v2758 = vpop.f32.mrb[0].mxu0
        %v2759 = vadd.f32 %v898, %v2758
        %v2760 = vpop.f32.mrb[0].mxu0
        %v2761 = vadd.f32 %v902, %v2760
        %2762 = vmatprep.mubr.bf16.mxu0 %v574
        %2763 = vmatmul.mubr.bf16.gmra.mrb[0].mxu0 %v573
        %v2764 = vpop.f32.mrb[0].mxu0
        %v2765 = vadd.f32 %v898, %v2764
        %v2766 = vpop.f32.mrb[0].mxu0
        %v2767 = vadd.f32 %v902, %v2766
        %v2768 = vpop.f32.mrb[0].mxu0
        %v2769 = vadd.f32 %v898, %v2768
        %v2770 = vpop.f32.mrb[0].mxu0
        %v2771 = vadd.f32 %v902, %v2770
        %2772 = vmatprep.mubr.bf16.mxu0 %v580
        %2773 = vmatmul.mubr.bf16.gmra.mrb[0].mxu0 %v579
        %v2774 = vpop.f32.mrb[0].mxu0
        %v2775 = vadd.f32 %v898, %v2774
        %v2776 = vpop.f32.mrb[0].mxu0
        %v2777 = vadd.f32 %v902, %v2776
        %v2778 = vpop.f32.mrb[0].mxu0
        %v2779 = vadd.f32 %v898, %v2778
        %v2780 = vpop.f32.mrb[0].mxu0
        %v2781 = vadd.f32 %v902, %v2780
        %2782 = vmatprep.mubr.bf16.mxu0 %v586
        %2783 = vmatmul.mubr.bf16.gmra.mrb[0].mxu0 %v585
        %v2784 = vpop.f32.mrb[0].mxu0
        %v2785 = vadd.f32 %v898, %v2784
        %v2786 = vpop.f32.mrb[0].mxu0
        %v2787 = vadd.f32 %v902, %v2786
        %v2788 = vpop.f32.mrb[0].mxu0
        %v2789 = vadd.f32 %v898, %v2788
        %v2790 = vpop.f32.mrb[0].mxu0
        %v2791 = vadd.f32 %v902, %v2790
        %2792 = vmatprep.mubr.bf16.mxu0 %v592
        %2793 = vmatmul.mubr.bf16.gmra.mrb[0].mxu0 %v591
        %v2794 = vpop.f32.mrb[0].mxu0
        %v2795 = vadd.f32 %v898, %v2794
        %v2796 = vpop.f32.mrb[0].mxu0
        %v2797 = vadd.f32 %v902, %v2796
        %v2798 = vpop.f32.mrb[0].mxu0
        %v2799 = vpop.f32.mrb[0].mxu0
        %2800 = vdwg.mxu0
        %2801 = vmatprep.subr.bf16.mxu0 %v1880
        %2802 = vmatpush1.bf16.msra.mxu0 %v1879
        %2803 = vmatprep.subr.bf16.mxu0 %v1886
        %2804 = vmatpush1.bf16.msra.mxu0 %v1885
        %2805 = vmatprep.subr.bf16.mxu0 %v1892
        %2806 = vmatpush1.bf16.msra.mxu0 %v1891
        %2807 = vmatprep.subr.bf16.mxu0 %v1898
        %2808 = vmatpush1.bf16.msra.mxu0 %v1897
        %2809 = vmatprep.subr.bf16.mxu0 %v1904
        %2810 = vmatpush1.bf16.msra.mxu0 %v1903
        %2811 = vmatprep.subr.bf16.mxu0 %v1910
        %2812 = vmatpush1.bf16.msra.mxu0 %v1909
        %2813 = vmatprep.subr.bf16.mxu0 %v1916
        %2814 = vmatpush1.bf16.msra.mxu0 %v1915
        %2815 = vmatprep.subr.bf16.mxu0 %v1922
        %2816 = vmatpush1.bf16.msra.mxu0 %v1921
        %2817 = vmatprep.subr.bf16.mxu0 %v1928
        %2818 = vmatpush1.bf16.msra.mxu0 %v1927
        %2819 = vmatprep.subr.bf16.mxu0 %v1934
        %2820 = vmatpush1.bf16.msra.mxu0 %v1933
        %2821 = vmatprep.subr.bf16.mxu0 %v1940
        %2822 = vmatpush1.bf16.msra.mxu0 %v1939
        %2823 = vmatprep.subr.bf16.mxu0 %v1946
        %2824 = vmatpush1.bf16.msra.mxu0 %v1945
        %2825 = vmatprep.subr.bf16.mxu0 %v1952
        %2826 = vmatpush1.bf16.msra.mxu0 %v1951
        %2827 = vmatprep.subr.bf16.mxu0 %v1958
        %2828 = vmatpush1.bf16.msra.mxu0 %v1957
        %2829 = vmatprep.subr.bf16.mxu0 %v1964
        %2830 = vmatpush1.bf16.msra.mxu0 %v1963
        %2831 = vmatprep.subr.bf16.mxu0 %v1970
        %2832 = vmatpush1.bf16.msra.mxu0 %v1969
        %2833 = vmatprep.mubr.bf16.mxu0 %v552
        %2834 = vmatmul.mubr.bf16.gmra.mrb[0].mxu0 %v551
        %v2835 = vpop.f32.mrb[0].mxu0
        %v2836 = vadd.f32 %v2725, %v2835
        %v2837 = vpop.f32.mrb[0].mxu0
        %v2838 = vadd.f32 %v2727, %v2837
        %v2839 = vpop.f32.mrb[0].mxu0
        %v2840 = vadd.f32 %v2729, %v2839
        %v2841 = vpop.f32.mrb[0].mxu0
        %v2842 = vadd.f32 %v2731, %v2841
        %2843 = vmatprep.mubr.bf16.mxu0 %v558
        %2844 = vmatmul.mubr.bf16.gmra.mrb[0].mxu0 %v557
        %v2845 = vpop.f32.mrb[0].mxu0
        %v2846 = vadd.f32 %v2735, %v2845
        %v2847 = vpop.f32.mrb[0].mxu0
        %v2848 = vadd.f32 %v2737, %v2847
        %v2849 = vpop.f32.mrb[0].mxu0
        %v2850 = vadd.f32 %v2739, %v2849
        %v2851 = vpop.f32.mrb[0].mxu0
        %v2852 = vadd.f32 %v2741, %v2851
        %2853 = vmatprep.mubr.bf16.mxu0 %v564
        %2854 = vmatmul.mubr.bf16.gmra.mrb[0].mxu0 %v563
        %v2855 = vpop.f32.mrb[0].mxu0
        %v2856 = vadd.f32 %v2745, %v2855
        %v2857 = vpop.f32.mrb[0].mxu0
        %v2858 = vadd.f32 %v2747, %v2857
        %v2859 = vpop.f32.mrb[0].mxu0
        %v2860 = vadd.f32 %v2749, %v2859
        %v2861 = vpop.f32.mrb[0].mxu0
        %v2862 = vadd.f32 %v2751, %v2861
        %2863 = vmatprep.mubr.bf16.mxu0 %v570
        %2864 = vmatmul.mubr.bf16.gmra.mrb[0].mxu0 %v569
        %v2865 = vpop.f32.mrb[0].mxu0
        %v2866 = vadd.f32 %v2755, %v2865
        %v2867 = vpop.f32.mrb[0].mxu0
        %v2868 = vadd.f32 %v2757, %v2867
        %v2869 = vpop.f32.mrb[0].mxu0
        %v2870 = vadd.f32 %v2759, %v2869
        %v2871 = vpop.f32.mrb[0].mxu0
        %v2872 = vadd.f32 %v2761, %v2871
        %2873 = vmatprep.mubr.bf16.mxu0 %v576
        %2874 = vmatmul.mubr.bf16.gmra.mrb[0].mxu0 %v575
        %v2875 = vpop.f32.mrb[0].mxu0
        %v2876 = vadd.f32 %v2765, %v2875
        %v2877 = vpop.f32.mrb[0].mxu0
        %v2878 = vadd.f32 %v2767, %v2877
        %v2879 = vpop.f32.mrb[0].mxu0
        %v2880 = vadd.f32 %v2769, %v2879
        %v2881 = vpop.f32.mrb[0].mxu0
        %v2882 = vadd.f32 %v2771, %v2881
        %2883 = vmatprep.mubr.bf16.mxu0 %v582
        %2884 = vmatmul.mubr.bf16.gmra.mrb[0].mxu0 %v581
        %v2885 = vpop.f32.mrb[0].mxu0
        %v2886 = vadd.f32 %v2775, %v2885
        %v2887 = vpop.f32.mrb[0].mxu0
        %v2888 = vadd.f32 %v2777, %v2887
        %v2889 = vpop.f32.mrb[0].mxu0
        %v2890 = vadd.f32 %v2779, %v2889
        %v2891 = vpop.f32.mrb[0].mxu0
        %v2892 = vadd.f32 %v2781, %v2891
        %2893 = vmatprep.mubr.bf16.mxu0 %v588
        %2894 = vmatmul.mubr.bf16.gmra.mrb[0].mxu0 %v587
        %v2895 = vpop.f32.mrb[0].mxu0
        %v2896 = vadd.f32 %v2785, %v2895
        %v2897 = vpop.f32.mrb[0].mxu0
        %v2898 = vadd.f32 %v2787, %v2897
        %v2899 = vpop.f32.mrb[0].mxu0
        %v2900 = vadd.f32 %v2789, %v2899
        %v2901 = vpop.f32.mrb[0].mxu0
        %v2902 = vadd.f32 %v2791, %v2901
        %2903 = vmatprep.mubr.bf16.mxu0 %v594
        %2904 = vmatmul.mubr.bf16.gmra.mrb[0].mxu0 %v593
        %v2905 = vpop.f32.mrb[0].mxu0
        %v2906 = vadd.f32 %v2795, %v2905
        %v2907 = vpop.f32.mrb[0].mxu0
        %v2908 = vadd.f32 %v2797, %v2907
        %v2909 = vpop.f32.mrb[0].mxu0
        %v2910 = vpop.f32.mrb[0].mxu0
        %2911 = vdwg.mxu0
        %2912 = vmatprep.subr.bf16.mxu0 %v1976
        %2913 = vmatpush1.bf16.msra.mxu0 %v1975
        %2914 = vmatprep.subr.bf16.mxu0 %v1982
        %2915 = vmatpush1.bf16.msra.mxu0 %v1981
        %2916 = vmatprep.subr.bf16.mxu0 %v1988
        %2917 = vmatpush1.bf16.msra.mxu0 %v1987
        %2918 = vmatprep.subr.bf16.mxu0 %v1994
        %2919 = vmatpush1.bf16.msra.mxu0 %v1993
        %2920 = vmatprep.subr.bf16.mxu0 %v2000
        %2921 = vmatpush1.bf16.msra.mxu0 %v1999
        %2922 = vmatprep.subr.bf16.mxu0 %v2006
        %2923 = vmatpush1.bf16.msra.mxu0 %v2005
        %2924 = vmatprep.subr.bf16.mxu0 %v2012
        %2925 = vmatpush1.bf16.msra.mxu0 %v2011
        %2926 = vmatprep.subr.bf16.mxu0 %v2018
        %2927 = vmatpush1.bf16.msra.mxu0 %v2017
        %2928 = vmatprep.subr.bf16.mxu0 %v2024
        %2929 = vmatpush1.bf16.msra.mxu0 %v2023
        %2930 = vmatprep.subr.bf16.mxu0 %v2030
        %2931 = vmatpush1.bf16.msra.mxu0 %v2029
        %2932 = vmatprep.subr.bf16.mxu0 %v2036
        %2933 = vmatpush1.bf16.msra.mxu0 %v2035
        %2934 = vmatprep.subr.bf16.mxu0 %v2042
        %2935 = vmatpush1.bf16.msra.mxu0 %v2041
        %2936 = vmatprep.subr.bf16.mxu0 %v2048
        %2937 = vmatpush1.bf16.msra.mxu0 %v2047
        %2938 = vmatprep.subr.bf16.mxu0 %v2054
        %2939 = vmatpush1.bf16.msra.mxu0 %v2053
        %2940 = vmatprep.subr.bf16.mxu0 %v2060
        %2941 = vmatpush1.bf16.msra.mxu0 %v2059
        %2942 = vmatprep.subr.bf16.mxu0 %v2066
        %2943 = vmatpush1.bf16.msra.mxu0 %v2065
        %2944 = vmatprep.mubr.bf16.mxu0 %v554
        %2945 = vmatmul.mubr.bf16.gmra.mrb[0].mxu0 %v553
        %v2946 = vpop.f32.mrb[0].mxu0
        %v2947 = vadd.f32 %v2836, %v2946
        %v2948 = vpop.f32.mrb[0].mxu0
        %v2949 = vadd.f32 %v2838, %v2948
        %v2950 = vpop.f32.mrb[0].mxu0
        %v2951 = vadd.f32 %v2840, %v2950
        %v2952 = vpop.f32.mrb[0].mxu0
        %v2953 = vadd.f32 %v2842, %v2952
        %2954 = vmatprep.mubr.bf16.mxu0 %v560
        %2955 = vmatmul.mubr.bf16.gmra.mrb[0].mxu0 %v559
        %v2956 = vpop.f32.mrb[0].mxu0
        %v2957 = vadd.f32 %v2846, %v2956
        %v2958 = vpop.f32.mrb[0].mxu0
        %v2959 = vadd.f32 %v2848, %v2958
        %v2960 = vpop.f32.mrb[0].mxu0
        %v2961 = vadd.f32 %v2850, %v2960
        %v2962 = vpop.f32.mrb[0].mxu0
        %v2963 = vadd.f32 %v2852, %v2962
        %2964 = vmatprep.mubr.bf16.mxu0 %v566
        %2965 = vmatmul.mubr.bf16.gmra.mrb[0].mxu0 %v565
        %v2966 = vpop.f32.mrb[0].mxu0
        %v2967 = vadd.f32 %v2856, %v2966
        %v2968 = vpop.f32.mrb[0].mxu0
        %v2969 = vadd.f32 %v2858, %v2968
        %v2970 = vpop.f32.mrb[0].mxu0
        %v2971 = vadd.f32 %v2860, %v2970
        %v2972 = vpop.f32.mrb[0].mxu0
        %v2973 = vadd.f32 %v2862, %v2972
        %2974 = vmatprep.mubr.bf16.mxu0 %v572
        %2975 = vmatmul.mubr.bf16.gmra.mrb[0].mxu0 %v571
        %v2976 = vpop.f32.mrb[0].mxu0
        %v2977 = vadd.f32 %v2866, %v2976
        %v2978 = vpop.f32.mrb[0].mxu0
        %v2979 = vadd.f32 %v2868, %v2978
        %v2980 = vpop.f32.mrb[0].mxu0
        %v2981 = vadd.f32 %v2870, %v2980
        %v2982 = vpop.f32.mrb[0].mxu0
        %v2983 = vadd.f32 %v2872, %v2982
        %2984 = vmatprep.mubr.bf16.mxu0 %v578
        %2985 = vmatmul.mubr.bf16.gmra.mrb[0].mxu0 %v577
        %v2986 = vpop.f32.mrb[0].mxu0
        %v2987 = vadd.f32 %v2876, %v2986
        %v2988 = vpop.f32.mrb[0].mxu0
        %v2989 = vadd.f32 %v2878, %v2988
        %v2990 = vpop.f32.mrb[0].mxu0
        %v2991 = vadd.f32 %v2880, %v2990
        %v2992 = vpop.f32.mrb[0].mxu0
        %v2993 = vadd.f32 %v2882, %v2992
        %2994 = vmatprep.mubr.bf16.mxu0 %v584
        %2995 = vmatmul.mubr.bf16.gmra.mrb[0].mxu0 %v583
        %v2996 = vpop.f32.mrb[0].mxu0
        %v2997 = vadd.f32 %v2886, %v2996
        %v2998 = vpop.f32.mrb[0].mxu0
        %v2999 = vadd.f32 %v2888, %v2998
        %v3000 = vpop.f32.mrb[0].mxu0
        %v3001 = vadd.f32 %v2890, %v3000
        %v3002 = vpop.f32.mrb[0].mxu0
        %v3003 = vadd.f32 %v2892, %v3002
        %3004 = vmatprep.mubr.bf16.mxu0 %v590
        %3005 = vmatmul.mubr.bf16.gmra.mrb[0].mxu0 %v589
        %v3006 = vpop.f32.mrb[0].mxu0
        %v3007 = vadd.f32 %v2896, %v3006
        %v3008 = vpop.f32.mrb[0].mxu0
        %v3009 = vadd.f32 %v2898, %v3008
        %v3010 = vpop.f32.mrb[0].mxu0
        %v3011 = vadd.f32 %v2900, %v3010
        %v3012 = vpop.f32.mrb[0].mxu0
        %v3013 = vadd.f32 %v2902, %v3012
        %3014 = vmatprep.mubr.bf16.mxu0 %v596
        %3015 = vmatmul.mubr.bf16.gmra.mrb[0].mxu0 %v595
        %v3016 = vpop.f32.mrb[0].mxu0
        %v3017 = vadd.f32 %v2906, %v3016
        %v3018 = vpop.f32.mrb[0].mxu0
        %v3019 = vadd.f32 %v2908, %v3018
        %v3020 = vpop.f32.mrb[0].mxu0
        %v3021 = vpop.f32.mrb[0].mxu0
        %3022 = vdwg.mxu0
        %3023 = vmatprep.subr.bf16.mxu0 %v1786
        %3024 = vmatpush1.bf16.msra.mxu0 %v1785
        %3025 = vmatprep.subr.bf16.mxu0 %v1792
        %3026 = vmatpush1.bf16.msra.mxu0 %v1791
        %3027 = vmatprep.subr.bf16.mxu0 %v1798
        %3028 = vmatpush1.bf16.msra.mxu0 %v1797
        %3029 = vmatprep.subr.bf16.mxu0 %v1804
        %3030 = vmatpush1.bf16.msra.mxu0 %v1803
        %3031 = vmatprep.subr.bf16.mxu0 %v1810
        %3032 = vmatpush1.bf16.msra.mxu0 %v1809
        %3033 = vmatprep.subr.bf16.mxu0 %v1816
        %3034 = vmatpush1.bf16.msra.mxu0 %v1815
        %3035 = vmatprep.subr.bf16.mxu0 %v1822
        %3036 = vmatpush1.bf16.msra.mxu0 %v1821
        %3037 = vmatprep.subr.bf16.mxu0 %v1828
        %3038 = vmatpush1.bf16.msra.mxu0 %v1827
        %3039 = vmatprep.subr.bf16.mxu0 %v1834
        %3040 = vmatpush1.bf16.msra.mxu0 %v1833
        %3041 = vmatprep.subr.bf16.mxu0 %v1840
        %3042 = vmatpush1.bf16.msra.mxu0 %v1839
        %3043 = vmatprep.subr.bf16.mxu0 %v1846
        %3044 = vmatpush1.bf16.msra.mxu0 %v1845
        %3045 = vmatprep.subr.bf16.mxu0 %v1852
        %3046 = vmatpush1.bf16.msra.mxu0 %v1851
        %3047 = vmatprep.subr.bf16.mxu0 %v1858
        %3048 = vmatpush1.bf16.msra.mxu0 %v1857
        %3049 = vmatprep.subr.bf16.mxu0 %v1864
        %3050 = vmatpush1.bf16.msra.mxu0 %v1863
        %3051 = vmatprep.subr.bf16.mxu0 %v1870
        %3052 = vmatpush1.bf16.msra.mxu0 %v1869
        %3053 = vmatprep.subr.bf16.mxu0 %v1876
        %3054 = vmatpush1.bf16.msra.mxu0 %v1875
        %3055 = vmatprep.mubr.bf16.mxu0 %v550
        %3056 = vmatmul.mubr.bf16.gmra.mrb[0].mxu0 %v549
        %v3057 = vpop.f32.mrb[0].mxu0
        %v3058 = vadd.f32 %v906, %v3057
        %v3059 = vpop.f32.mrb[0].mxu0
        %v3060 = vadd.f32 %v910, %v3059
        %v3061 = vpop.f32.mrb[0].mxu0
        %v3062 = vadd.f32 %v906, %v3061
        %v3063 = vpop.f32.mrb[0].mxu0
        %v3064 = vadd.f32 %v910, %v3063
        %3065 = vmatprep.mubr.bf16.mxu0 %v556
        %3066 = vmatmul.mubr.bf16.gmra.mrb[0].mxu0 %v555
        %v3067 = vpop.f32.mrb[0].mxu0
        %v3068 = vadd.f32 %v906, %v3067
        %v3069 = vpop.f32.mrb[0].mxu0
        %v3070 = vadd.f32 %v910, %v3069
        %v3071 = vpop.f32.mrb[0].mxu0
        %v3072 = vadd.f32 %v906, %v3071
        %v3073 = vpop.f32.mrb[0].mxu0
        %v3074 = vadd.f32 %v910, %v3073
        %3075 = vmatprep.mubr.bf16.mxu0 %v562
        %3076 = vmatmul.mubr.bf16.gmra.mrb[0].mxu0 %v561
        %v3077 = vpop.f32.mrb[0].mxu0
        %v3078 = vadd.f32 %v906, %v3077
        %v3079 = vpop.f32.mrb[0].mxu0
        %v3080 = vadd.f32 %v910, %v3079
        %v3081 = vpop.f32.mrb[0].mxu0
        %v3082 = vadd.f32 %v906, %v3081
        %v3083 = vpop.f32.mrb[0].mxu0
        %v3084 = vadd.f32 %v910, %v3083
        %3085 = vmatprep.mubr.bf16.mxu0 %v568
        %3086 = vmatmul.mubr.bf16.gmra.mrb[0].mxu0 %v567
        %v3087 = vpop.f32.mrb[0].mxu0
        %v3088 = vadd.f32 %v906, %v3087
        %v3089 = vpop.f32.mrb[0].mxu0
        %v3090 = vadd.f32 %v910, %v3089
        %v3091 = vpop.f32.mrb[0].mxu0
        %v3092 = vadd.f32 %v906, %v3091
        %v3093 = vpop.f32.mrb[0].mxu0
        %v3094 = vadd.f32 %v910, %v3093
        %3095 = vmatprep.mubr.bf16.mxu0 %v574
        %3096 = vmatmul.mubr.bf16.gmra.mrb[0].mxu0 %v573
        %v3097 = vpop.f32.mrb[0].mxu0
        %v3098 = vadd.f32 %v906, %v3097
        %v3099 = vpop.f32.mrb[0].mxu0
        %v3100 = vadd.f32 %v910, %v3099
        %v3101 = vpop.f32.mrb[0].mxu0
        %v3102 = vadd.f32 %v906, %v3101
        %v3103 = vpop.f32.mrb[0].mxu0
        %v3104 = vadd.f32 %v910, %v3103
        %3105 = vmatprep.mubr.bf16.mxu0 %v580
        %3106 = vmatmul.mubr.bf16.gmra.mrb[0].mxu0 %v579
        %v3107 = vpop.f32.mrb[0].mxu0
        %v3108 = vadd.f32 %v906, %v3107
        %v3109 = vpop.f32.mrb[0].mxu0
        %v3110 = vadd.f32 %v910, %v3109
        %v3111 = vpop.f32.mrb[0].mxu0
        %v3112 = vadd.f32 %v906, %v3111
        %v3113 = vpop.f32.mrb[0].mxu0
        %v3114 = vadd.f32 %v910, %v3113
        %3115 = vmatprep.mubr.bf16.mxu0 %v586
        %3116 = vmatmul.mubr.bf16.gmra.mrb[0].mxu0 %v585
        %v3117 = vpop.f32.mrb[0].mxu0
        %v3118 = vadd.f32 %v906, %v3117
        %v3119 = vpop.f32.mrb[0].mxu0
        %v3120 = vadd.f32 %v910, %v3119
        %v3121 = vpop.f32.mrb[0].mxu0
        %v3122 = vadd.f32 %v906, %v3121
        %v3123 = vpop.f32.mrb[0].mxu0
        %v3124 = vadd.f32 %v910, %v3123
        %3125 = vmatprep.mubr.bf16.mxu0 %v592
        %3126 = vmatmul.mubr.bf16.gmra.mrb[0].mxu0 %v591
        %v3127 = vpop.f32.mrb[0].mxu0
        %v3128 = vadd.f32 %v906, %v3127
        %v3129 = vpop.f32.mrb[0].mxu0
        %v3130 = vadd.f32 %v910, %v3129
        %v3131 = vpop.f32.mrb[0].mxu0
        %v3132 = vpop.f32.mrb[0].mxu0
        %3133 = vdwg.mxu0
        %3134 = vmatprep.subr.bf16.mxu0 %v1882
        %3135 = vmatpush1.bf16.msra.mxu0 %v1881
        %3136 = vmatprep.subr.bf16.mxu0 %v1888
        %3137 = vmatpush1.bf16.msra.mxu0 %v1887
        %3138 = vmatprep.subr.bf16.mxu0 %v1894
        %3139 = vmatpush1.bf16.msra.mxu0 %v1893
        %3140 = vmatprep.subr.bf16.mxu0 %v1900
        %3141 = vmatpush1.bf16.msra.mxu0 %v1899
        %3142 = vmatprep.subr.bf16.mxu0 %v1906
        %3143 = vmatpush1.bf16.msra.mxu0 %v1905
        %3144 = vmatprep.subr.bf16.mxu0 %v1912
        %3145 = vmatpush1.bf16.msra.mxu0 %v1911
        %3146 = vmatprep.subr.bf16.mxu0 %v1918
        %3147 = vmatpush1.bf16.msra.mxu0 %v1917
        %3148 = vmatprep.subr.bf16.mxu0 %v1924
        %3149 = vmatpush1.bf16.msra.mxu0 %v1923
        %3150 = vmatprep.subr.bf16.mxu0 %v1930
        %3151 = vmatpush1.bf16.msra.mxu0 %v1929
        %3152 = vmatprep.subr.bf16.mxu0 %v1936
        %3153 = vmatpush1.bf16.msra.mxu0 %v1935
        %3154 = vmatprep.subr.bf16.mxu0 %v1942
        %3155 = vmatpush1.bf16.msra.mxu0 %v1941
        %3156 = vmatprep.subr.bf16.mxu0 %v1948
        %3157 = vmatpush1.bf16.msra.mxu0 %v1947
        %3158 = vmatprep.subr.bf16.mxu0 %v1954
        %3159 = vmatpush1.bf16.msra.mxu0 %v1953
        %3160 = vmatprep.subr.bf16.mxu0 %v1960
        %3161 = vmatpush1.bf16.msra.mxu0 %v1959
        %3162 = vmatprep.subr.bf16.mxu0 %v1966
        %3163 = vmatpush1.bf16.msra.mxu0 %v1965
        %3164 = vmatprep.subr.bf16.mxu0 %v1972
        %3165 = vmatpush1.bf16.msra.mxu0 %v1971
        %3166 = vmatprep.mubr.bf16.mxu0 %v552
        %3167 = vmatmul.mubr.bf16.gmra.mrb[0].mxu0 %v551
        %v3168 = vpop.f32.mrb[0].mxu0
        %v3169 = vadd.f32 %v3058, %v3168
        %v3170 = vpop.f32.mrb[0].mxu0
        %v3171 = vadd.f32 %v3060, %v3170
        %v3172 = vpop.f32.mrb[0].mxu0
        %v3173 = vadd.f32 %v3062, %v3172
        %v3174 = vpop.f32.mrb[0].mxu0
        %v3175 = vadd.f32 %v3064, %v3174
        %3176 = vmatprep.mubr.bf16.mxu0 %v558
        %3177 = vmatmul.mubr.bf16.gmra.mrb[0].mxu0 %v557
        %v3178 = vpop.f32.mrb[0].mxu0
        %v3179 = vadd.f32 %v3068, %v3178
        %v3180 = vpop.f32.mrb[0].mxu0
        %v3181 = vadd.f32 %v3070, %v3180
        %v3182 = vpop.f32.mrb[0].mxu0
        %v3183 = vadd.f32 %v3072, %v3182
        %v3184 = vpop.f32.mrb[0].mxu0
        %v3185 = vadd.f32 %v3074, %v3184
        %3186 = vmatprep.mubr.bf16.mxu0 %v564
        %3187 = vmatmul.mubr.bf16.gmra.mrb[0].mxu0 %v563
        %v3188 = vpop.f32.mrb[0].mxu0
        %v3189 = vadd.f32 %v3078, %v3188
        %v3190 = vpop.f32.mrb[0].mxu0
        %v3191 = vadd.f32 %v3080, %v3190
        %v3192 = vpop.f32.mrb[0].mxu0
        %v3193 = vadd.f32 %v3082, %v3192
        %v3194 = vpop.f32.mrb[0].mxu0
        %v3195 = vadd.f32 %v3084, %v3194
        %3196 = vmatprep.mubr.bf16.mxu0 %v570
        %3197 = vmatmul.mubr.bf16.gmra.mrb[0].mxu0 %v569
        %v3198 = vpop.f32.mrb[0].mxu0
        %v3199 = vadd.f32 %v3088, %v3198
        %v3200 = vpop.f32.mrb[0].mxu0
        %v3201 = vadd.f32 %v3090, %v3200
        %v3202 = vpop.f32.mrb[0].mxu0
        %v3203 = vadd.f32 %v3092, %v3202
        %v3204 = vpop.f32.mrb[0].mxu0
        %v3205 = vadd.f32 %v3094, %v3204
        %3206 = vmatprep.mubr.bf16.mxu0 %v576
        %3207 = vmatmul.mubr.bf16.gmra.mrb[0].mxu0 %v575
        %v3208 = vpop.f32.mrb[0].mxu0
        %v3209 = vadd.f32 %v3098, %v3208
        %v3210 = vpop.f32.mrb[0].mxu0
        %v3211 = vadd.f32 %v3100, %v3210
        %v3212 = vpop.f32.mrb[0].mxu0
        %v3213 = vadd.f32 %v3102, %v3212
        %v3214 = vpop.f32.mrb[0].mxu0
        %v3215 = vadd.f32 %v3104, %v3214
        %3216 = vmatprep.mubr.bf16.mxu0 %v582
        %3217 = vmatmul.mubr.bf16.gmra.mrb[0].mxu0 %v581
        %v3218 = vpop.f32.mrb[0].mxu0
        %v3219 = vadd.f32 %v3108, %v3218
        %v3220 = vpop.f32.mrb[0].mxu0
        %v3221 = vadd.f32 %v3110, %v3220
        %v3222 = vpop.f32.mrb[0].mxu0
        %v3223 = vadd.f32 %v3112, %v3222
        %v3224 = vpop.f32.mrb[0].mxu0
        %v3225 = vadd.f32 %v3114, %v3224
        %3226 = vmatprep.mubr.bf16.mxu0 %v588
        %3227 = vmatmul.mubr.bf16.gmra.mrb[0].mxu0 %v587
        %v3228 = vpop.f32.mrb[0].mxu0
        %v3229 = vadd.f32 %v3118, %v3228
        %v3230 = vpop.f32.mrb[0].mxu0
        %v3231 = vadd.f32 %v3120, %v3230
        %v3232 = vpop.f32.mrb[0].mxu0
        %v3233 = vadd.f32 %v3122, %v3232
        %v3234 = vpop.f32.mrb[0].mxu0
        %v3235 = vadd.f32 %v3124, %v3234
        %3236 = vmatprep.mubr.bf16.mxu0 %v594
        %3237 = vmatmul.mubr.bf16.gmra.mrb[0].mxu0 %v593
        %v3238 = vpop.f32.mrb[0].mxu0
        %v3239 = vadd.f32 %v3128, %v3238
        %v3240 = vpop.f32.mrb[0].mxu0
        %v3241 = vadd.f32 %v3130, %v3240
        %v3242 = vpop.f32.mrb[0].mxu0
        %v3243 = vpop.f32.mrb[0].mxu0
        %3244 = vdwg.mxu0
        %3245 = vmatprep.subr.bf16.mxu0 %v1978
        %3246 = vmatpush1.bf16.msra.mxu0 %v1977
        %3247 = vmatprep.subr.bf16.mxu0 %v1984
        %3248 = vmatpush1.bf16.msra.mxu0 %v1983
        %3249 = vmatprep.subr.bf16.mxu0 %v1990
        %3250 = vmatpush1.bf16.msra.mxu0 %v1989
        %3251 = vmatprep.subr.bf16.mxu0 %v1996
        %3252 = vmatpush1.bf16.msra.mxu0 %v1995
        %3253 = vmatprep.subr.bf16.mxu0 %v2002
        %3254 = vmatpush1.bf16.msra.mxu0 %v2001
        %3255 = vmatprep.subr.bf16.mxu0 %v2008
        %3256 = vmatpush1.bf16.msra.mxu0 %v2007
        %3257 = vmatprep.subr.bf16.mxu0 %v2014
        %3258 = vmatpush1.bf16.msra.mxu0 %v2013
        %3259 = vmatprep.subr.bf16.mxu0 %v2020
        %3260 = vmatpush1.bf16.msra.mxu0 %v2019
        %3261 = vmatprep.subr.bf16.mxu0 %v2026
        %3262 = vmatpush1.bf16.msra.mxu0 %v2025
        %3263 = vmatprep.subr.bf16.mxu0 %v2032
        %3264 = vmatpush1.bf16.msra.mxu0 %v2031
        %3265 = vmatprep.subr.bf16.mxu0 %v2038
        %3266 = vmatpush1.bf16.msra.mxu0 %v2037
        %3267 = vmatprep.subr.bf16.mxu0 %v2044
        %3268 = vmatpush1.bf16.msra.mxu0 %v2043
        %3269 = vmatprep.subr.bf16.mxu0 %v2050
        %3270 = vmatpush1.bf16.msra.mxu0 %v2049
        %3271 = vmatprep.subr.bf16.mxu0 %v2056
        %3272 = vmatpush1.bf16.msra.mxu0 %v2055
        %3273 = vmatprep.subr.bf16.mxu0 %v2062
        %3274 = vmatpush1.bf16.msra.mxu0 %v2061
        %3275 = vmatprep.subr.bf16.mxu0 %v2068
        %3276 = vmatpush1.bf16.msra.mxu0 %v2067
        %3277 = vmatprep.mubr.bf16.mxu0 %v554
        %3278 = vmatmul.mubr.bf16.gmra.mrb[0].mxu0 %v553
        %v3279 = vpop.f32.mrb[0].mxu0
        %v3280 = vadd.f32 %v3169, %v3279
        %v3281 = vpop.f32.mrb[0].mxu0
        %v3282 = vadd.f32 %v3171, %v3281
        %v3283 = vpop.f32.mrb[0].mxu0
        %v3284 = vadd.f32 %v3173, %v3283
        %v3285 = vpop.f32.mrb[0].mxu0
        %v3286 = vadd.f32 %v3175, %v3285
        %3287 = vmatprep.mubr.bf16.mxu0 %v560
        %3288 = vmatmul.mubr.bf16.gmra.mrb[0].mxu0 %v559
        %v3289 = vpop.f32.mrb[0].mxu0
        %v3290 = vadd.f32 %v3179, %v3289
        %v3291 = vpop.f32.mrb[0].mxu0
        %v3292 = vadd.f32 %v3181, %v3291
        %v3293 = vpop.f32.mrb[0].mxu0
        %v3294 = vadd.f32 %v3183, %v3293
        %v3295 = vpop.f32.mrb[0].mxu0
        %v3296 = vadd.f32 %v3185, %v3295
        %3297 = vmatprep.mubr.bf16.mxu0 %v566
        %3298 = vmatmul.mubr.bf16.gmra.mrb[0].mxu0 %v565
        %v3299 = vpop.f32.mrb[0].mxu0
        %v3300 = vadd.f32 %v3189, %v3299
        %v3301 = vpop.f32.mrb[0].mxu0
        %v3302 = vadd.f32 %v3191, %v3301
        %v3303 = vpop.f32.mrb[0].mxu0
        %v3304 = vadd.f32 %v3193, %v3303
        %v3305 = vpop.f32.mrb[0].mxu0
        %v3306 = vadd.f32 %v3195, %v3305
        %3307 = vmatprep.mubr.bf16.mxu0 %v572
        %3308 = vmatmul.mubr.bf16.gmra.mrb[0].mxu0 %v571
        %v3309 = vpop.f32.mrb[0].mxu0
        %v3310 = vadd.f32 %v3199, %v3309
        %v3311 = vpop.f32.mrb[0].mxu0
        %v3312 = vadd.f32 %v3201, %v3311
        %v3313 = vpop.f32.mrb[0].mxu0
        %v3314 = vadd.f32 %v3203, %v3313
        %v3315 = vpop.f32.mrb[0].mxu0
        %v3316 = vadd.f32 %v3205, %v3315
        %3317 = vmatprep.mubr.bf16.mxu0 %v578
        %3318 = vmatmul.mubr.bf16.gmra.mrb[0].mxu0 %v577
        %v3319 = vpop.f32.mrb[0].mxu0
        %v3320 = vadd.f32 %v3209, %v3319
        %v3321 = vpop.f32.mrb[0].mxu0
        %v3322 = vadd.f32 %v3211, %v3321
        %v3323 = vpop.f32.mrb[0].mxu0
        %v3324 = vadd.f32 %v3213, %v3323
        %v3325 = vpop.f32.mrb[0].mxu0
        %v3326 = vadd.f32 %v3215, %v3325
        %3327 = vmatprep.mubr.bf16.mxu0 %v584
        %3328 = vmatmul.mubr.bf16.gmra.mrb[0].mxu0 %v583
        %v3329 = vpop.f32.mrb[0].mxu0
        %v3330 = vadd.f32 %v3219, %v3329
        %v3331 = vpop.f32.mrb[0].mxu0
        %v3332 = vadd.f32 %v3221, %v3331
        %v3333 = vpop.f32.mrb[0].mxu0
        %v3334 = vadd.f32 %v3223, %v3333
        %v3335 = vpop.f32.mrb[0].mxu0
        %v3336 = vadd.f32 %v3225, %v3335
        %3337 = vmatprep.mubr.bf16.mxu0 %v590
        %3338 = vmatmul.mubr.bf16.gmra.mrb[0].mxu0 %v589
        %v3339 = vpop.f32.mrb[0].mxu0
        %v3340 = vadd.f32 %v3229, %v3339
        %v3341 = vpop.f32.mrb[0].mxu0
        %v3342 = vadd.f32 %v3231, %v3341
        %v3343 = vpop.f32.mrb[0].mxu0
        %v3344 = vadd.f32 %v3233, %v3343
        %v3345 = vpop.f32.mrb[0].mxu0
        %v3346 = vadd.f32 %v3235, %v3345
        %3347 = vmatprep.mubr.bf16.mxu0 %v596
        %3348 = vmatmul.mubr.bf16.gmra.mrb[0].mxu0 %v595
        %v3349 = vpop.f32.mrb[0].mxu0
        %v3350 = vadd.f32 %v3239, %v3349
        %v3351 = vpop.f32.mrb[0].mxu0
        %v3352 = vadd.f32 %v3241, %v3351
        %v3353 = vpop.f32.mrb[0].mxu0
        %v3354 = vpop.f32.mrb[0].mxu0
        %3355 = vdwg.mxu0
        %v3356 = vmax.f32 %v2614, 0.0
        %v3357 = vmax.f32 %v2616, 0.0
        %v3358 = vmax.f32 %v2947, 0.0
        %v3359 = vmax.f32 %v2949, 0.0
        %v3360 = vmax.f32 %v3280, 0.0
        %v3361 = vmax.f32 %v3282, 0.0
        %v3362 = vmax.f32 %v2618, 0.0
        %v3363 = vmax.f32 %v2620, 0.0
        %v3364 = vmax.f32 %v2951, 0.0
        %v3365 = vmax.f32 %v2953, 0.0
        %v3366 = vmax.f32 %v3284, 0.0
        %v3367 = vmax.f32 %v3286, 0.0
        %v3368 = vmax.f32 %v2624, 0.0
        %v3369 = vmax.f32 %v2626, 0.0
        %v3370 = vmax.f32 %v2957, 0.0
        %v3371 = vmax.f32 %v2959, 0.0
        %v3372 = vmax.f32 %v3290, 0.0
        %v3373 = vmax.f32 %v3292, 0.0
        %v3374 = vmax.f32 %v2628, 0.0
        %v3375 = vmax.f32 %v2630, 0.0
        %v3376 = vmax.f32 %v2961, 0.0
        %v3377 = vmax.f32 %v2963, 0.0
        %v3378 = vmax.f32 %v3294, 0.0
        %v3379 = vmax.f32 %v3296, 0.0
        %v3380 = vmax.f32 %v2634, 0.0
        %v3381 = vmax.f32 %v2636, 0.0
        %v3382 = vmax.f32 %v2967, 0.0
        %v3383 = vmax.f32 %v2969, 0.0
        %v3384 = vmax.f32 %v3300, 0.0
        %v3385 = vmax.f32 %v3302, 0.0
        %v3386 = vmax.f32 %v2638, 0.0
        %v3387 = vmax.f32 %v2640, 0.0
        %v3388 = vmax.f32 %v2971, 0.0
        %v3389 = vmax.f32 %v2973, 0.0
        %v3390 = vmax.f32 %v3304, 0.0
        %v3391 = vmax.f32 %v3306, 0.0
        %v3392 = vmax.f32 %v2644, 0.0
        %v3393 = vmax.f32 %v2646, 0.0
        %v3394 = vmax.f32 %v2977, 0.0
        %v3395 = vmax.f32 %v2979, 0.0
        %v3396 = vmax.f32 %v3310, 0.0
        %v3397 = vmax.f32 %v3312, 0.0
        %v3398 = vmax.f32 %v2648, 0.0
        %v3399 = vmax.f32 %v2650, 0.0
        %v3400 = vmax.f32 %v2981, 0.0
        %v3401 = vmax.f32 %v2983, 0.0
        %v3402 = vmax.f32 %v3314, 0.0
        %v3403 = vmax.f32 %v3316, 0.0
        %v3404 = vmax.f32 %v2654, 0.0
        %v3405 = vmax.f32 %v2656, 0.0
        %v3406 = vmax.f32 %v2987, 0.0
        %v3407 = vmax.f32 %v2989, 0.0
        %v3408 = vmax.f32 %v3320, 0.0
        %v3409 = vmax.f32 %v3322, 0.0
        %v3410 = vmax.f32 %v2658, 0.0
        %v3411 = vmax.f32 %v2660, 0.0
        %v3412 = vmax.f32 %v2991, 0.0
        %v3413 = vmax.f32 %v2993, 0.0
        %v3414 = vmax.f32 %v3324, 0.0
        %v3415 = vmax.f32 %v3326, 0.0
        %v3416 = vmax.f32 %v2664, 0.0
        %v3417 = vmax.f32 %v2666, 0.0
        %v3418 = vmax.f32 %v2997, 0.0
        %v3419 = vmax.f32 %v2999, 0.0
        %v3420 = vmax.f32 %v3330, 0.0
        %v3421 = vmax.f32 %v3332, 0.0
        %v3422 = vmax.f32 %v2668, 0.0
        %v3423 = vmax.f32 %v2670, 0.0
        %v3424 = vmax.f32 %v3001, 0.0
        %v3425 = vmax.f32 %v3003, 0.0
        %v3426 = vmax.f32 %v3334, 0.0
        %v3427 = vmax.f32 %v3336, 0.0
        %v3428 = vmax.f32 %v2674, 0.0
        %v3429 = vmax.f32 %v2676, 0.0
        %v3430 = vmax.f32 %v3007, 0.0
        %v3431 = vmax.f32 %v3009, 0.0
        %v3432 = vmax.f32 %v3340, 0.0
        %v3433 = vmax.f32 %v3342, 0.0
        %v3434 = vmax.f32 %v2678, 0.0
        %v3435 = vmax.f32 %v2680, 0.0
        %v3436 = vmax.f32 %v3011, 0.0
        %v3437 = vmax.f32 %v3013, 0.0
        %v3438 = vmax.f32 %v3344, 0.0
        %v3439 = vmax.f32 %v3346, 0.0
        %v3440 = vmax.f32 %v2684, 0.0
        %v3441 = vmax.f32 %v2686, 0.0
        %v3442 = vmax.f32 %v3017, 0.0
        %v3443 = vmax.f32 %v3019, 0.0
        %v3444 = vmax.f32 %v3350, 0.0
        %v3445 = vmax.f32 %v3352, 0.0
        %v3446 = vld [vmem:[#allocation2] sm:$0xff]
        %v3447 = vld [vmem:[#allocation2 + $0x8] sm:$0xff]
        %v3448 = vld [vmem:[#allocation2 + $0x10] sm:$0xff]
        %v3449 = vld [vmem:[#allocation2 + $0x18] sm:$0xff]
        %v3450 = vld [vmem:[#allocation2 + $0x20] sm:$0xff]
        %v3451 = vld [vmem:[#allocation2 + $0x28] sm:$0xff]
        %v3452 = vld [vmem:[#allocation2 + $0x30] sm:$0xff]
        %v3453 = vld [vmem:[#allocation2 + $0x38] sm:$0xff]
        %v3454 = vld [vmem:[#allocation2 + $0x40] sm:$0xff]
        %v3455 = vld [vmem:[#allocation2 + $0x48] sm:$0xff]
        %v3456 = vld [vmem:[#allocation2 + $0x50] sm:$0xff]
        %v3457 = vld [vmem:[#allocation2 + $0x58] sm:$0xff]
        %v3458 = vld [vmem:[#allocation2 + $0x60] sm:$0xff]
        %v3459 = vld [vmem:[#allocation2 + $0x68] sm:$0xff]
        %v3460 = vld [vmem:[#allocation2 + $0x70] sm:$0xff]
        %v3461 = vld [vmem:[#allocation2 + $0x78] sm:$0xff]
        %v3462 = vld [vmem:[#allocation2 + $0x80] sm:$0xff]
        %v3463 = vld [vmem:[#allocation2 + $0x88] sm:$0xff]
        %v3464 = vld [vmem:[#allocation2 + $0x90] sm:$0xff]
        %v3465 = vld [vmem:[#allocation2 + $0x98] sm:$0xff]
        %v3466 = vld [vmem:[#allocation2 + $0xa0] sm:$0xff]
        %v3467 = vld [vmem:[#allocation2 + $0xa8] sm:$0xff]
        %v3468 = vld [vmem:[#allocation2 + $0xb0] sm:$0xff]
        %v3469 = vld [vmem:[#allocation2 + $0xb8] sm:$0xff]
        %v3470 = vld [vmem:[#allocation2 + $0xc0] sm:$0xff]
        %v3471 = vld [vmem:[#allocation2 + $0xc8] sm:$0xff]
        %v3472 = vld [vmem:[#allocation2 + $0xd0] sm:$0xff]
        %v3473 = vld [vmem:[#allocation2 + $0xd8] sm:$0xff]
        %v3474 = vld [vmem:[#allocation2 + $0xe0] sm:$0xff]
        %v3475 = vld [vmem:[#allocation2 + $0xe8] sm:$0xff]
        %v3476 = vld [vmem:[#allocation2 + $0xf0] sm:$0xff]
        %v3477 = vld [vmem:[#allocation2 + $0xf8] sm:$0xff]
        %v3478 = vld [vmem:[#allocation2 + $0x100] sm:$0xff]
        %v3479 = vld [vmem:[#allocation2 + $0x108] sm:$0xff]
        %v3480 = vld [vmem:[#allocation2 + $0x110] sm:$0xff]
        %v3481 = vld [vmem:[#allocation2 + $0x118] sm:$0xff]
        %v3482 = vld [vmem:[#allocation2 + $0x120] sm:$0xff]
        %v3483 = vld [vmem:[#allocation2 + $0x128] sm:$0xff]
        %v3484 = vld [vmem:[#allocation2 + $0x130] sm:$0xff]
        %v3485 = vld [vmem:[#allocation2 + $0x138] sm:$0xff]
        %v3486 = vld [vmem:[#allocation2 + $0x140] sm:$0xff]
        %v3487 = vld [vmem:[#allocation2 + $0x148] sm:$0xff]
        %v3488 = vld [vmem:[#allocation2 + $0x150] sm:$0xff]
        %v3489 = vld [vmem:[#allocation2 + $0x158] sm:$0xff]
        %v3490 = vld [vmem:[#allocation2 + $0x160] sm:$0xff]
        %v3491 = vld [vmem:[#allocation2 + $0x168] sm:$0xff]
        %v3492 = vld [vmem:[#allocation2 + $0x170] sm:$0xff]
        %v3493 = vld [vmem:[#allocation2 + $0x178] sm:$0xff]
        %v3494 = vld [vmem:[#allocation2 + $0x180] sm:$0xff]
        %v3495 = vld [vmem:[#allocation2 + $0x188] sm:$0xff]
        %v3496 = vld [vmem:[#allocation2 + $0x190] sm:$0xff]
        %v3497 = vld [vmem:[#allocation2 + $0x198] sm:$0xff]
        %v3498 = vld [vmem:[#allocation2 + $0x1a0] sm:$0xff]
        %v3499 = vld [vmem:[#allocation2 + $0x1a8] sm:$0xff]
        %v3500 = vld [vmem:[#allocation2 + $0x1b0] sm:$0xff]
        %v3501 = vld [vmem:[#allocation2 + $0x1b8] sm:$0xff]
        %v3502 = vld [vmem:[#allocation2 + $0x1c0] sm:$0xff]
        %v3503 = vld [vmem:[#allocation2 + $0x1c8] sm:$0xff]
        %v3504 = vld [vmem:[#allocation2 + $0x1d0] sm:$0xff]
        %v3505 = vld [vmem:[#allocation2 + $0x1d8] sm:$0xff]
        %v3506 = vld [vmem:[#allocation2 + $0x1e0] sm:$0xff]
        %v3507 = vld [vmem:[#allocation2 + $0x1e8] sm:$0xff]
        %v3508 = vld [vmem:[#allocation2 + $0x1f0] sm:$0xff]
        %v3509 = vld [vmem:[#allocation2 + $0x1f8] sm:$0xff]
        %v3510 = vld [vmem:[#allocation2 + $0x200] sm:$0xff]
        %v3511 = vld [vmem:[#allocation2 + $0x208] sm:$0xff]
        %v3512 = vld [vmem:[#allocation2 + $0x210] sm:$0xff]
        %v3513 = vld [vmem:[#allocation2 + $0x218] sm:$0xff]
        %v3514 = vld [vmem:[#allocation2 + $0x220] sm:$0xff]
        %v3515 = vld [vmem:[#allocation2 + $0x228] sm:$0xff]
        %v3516 = vld [vmem:[#allocation2 + $0x230] sm:$0xff]
        %v3517 = vld [vmem:[#allocation2 + $0x238] sm:$0xff]
        %v3518 = vld [vmem:[#allocation2 + $0x240] sm:$0xff]
        %v3519 = vld [vmem:[#allocation2 + $0x248] sm:$0xff]
        %v3520 = vld [vmem:[#allocation2 + $0x250] sm:$0xff]
        %v3521 = vld [vmem:[#allocation2 + $0x258] sm:$0xff]
        %v3522 = vld [vmem:[#allocation2 + $0x260] sm:$0xff]
        %v3523 = vld [vmem:[#allocation2 + $0x268] sm:$0xff]
        %v3524 = vld [vmem:[#allocation2 + $0x270] sm:$0xff]
        %v3525 = vld [vmem:[#allocation2 + $0x278] sm:$0xff]
        %v3526 = vld [vmem:[#allocation2 + $0x280] sm:$0xff]
        %v3527 = vld [vmem:[#allocation2 + $0x288] sm:$0xff]
        %v3528 = vld [vmem:[#allocation2 + $0x290] sm:$0xff]
        %v3529 = vld [vmem:[#allocation2 + $0x298] sm:$0xff]
        %v3530 = vld [vmem:[#allocation2 + $0x2a0] sm:$0xff]
        %v3531 = vld [vmem:[#allocation2 + $0x2a8] sm:$0xff]
        %v3532 = vld [vmem:[#allocation2 + $0x2b0] sm:$0xff]
        %v3533 = vld [vmem:[#allocation2 + $0x2b8] sm:$0xff]
        %v3534 = vld [vmem:[#allocation2 + $0x2c0] sm:$0xff]
        %v3535 = vld [vmem:[#allocation2 + $0x2c8] sm:$0xff]
        %v3536 = vpack.c.bf16 %v3362, %v3356
        %v3537 = vpack.c.bf16 %v3363, %v3357
        %v3538 = vpack.c.bf16 %v3364, %v3358
        %v3539 = vpack.c.bf16 %v3365, %v3359
        %v3540 = vpack.c.bf16 %v3366, %v3360
        %v3541 = vpack.c.bf16 %v3367, %v3361
        %v3542 = vpack.c.bf16 %v3374, %v3368
        %v3543 = vpack.c.bf16 %v3375, %v3369
        %v3544 = vpack.c.bf16 %v3376, %v3370
        %v3545 = vpack.c.bf16 %v3377, %v3371
        %v3546 = vpack.c.bf16 %v3378, %v3372
        %v3547 = vpack.c.bf16 %v3379, %v3373
        %v3548 = vpack.c.bf16 %v3386, %v3380
        %v3549 = vpack.c.bf16 %v3387, %v3381
        %v3550 = vpack.c.bf16 %v3388, %v3382
        %v3551 = vpack.c.bf16 %v3389, %v3383
        %v3552 = vpack.c.bf16 %v3390, %v3384
        %v3553 = vpack.c.bf16 %v3391, %v3385
        %v3554 = vpack.c.bf16 %v3398, %v3392
        %v3555 = vpack.c.bf16 %v3399, %v3393
        %v3556 = vpack.c.bf16 %v3400, %v3394
        %v3557 = vpack.c.bf16 %v3401, %v3395
        %v3558 = vpack.c.bf16 %v3402, %v3396
        %v3559 = vpack.c.bf16 %v3403, %v3397
        %v3560 = vpack.c.bf16 %v3410, %v3404
        %v3561 = vpack.c.bf16 %v3411, %v3405
        %v3562 = vpack.c.bf16 %v3412, %v3406
        %v3563 = vpack.c.bf16 %v3413, %v3407
        %v3564 = vpack.c.bf16 %v3414, %v3408
        %v3565 = vpack.c.bf16 %v3415, %v3409
        %v3566 = vpack.c.bf16 %v3422, %v3416
        %v3567 = vpack.c.bf16 %v3423, %v3417
        %v3568 = vpack.c.bf16 %v3424, %v3418
        %v3569 = vpack.c.bf16 %v3425, %v3419
        %v3570 = vpack.c.bf16 %v3426, %v3420
        %v3571 = vpack.c.bf16 %v3427, %v3421
        %v3572 = vpack.c.bf16 %v3434, %v3428
        %v3573 = vpack.c.bf16 %v3435, %v3429
        %v3574 = vpack.c.bf16 %v3436, %v3430
        %v3575 = vpack.c.bf16 %v3437, %v3431
        %v3576 = vpack.c.bf16 %v3438, %v3432
        %v3577 = vpack.c.bf16 %v3439, %v3433
        %v3578 = vpack.c.bf16 %v3440, %v3440
        %v3579 = vpack.c.bf16 %v3441, %v3441
        %v3580 = vpack.c.bf16 %v3442, %v3442
        %v3581 = vpack.c.bf16 %v3443, %v3443
        %v3582 = vpack.c.bf16 %v3444, %v3444
        %v3583 = vpack.c.bf16 %v3445, %v3445
        %v3584 = vld [vmem:[%s324] sm:$0xff]
        %v3585 = vld [vmem:[%s324 + $0x8] sm:$0xff]
        %v3586 = vld [vmem:[%s324 + $0x10] sm:$0xff]
        %v3587 = vld [vmem:[%s324 + $0x18] sm:$0xff]
        %v3588 = vld [vmem:[%s324 + $0x20] sm:$0xff]
        %v3589 = vld [vmem:[%s324 + $0x28] sm:$0xff]
        %v3590 = vld [vmem:[%s324 + $0x30] sm:$0xff]
        %v3591 = vld [vmem:[%s324 + $0x38] sm:$0xff]
        %v3592 = vld [vmem:[%s324 + $0x40] sm:$0xff]
        %v3593 = vld [vmem:[%s324 + $0x48] sm:$0xff]
        %v3594 = vld [vmem:[%s324 + $0x50] sm:$0xff]
        %v3595 = vld [vmem:[%s324 + $0x58] sm:$0xff]
        %v3596 = vld [vmem:[%s324 + $0x60] sm:$0xff]
        %v3597 = vld [vmem:[%s324 + $0x68] sm:$0xff]
        %v3598 = vld [vmem:[%s324 + $0x70] sm:$0xff]
        %v3599 = vld [vmem:[%s324 + $0x78] sm:$0xff]
        %v3600 = vld [vmem:[%s324 + $0x80] sm:$0xff]
        %v3601 = vld [vmem:[%s324 + $0x88] sm:$0xff]
        %v3602 = vld [vmem:[%s324 + $0x90] sm:$0xff]
        %v3603 = vld [vmem:[%s324 + $0x98] sm:$0xff]
        %v3604 = vld [vmem:[%s324 + $0xa0] sm:$0xff]
        %v3605 = vld [vmem:[%s324 + $0xa8] sm:$0xff]
        %v3606 = vld [vmem:[%s324 + $0xb0] sm:$0xff]
        %v3607 = vld [vmem:[%s324 + $0xb8] sm:$0xff]
        %v3608 = vld [vmem:[%s324 + $0xc0] sm:$0xff]
        %v3609 = vld [vmem:[%s324 + $0xc8] sm:$0xff]
        %v3610 = vld [vmem:[%s324 + $0xd0] sm:$0xff]
        %v3611 = vld [vmem:[%s324 + $0xd8] sm:$0xff]
        %v3612 = vld [vmem:[%s324 + $0xe0] sm:$0xff]
        %v3613 = vld [vmem:[%s324 + $0xe8] sm:$0xff]
        %v3614 = vld [vmem:[%s324 + $0xf0] sm:$0xff]
        %v3615 = vld [vmem:[%s324 + $0xf8] sm:$0xff]
        %v3616 = vld [vmem:[%s324 + $0x100] sm:$0xff]
        %v3617 = vld [vmem:[%s324 + $0x108] sm:$0xff]
        %v3618 = vld [vmem:[%s324 + $0x110] sm:$0xff]
        %v3619 = vld [vmem:[%s324 + $0x118] sm:$0xff]
        %v3620 = vld [vmem:[%s324 + $0x120] sm:$0xff]
        %v3621 = vld [vmem:[%s324 + $0x128] sm:$0xff]
        %v3622 = vld [vmem:[%s324 + $0x130] sm:$0xff]
        %v3623 = vld [vmem:[%s324 + $0x138] sm:$0xff]
        %v3624 = vld [vmem:[%s324 + $0x140] sm:$0xff]
        %v3625 = vld [vmem:[%s324 + $0x148] sm:$0xff]
        %v3626 = vld [vmem:[%s324 + $0x150] sm:$0xff]
        %v3627 = vld [vmem:[%s324 + $0x158] sm:$0xff]
        %v3628 = vld [vmem:[%s324 + $0x160] sm:$0xff]
        %v3629 = vld [vmem:[%s324 + $0x168] sm:$0xff]
        %v3630 = vld [vmem:[%s324 + $0x170] sm:$0xff]
        %v3631 = vld [vmem:[%s324 + $0x178] sm:$0xff]
        %v3632 = vld [vmem:[%s324 + $0x180] sm:$0xff]
        %v3633 = vld [vmem:[%s324 + $0x188] sm:$0xff]
        %v3634 = vld [vmem:[%s324 + $0x190] sm:$0xff]
        %v3635 = vld [vmem:[%s324 + $0x198] sm:$0xff]
        %v3636 = vld [vmem:[%s324 + $0x1a0] sm:$0xff]
        %v3637 = vld [vmem:[%s324 + $0x1a8] sm:$0xff]
        %v3638 = vld [vmem:[%s324 + $0x1b0] sm:$0xff]
        %v3639 = vld [vmem:[%s324 + $0x1b8] sm:$0xff]
        %v3640 = vld [vmem:[%s324 + $0x1c0] sm:$0xff]
        %v3641 = vld [vmem:[%s324 + $0x1c8] sm:$0xff]
        %v3642 = vld [vmem:[%s324 + $0x1d0] sm:$0xff]
        %v3643 = vld [vmem:[%s324 + $0x1d8] sm:$0xff]
        %v3644 = vld [vmem:[%s324 + $0x1e0] sm:$0xff]
        %v3645 = vld [vmem:[%s324 + $0x1e8] sm:$0xff]
        %v3646 = vld [vmem:[%s324 + $0x1f0] sm:$0xff]
        %v3647 = vld [vmem:[%s324 + $0x1f8] sm:$0xff]
        %v3648 = vld [vmem:[%s324 + $0x200] sm:$0xff]
        %v3649 = vld [vmem:[%s324 + $0x208] sm:$0xff]
        %v3650 = vld [vmem:[%s324 + $0x210] sm:$0xff]
        %v3651 = vld [vmem:[%s324 + $0x218] sm:$0xff]
        %v3652 = vld [vmem:[%s324 + $0x220] sm:$0xff]
        %v3653 = vld [vmem:[%s324 + $0x228] sm:$0xff]
        %v3654 = vld [vmem:[%s324 + $0x230] sm:$0xff]
        %v3655 = vld [vmem:[%s324 + $0x238] sm:$0xff]
        %v3656 = vld [vmem:[%s324 + $0x240] sm:$0xff]
        %v3657 = vld [vmem:[%s324 + $0x248] sm:$0xff]
        %v3658 = vld [vmem:[%s324 + $0x250] sm:$0xff]
        %v3659 = vld [vmem:[%s324 + $0x258] sm:$0xff]
        %v3660 = vld [vmem:[%s324 + $0x260] sm:$0xff]
        %v3661 = vld [vmem:[%s324 + $0x268] sm:$0xff]
        %v3662 = vld [vmem:[%s324 + $0x270] sm:$0xff]
        %v3663 = vld [vmem:[%s324 + $0x278] sm:$0xff]
        %v3664 = vld [vmem:[%s324 + $0x280] sm:$0xff]
        %v3665 = vld [vmem:[%s324 + $0x288] sm:$0xff]
        %v3666 = vld [vmem:[%s324 + $0x290] sm:$0xff]
        %v3667 = vld [vmem:[%s324 + $0x298] sm:$0xff]
        %v3668 = vld [vmem:[%s324 + $0x2a0] sm:$0xff]
        %v3669 = vld [vmem:[%s324 + $0x2a8] sm:$0xff]
        %v3670 = vld [vmem:[%s324 + $0x2b0] sm:$0xff]
        %v3671 = vld [vmem:[%s324 + $0x2b8] sm:$0xff]
        %v3672 = vld [vmem:[%s324 + $0x2c0] sm:$0xff]
        %v3673 = vld [vmem:[%s324 + $0x2c8] sm:$0xff]
        %v3674 = vld [vmem:[%s324 + $0x2d0] sm:$0xff]
        %v3675 = vld [vmem:[%s324 + $0x2d8] sm:$0xff]
        %v3676 = vld [vmem:[%s324 + $0x2e0] sm:$0xff]
        %v3677 = vld [vmem:[%s324 + $0x2e8] sm:$0xff]
        %v3678 = vld [vmem:[%s324 + $0x2f0] sm:$0xff]
        %v3679 = vld [vmem:[%s324 + $0x2f8] sm:$0xff]
        %v3680 = vld [vmem:[%s324 + $0x300] sm:$0xff]
        %v3681 = vld [vmem:[%s324 + $0x308] sm:$0xff]
        %v3682 = vld [vmem:[%s324 + $0x310] sm:$0xff]
        %v3683 = vld [vmem:[%s324 + $0x318] sm:$0xff]
        %v3684 = vld [vmem:[%s324 + $0x320] sm:$0xff]
        %v3685 = vld [vmem:[%s324 + $0x328] sm:$0xff]
        %v3686 = vld [vmem:[%s324 + $0x330] sm:$0xff]
        %v3687 = vld [vmem:[%s324 + $0x338] sm:$0xff]
        %v3688 = vld [vmem:[%s324 + $0x340] sm:$0xff]
        %v3689 = vld [vmem:[%s324 + $0x348] sm:$0xff]
        %v3690 = vld [vmem:[%s324 + $0x350] sm:$0xff]
        %v3691 = vld [vmem:[%s324 + $0x358] sm:$0xff]
        %v3692 = vld [vmem:[%s324 + $0x360] sm:$0xff]
        %v3693 = vld [vmem:[%s324 + $0x368] sm:$0xff]
        %v3694 = vld [vmem:[%s324 + $0x370] sm:$0xff]
        %v3695 = vld [vmem:[%s324 + $0x378] sm:$0xff]
        %v3696 = vld [vmem:[%s324 + $0x380] sm:$0xff]
        %v3697 = vld [vmem:[%s324 + $0x388] sm:$0xff]
        %v3698 = vld [vmem:[%s324 + $0x390] sm:$0xff]
        %v3699 = vld [vmem:[%s324 + $0x398] sm:$0xff]
        %v3700 = vld [vmem:[%s324 + $0x3a0] sm:$0xff]
        %v3701 = vld [vmem:[%s324 + $0x3a8] sm:$0xff]
        %v3702 = vld [vmem:[%s324 + $0x3b0] sm:$0xff]
        %v3703 = vld [vmem:[%s324 + $0x3b8] sm:$0xff]
        %v3704 = vld [vmem:[%s324 + $0x3c0] sm:$0xff]
        %v3705 = vld [vmem:[%s324 + $0x3c8] sm:$0xff]
        %v3706 = vld [vmem:[%s324 + $0x3d0] sm:$0xff]
        %v3707 = vld [vmem:[%s324 + $0x3d8] sm:$0xff]
        %v3708 = vld [vmem:[%s324 + $0x3e0] sm:$0xff]
        %v3709 = vld [vmem:[%s324 + $0x3e8] sm:$0xff]
        %v3710 = vld [vmem:[%s324 + $0x3f0] sm:$0xff]
        %v3711 = vld [vmem:[%s324 + $0x3f8] sm:$0xff]
        %v3712 = vld [vmem:[%s324 + $0x400] sm:$0xff]
        %v3713 = vld [vmem:[%s324 + $0x408] sm:$0xff]
        %v3714 = vld [vmem:[%s324 + $0x410] sm:$0xff]
        %v3715 = vld [vmem:[%s324 + $0x418] sm:$0xff]
        %v3716 = vld [vmem:[%s324 + $0x420] sm:$0xff]
        %v3717 = vld [vmem:[%s324 + $0x428] sm:$0xff]
        %v3718 = vld [vmem:[%s324 + $0x430] sm:$0xff]
        %v3719 = vld [vmem:[%s324 + $0x438] sm:$0xff]
        %v3720 = vld [vmem:[%s324 + $0x440] sm:$0xff]
        %v3721 = vld [vmem:[%s324 + $0x448] sm:$0xff]
        %v3722 = vld [vmem:[%s324 + $0x450] sm:$0xff]
        %v3723 = vld [vmem:[%s324 + $0x458] sm:$0xff]
        %v3724 = vld [vmem:[%s324 + $0x460] sm:$0xff]
        %v3725 = vld [vmem:[%s324 + $0x468] sm:$0xff]
        %v3726 = vld [vmem:[%s324 + $0x470] sm:$0xff]
        %v3727 = vld [vmem:[%s324 + $0x478] sm:$0xff]
        %v3728 = vld [vmem:[%s324 + $0x480] sm:$0xff]
        %v3729 = vld [vmem:[%s324 + $0x488] sm:$0xff]
        %v3730 = vld [vmem:[%s324 + $0x490] sm:$0xff]
        %v3731 = vld [vmem:[%s324 + $0x498] sm:$0xff]
        %v3732 = vld [vmem:[%s324 + $0x4a0] sm:$0xff]
        %v3733 = vld [vmem:[%s324 + $0x4a8] sm:$0xff]
        %v3734 = vld [vmem:[%s324 + $0x4b0] sm:$0xff]
        %v3735 = vld [vmem:[%s324 + $0x4b8] sm:$0xff]
        %v3736 = vld [vmem:[%s324 + $0x4c0] sm:$0xff]
        %v3737 = vld [vmem:[%s324 + $0x4c8] sm:$0xff]
        %v3738 = vld [vmem:[%s324 + $0x4d0] sm:$0xff]
        %v3739 = vld [vmem:[%s324 + $0x4d8] sm:$0xff]
        %v3740 = vld [vmem:[%s324 + $0x4e0] sm:$0xff]
        %v3741 = vld [vmem:[%s324 + $0x4e8] sm:$0xff]
        %v3742 = vld [vmem:[%s324 + $0x4f0] sm:$0xff]
        %v3743 = vld [vmem:[%s324 + $0x4f8] sm:$0xff]
        %v3744 = vld [vmem:[%s324 + $0x500] sm:$0xff]
        %v3745 = vld [vmem:[%s324 + $0x508] sm:$0xff]
        %v3746 = vld [vmem:[%s324 + $0x510] sm:$0xff]
        %v3747 = vld [vmem:[%s324 + $0x518] sm:$0xff]
        %v3748 = vld [vmem:[%s324 + $0x520] sm:$0xff]
        %v3749 = vld [vmem:[%s324 + $0x528] sm:$0xff]
        %v3750 = vld [vmem:[%s324 + $0x530] sm:$0xff]
        %v3751 = vld [vmem:[%s324 + $0x538] sm:$0xff]
        %v3752 = vld [vmem:[%s324 + $0x540] sm:$0xff]
        %v3753 = vld [vmem:[%s324 + $0x548] sm:$0xff]
        %v3754 = vld [vmem:[%s324 + $0x550] sm:$0xff]
        %v3755 = vld [vmem:[%s324 + $0x558] sm:$0xff]
        %v3756 = vld [vmem:[%s324 + $0x560] sm:$0xff]
        %v3757 = vld [vmem:[%s324 + $0x568] sm:$0xff]
        %v3758 = vld [vmem:[%s324 + $0x570] sm:$0xff]
        %v3759 = vld [vmem:[%s324 + $0x578] sm:$0xff]
        %v3760 = vld [vmem:[%s324 + $0x580] sm:$0xff]
        %v3761 = vld [vmem:[%s324 + $0x588] sm:$0xff]
        %v3762 = vld [vmem:[%s324 + $0x590] sm:$0xff]
        %v3763 = vld [vmem:[%s324 + $0x598] sm:$0xff]
        %v3764 = vld [vmem:[%s324 + $0x5a0] sm:$0xff]
        %v3765 = vld [vmem:[%s324 + $0x5a8] sm:$0xff]
        %v3766 = vld [vmem:[%s324 + $0x5b0] sm:$0xff]
        %v3767 = vld [vmem:[%s324 + $0x5b8] sm:$0xff]
        %v3768 = vld [vmem:[%s324 + $0x5c0] sm:$0xff]
        %v3769 = vld [vmem:[%s324 + $0x5c8] sm:$0xff]
        %v3770 = vld [vmem:[%s324 + $0x5d0] sm:$0xff]
        %v3771 = vld [vmem:[%s324 + $0x5d8] sm:$0xff]
        %v3772 = vld [vmem:[%s324 + $0x5e0] sm:$0xff]
        %v3773 = vld [vmem:[%s324 + $0x5e8] sm:$0xff]
        %v3774 = vld [vmem:[%s324 + $0x5f0] sm:$0xff]
        %v3775 = vld [vmem:[%s324 + $0x5f8] sm:$0xff]
        %v3776 = vld [vmem:[%s324 + $0x600] sm:$0xff]
        %v3777 = vld [vmem:[%s324 + $0x608] sm:$0xff]
        %v3778 = vld [vmem:[%s324 + $0x610] sm:$0xff]
        %v3779 = vld [vmem:[%s324 + $0x618] sm:$0xff]
        %v3780 = vld [vmem:[%s324 + $0x620] sm:$0xff]
        %v3781 = vld [vmem:[%s324 + $0x628] sm:$0xff]
        %v3782 = vld [vmem:[%s324 + $0x630] sm:$0xff]
        %v3783 = vld [vmem:[%s324 + $0x638] sm:$0xff]
        %v3784 = vld [vmem:[%s324 + $0x640] sm:$0xff]
        %v3785 = vld [vmem:[%s324 + $0x648] sm:$0xff]
        %v3786 = vld [vmem:[%s324 + $0x650] sm:$0xff]
        %v3787 = vld [vmem:[%s324 + $0x658] sm:$0xff]
        %v3788 = vld [vmem:[%s324 + $0x660] sm:$0xff]
        %v3789 = vld [vmem:[%s324 + $0x668] sm:$0xff]
        %v3790 = vld [vmem:[%s324 + $0x670] sm:$0xff]
        %v3791 = vld [vmem:[%s324 + $0x678] sm:$0xff]
        %v3792 = vld [vmem:[%s324 + $0x680] sm:$0xff]
        %v3793 = vld [vmem:[%s324 + $0x688] sm:$0xff]
        %v3794 = vld [vmem:[%s324 + $0x690] sm:$0xff]
        %v3795 = vld [vmem:[%s324 + $0x698] sm:$0xff]
        %v3796 = vld [vmem:[%s324 + $0x6a0] sm:$0xff]
        %v3797 = vld [vmem:[%s324 + $0x6a8] sm:$0xff]
        %v3798 = vld [vmem:[%s324 + $0x6b0] sm:$0xff]
        %v3799 = vld [vmem:[%s324 + $0x6b8] sm:$0xff]
        %v3800 = vld [vmem:[%s324 + $0x6c0] sm:$0xff]
        %v3801 = vld [vmem:[%s324 + $0x6c8] sm:$0xff]
        %v3802 = vld [vmem:[%s324 + $0x6d0] sm:$0xff]
        %v3803 = vld [vmem:[%s324 + $0x6d8] sm:$0xff]
        %v3804 = vld [vmem:[%s324 + $0x6e0] sm:$0xff]
        %v3805 = vld [vmem:[%s324 + $0x6e8] sm:$0xff]
        %v3806 = vld [vmem:[%s324 + $0x6f0] sm:$0xff]
        %v3807 = vld [vmem:[%s324 + $0x6f8] sm:$0xff]
        %v3808 = vld [vmem:[%s324 + $0x700] sm:$0xff]
        %v3809 = vld [vmem:[%s324 + $0x708] sm:$0xff]
        %v3810 = vld [vmem:[%s324 + $0x710] sm:$0xff]
        %v3811 = vld [vmem:[%s324 + $0x718] sm:$0xff]
        %v3812 = vld [vmem:[%s324 + $0x720] sm:$0xff]
        %v3813 = vld [vmem:[%s324 + $0x728] sm:$0xff]
        %v3814 = vld [vmem:[%s324 + $0x730] sm:$0xff]
        %v3815 = vld [vmem:[%s324 + $0x738] sm:$0xff]
        %v3816 = vld [vmem:[%s324 + $0x740] sm:$0xff]
        %v3817 = vld [vmem:[%s324 + $0x748] sm:$0xff]
        %v3818 = vld [vmem:[%s324 + $0x750] sm:$0xff]
        %v3819 = vld [vmem:[%s324 + $0x758] sm:$0xff]
        %v3820 = vld [vmem:[%s324 + $0x760] sm:$0xff]
        %v3821 = vld [vmem:[%s324 + $0x768] sm:$0xff]
        %v3822 = vld [vmem:[%s324 + $0x770] sm:$0xff]
        %v3823 = vld [vmem:[%s324 + $0x778] sm:$0xff]
        %v3824 = vld [vmem:[%s324 + $0x780] sm:$0xff]
        %v3825 = vld [vmem:[%s324 + $0x788] sm:$0xff]
        %v3826 = vld [vmem:[%s324 + $0x790] sm:$0xff]
        %v3827 = vld [vmem:[%s324 + $0x798] sm:$0xff]
        %v3828 = vld [vmem:[%s324 + $0x7a0] sm:$0xff]
        %v3829 = vld [vmem:[%s324 + $0x7a8] sm:$0xff]
        %v3830 = vld [vmem:[%s324 + $0x7b0] sm:$0xff]
        %v3831 = vld [vmem:[%s324 + $0x7b8] sm:$0xff]
        %v3832 = vld [vmem:[%s324 + $0x7c0] sm:$0xff]
        %v3833 = vld [vmem:[%s324 + $0x7c8] sm:$0xff]
        %v3834 = vld [vmem:[%s324 + $0x7d0] sm:$0xff]
        %v3835 = vld [vmem:[%s324 + $0x7d8] sm:$0xff]
        %v3836 = vld [vmem:[%s324 + $0x7e0] sm:$0xff]
        %v3837 = vld [vmem:[%s324 + $0x7e8] sm:$0xff]
        %v3838 = vld [vmem:[%s324 + $0x7f0] sm:$0xff]
        %v3839 = vld [vmem:[%s324 + $0x7f8] sm:$0xff]
        %v3840 = vld [vmem:[%s324 + $0x800] sm:$0xff]
        %v3841 = vld [vmem:[%s324 + $0x808] sm:$0xff]
        %v3842 = vld [vmem:[%s324 + $0x810] sm:$0xff]
        %v3843 = vld [vmem:[%s324 + $0x818] sm:$0xff]
        %v3844 = vld [vmem:[%s324 + $0x820] sm:$0xff]
        %v3845 = vld [vmem:[%s324 + $0x828] sm:$0xff]
        %v3846 = vld [vmem:[%s324 + $0x830] sm:$0xff]
        %v3847 = vld [vmem:[%s324 + $0x838] sm:$0xff]
        %v3848 = vld [vmem:[%s324 + $0x840] sm:$0xff]
        %v3849 = vld [vmem:[%s324 + $0x848] sm:$0xff]
        %v3850 = vld [vmem:[%s324 + $0x850] sm:$0xff]
        %v3851 = vld [vmem:[%s324 + $0x858] sm:$0xff]
        %v3852 = vld [vmem:[%s324 + $0x860] sm:$0xff]
        %v3853 = vld [vmem:[%s324 + $0x868] sm:$0xff]
        %v3854 = vld [vmem:[%s324 + $0x870] sm:$0xff]
        %v3855 = vld [vmem:[%s324 + $0x878] sm:$0xff]
        %v3856 = vld [vmem:[%s324 + $0x880] sm:$0xff]
        %v3857 = vld [vmem:[%s324 + $0x888] sm:$0xff]
        %v3858 = vld [vmem:[%s324 + $0x890] sm:$0xff]
        %v3859 = vld [vmem:[%s324 + $0x898] sm:$0xff]
        %v3860 = vld [vmem:[%s324 + $0x8a0] sm:$0xff]
        %v3861 = vld [vmem:[%s324 + $0x8a8] sm:$0xff]
        %v3862 = vld [vmem:[%s324 + $0x8b0] sm:$0xff]
        %v3863 = vld [vmem:[%s324 + $0x8b8] sm:$0xff]
        %v3864 = vld [vmem:[%s324 + $0x8c0] sm:$0xff]
        %v3865 = vld [vmem:[%s324 + $0x8c8] sm:$0xff]
        %v3866 = vld [vmem:[%s324 + $0x8d0] sm:$0xff]
        %v3867 = vld [vmem:[%s324 + $0x8d8] sm:$0xff]
        %v3868 = vld [vmem:[%s324 + $0x8e0] sm:$0xff]
        %v3869 = vld [vmem:[%s324 + $0x8e8] sm:$0xff]
        %v3870 = vld [vmem:[%s324 + $0x8f0] sm:$0xff]
        %v3871 = vld [vmem:[%s324 + $0x8f8] sm:$0xff]
        %v4160 = vunpack.c.l.b16 %v3584
        %v4161 = vunpack.c.h.b16 %v3584
        %v4162 = vunpack.c.l.b16 %v3585
        %v4163 = vunpack.c.h.b16 %v3585
        %v4164 = vunpack.c.l.b16 %v3586
        %v4165 = vunpack.c.h.b16 %v3586
        %v4166 = vunpack.c.l.b16 %v3587
        %v4167 = vunpack.c.h.b16 %v3587
        %v4168 = vunpack.c.l.b16 %v3588
        %v4169 = vunpack.c.h.b16 %v3588
        %v4170 = vunpack.c.l.b16 %v3589
        %v4171 = vunpack.c.h.b16 %v3589
        %v4172 = vunpack.c.l.b16 %v3590
        %v4173 = vunpack.c.h.b16 %v3590
        %v4174 = vunpack.c.l.b16 %v3591
        %v4175 = vunpack.c.h.b16 %v3591
        %v4176 = vunpack.c.l.b16 %v3592
        %v4177 = vunpack.c.h.b16 %v3592
        %v4178 = vunpack.c.l.b16 %v3593
        %v4179 = vunpack.c.h.b16 %v3593
        %v4180 = vunpack.c.l.b16 %v3594
        %v4181 = vunpack.c.h.b16 %v3594
        %v4182 = vunpack.c.l.b16 %v3595
        %v4183 = vunpack.c.h.b16 %v3595
        %v4184 = vunpack.c.l.b16 %v3596
        %v4185 = vunpack.c.h.b16 %v3596
        %v4186 = vunpack.c.l.b16 %v3597
        %v4187 = vunpack.c.h.b16 %v3597
        %v4188 = vunpack.c.l.b16 %v3598
        %v4189 = vunpack.c.h.b16 %v3598
        %v4190 = vunpack.c.l.b16 %v3599
        %v4191 = vunpack.c.h.b16 %v3599
        %v4192 = vunpack.c.l.b16 %v3600
        %v4193 = vunpack.c.h.b16 %v3600
        %v4194 = vunpack.c.l.b16 %v3601
        %v4195 = vunpack.c.h.b16 %v3601
        %v4196 = vunpack.c.l.b16 %v3602
        %v4197 = vunpack.c.h.b16 %v3602
        %v4198 = vunpack.c.l.b16 %v3603
        %v4199 = vunpack.c.h.b16 %v3603
        %v4200 = vunpack.c.l.b16 %v3604
        %v4201 = vunpack.c.h.b16 %v3604
        %v4202 = vunpack.c.l.b16 %v3605
        %v4203 = vunpack.c.h.b16 %v3605
        %v4204 = vunpack.c.l.b16 %v3606
        %v4205 = vunpack.c.h.b16 %v3606
        %v4206 = vunpack.c.l.b16 %v3607
        %v4207 = vunpack.c.h.b16 %v3607
        %v4208 = vunpack.c.l.b16 %v3608
        %v4209 = vunpack.c.h.b16 %v3608
        %v4210 = vunpack.c.l.b16 %v3609
        %v4211 = vunpack.c.h.b16 %v3609
        %v4212 = vunpack.c.l.b16 %v3610
        %v4213 = vunpack.c.h.b16 %v3610
        %v4214 = vunpack.c.l.b16 %v3611
        %v4215 = vunpack.c.h.b16 %v3611
        %v4216 = vunpack.c.l.b16 %v3612
        %v4217 = vunpack.c.h.b16 %v3612
        %v4218 = vunpack.c.l.b16 %v3613
        %v4219 = vunpack.c.h.b16 %v3613
        %v4220 = vunpack.c.l.b16 %v3614
        %v4221 = vunpack.c.h.b16 %v3614
        %v4222 = vunpack.c.l.b16 %v3615
        %v4223 = vunpack.c.h.b16 %v3615
        %v4224 = vunpack.c.l.b16 %v3616
        %v4225 = vunpack.c.h.b16 %v3616
        %v4226 = vunpack.c.l.b16 %v3617
        %v4227 = vunpack.c.h.b16 %v3617
        %v4228 = vunpack.c.l.b16 %v3618
        %v4229 = vunpack.c.h.b16 %v3618
        %v4230 = vunpack.c.l.b16 %v3619
        %v4231 = vunpack.c.h.b16 %v3619
        %v4232 = vunpack.c.l.b16 %v3620
        %v4233 = vunpack.c.h.b16 %v3620
        %v4234 = vunpack.c.l.b16 %v3621
        %v4235 = vunpack.c.h.b16 %v3621
        %v4236 = vunpack.c.l.b16 %v3622
        %v4237 = vunpack.c.h.b16 %v3622
        %v4238 = vunpack.c.l.b16 %v3623
        %v4239 = vunpack.c.h.b16 %v3623
        %v4240 = vunpack.c.l.b16 %v3624
        %v4241 = vunpack.c.h.b16 %v3624
        %v4242 = vunpack.c.l.b16 %v3625
        %v4243 = vunpack.c.h.b16 %v3625
        %v4244 = vunpack.c.l.b16 %v3626
        %v4245 = vunpack.c.h.b16 %v3626
        %v4246 = vunpack.c.l.b16 %v3627
        %v4247 = vunpack.c.h.b16 %v3627
        %v4248 = vunpack.c.l.b16 %v3628
        %v4249 = vunpack.c.h.b16 %v3628
        %v4250 = vunpack.c.l.b16 %v3629
        %v4251 = vunpack.c.h.b16 %v3629
        %v4252 = vunpack.c.l.b16 %v3630
        %v4253 = vunpack.c.h.b16 %v3630
        %v4254 = vunpack.c.l.b16 %v3631
        %v4255 = vunpack.c.h.b16 %v3631
        %v4256 = vunpack.c.l.b16 %v3632
        %v4257 = vunpack.c.h.b16 %v3632
        %v4258 = vunpack.c.l.b16 %v3633
        %v4259 = vunpack.c.h.b16 %v3633
        %v4260 = vunpack.c.l.b16 %v3634
        %v4261 = vunpack.c.h.b16 %v3634
        %v4262 = vunpack.c.l.b16 %v3635
        %v4263 = vunpack.c.h.b16 %v3635
        %v4264 = vunpack.c.l.b16 %v3636
        %v4265 = vunpack.c.h.b16 %v3636
        %v4266 = vunpack.c.l.b16 %v3637
        %v4267 = vunpack.c.h.b16 %v3637
        %v4268 = vunpack.c.l.b16 %v3638
        %v4269 = vunpack.c.h.b16 %v3638
        %v4270 = vunpack.c.l.b16 %v3639
        %v4271 = vunpack.c.h.b16 %v3639
        %v4272 = vunpack.c.l.b16 %v3640
        %v4273 = vunpack.c.h.b16 %v3640
        %v4274 = vunpack.c.l.b16 %v3641
        %v4275 = vunpack.c.h.b16 %v3641
        %v4276 = vunpack.c.l.b16 %v3642
        %v4277 = vunpack.c.h.b16 %v3642
        %v4278 = vunpack.c.l.b16 %v3643
        %v4279 = vunpack.c.h.b16 %v3643
        %v4280 = vunpack.c.l.b16 %v3644
        %v4281 = vunpack.c.h.b16 %v3644
        %v4282 = vunpack.c.l.b16 %v3645
        %v4283 = vunpack.c.h.b16 %v3645
        %v4284 = vunpack.c.l.b16 %v3646
        %v4285 = vunpack.c.h.b16 %v3646
        %v4286 = vunpack.c.l.b16 %v3647
        %v4287 = vunpack.c.h.b16 %v3647
        %v4288 = vunpack.c.l.b16 %v3648
        %v4289 = vunpack.c.h.b16 %v3648
        %v4290 = vunpack.c.l.b16 %v3649
        %v4291 = vunpack.c.h.b16 %v3649
        %v4292 = vunpack.c.l.b16 %v3650
        %v4293 = vunpack.c.h.b16 %v3650
        %v4294 = vunpack.c.l.b16 %v3651
        %v4295 = vunpack.c.h.b16 %v3651
        %v4296 = vunpack.c.l.b16 %v3652
        %v4297 = vunpack.c.h.b16 %v3652
        %v4298 = vunpack.c.l.b16 %v3653
        %v4299 = vunpack.c.h.b16 %v3653
        %v4300 = vunpack.c.l.b16 %v3654
        %v4301 = vunpack.c.h.b16 %v3654
        %v4302 = vunpack.c.l.b16 %v3655
        %v4303 = vunpack.c.h.b16 %v3655
        %v4304 = vunpack.c.l.b16 %v3656
        %v4305 = vunpack.c.h.b16 %v3656
        %v4306 = vunpack.c.l.b16 %v3657
        %v4307 = vunpack.c.h.b16 %v3657
        %v4308 = vunpack.c.l.b16 %v3658
        %v4309 = vunpack.c.h.b16 %v3658
        %v4310 = vunpack.c.l.b16 %v3659
        %v4311 = vunpack.c.h.b16 %v3659
        %v4312 = vunpack.c.l.b16 %v3660
        %v4313 = vunpack.c.h.b16 %v3660
        %v4314 = vunpack.c.l.b16 %v3661
        %v4315 = vunpack.c.h.b16 %v3661
        %v4316 = vunpack.c.l.b16 %v3662
        %v4317 = vunpack.c.h.b16 %v3662
        %v4318 = vunpack.c.l.b16 %v3663
        %v4319 = vunpack.c.h.b16 %v3663
        %v4320 = vunpack.c.l.b16 %v3664
        %v4321 = vunpack.c.h.b16 %v3664
        %v4322 = vunpack.c.l.b16 %v3665
        %v4323 = vunpack.c.h.b16 %v3665
        %v4324 = vunpack.c.l.b16 %v3666
        %v4325 = vunpack.c.h.b16 %v3666
        %v4326 = vunpack.c.l.b16 %v3667
        %v4327 = vunpack.c.h.b16 %v3667
        %v4328 = vunpack.c.l.b16 %v3668
        %v4329 = vunpack.c.h.b16 %v3668
        %v4330 = vunpack.c.l.b16 %v3669
        %v4331 = vunpack.c.h.b16 %v3669
        %v4332 = vunpack.c.l.b16 %v3670
        %v4333 = vunpack.c.h.b16 %v3670
        %v4334 = vunpack.c.l.b16 %v3671
        %v4335 = vunpack.c.h.b16 %v3671
        %v4336 = vunpack.c.l.b16 %v3672
        %v4337 = vunpack.c.h.b16 %v3672
        %v4338 = vunpack.c.l.b16 %v3673
        %v4339 = vunpack.c.h.b16 %v3673
        %v4340 = vunpack.c.l.b16 %v3674
        %v4341 = vunpack.c.h.b16 %v3674
        %v4342 = vunpack.c.l.b16 %v3675
        %v4343 = vunpack.c.h.b16 %v3675
        %v4344 = vunpack.c.l.b16 %v3676
        %v4345 = vunpack.c.h.b16 %v3676
        %v4346 = vunpack.c.l.b16 %v3677
        %v4347 = vunpack.c.h.b16 %v3677
        %v4348 = vunpack.c.l.b16 %v3678
        %v4349 = vunpack.c.h.b16 %v3678
        %v4350 = vunpack.c.l.b16 %v3679
        %v4351 = vunpack.c.h.b16 %v3679
        %v4352 = vunpack.c.l.b16 %v3680
        %v4353 = vunpack.c.h.b16 %v3680
        %v4354 = vunpack.c.l.b16 %v3681
        %v4355 = vunpack.c.h.b16 %v3681
        %v4356 = vunpack.c.l.b16 %v3682
        %v4357 = vunpack.c.h.b16 %v3682
        %v4358 = vunpack.c.l.b16 %v3683
        %v4359 = vunpack.c.h.b16 %v3683
        %v4360 = vunpack.c.l.b16 %v3684
        %v4361 = vunpack.c.h.b16 %v3684
        %v4362 = vunpack.c.l.b16 %v3685
        %v4363 = vunpack.c.h.b16 %v3685
        %v4364 = vunpack.c.l.b16 %v3686
        %v4365 = vunpack.c.h.b16 %v3686
        %v4366 = vunpack.c.l.b16 %v3687
        %v4367 = vunpack.c.h.b16 %v3687
        %v4368 = vunpack.c.l.b16 %v3688
        %v4369 = vunpack.c.h.b16 %v3688
        %v4370 = vunpack.c.l.b16 %v3689
        %v4371 = vunpack.c.h.b16 %v3689
        %v4372 = vunpack.c.l.b16 %v3690
        %v4373 = vunpack.c.h.b16 %v3690
        %v4374 = vunpack.c.l.b16 %v3691
        %v4375 = vunpack.c.h.b16 %v3691
        %v4376 = vunpack.c.l.b16 %v3692
        %v4377 = vunpack.c.h.b16 %v3692
        %v4378 = vunpack.c.l.b16 %v3693
        %v4379 = vunpack.c.h.b16 %v3693
        %v4380 = vunpack.c.l.b16 %v3694
        %v4381 = vunpack.c.h.b16 %v3694
        %v4382 = vunpack.c.l.b16 %v3695
        %v4383 = vunpack.c.h.b16 %v3695
        %v4384 = vunpack.c.l.b16 %v3696
        %v4385 = vunpack.c.h.b16 %v3696
        %v4386 = vunpack.c.l.b16 %v3697
        %v4387 = vunpack.c.h.b16 %v3697
        %v4388 = vunpack.c.l.b16 %v3698
        %v4389 = vunpack.c.h.b16 %v3698
        %v4390 = vunpack.c.l.b16 %v3699
        %v4391 = vunpack.c.h.b16 %v3699
        %v4392 = vunpack.c.l.b16 %v3700
        %v4393 = vunpack.c.h.b16 %v3700
        %v4394 = vunpack.c.l.b16 %v3701
        %v4395 = vunpack.c.h.b16 %v3701
        %v4396 = vunpack.c.l.b16 %v3702
        %v4397 = vunpack.c.h.b16 %v3702
        %v4398 = vunpack.c.l.b16 %v3703
        %v4399 = vunpack.c.h.b16 %v3703
        %v4400 = vunpack.c.l.b16 %v3704
        %v4401 = vunpack.c.h.b16 %v3704
        %v4402 = vunpack.c.l.b16 %v3705
        %v4403 = vunpack.c.h.b16 %v3705
        %v4404 = vunpack.c.l.b16 %v3706
        %v4405 = vunpack.c.h.b16 %v3706
        %v4406 = vunpack.c.l.b16 %v3707
        %v4407 = vunpack.c.h.b16 %v3707
        %v4408 = vunpack.c.l.b16 %v3708
        %v4409 = vunpack.c.h.b16 %v3708
        %v4410 = vunpack.c.l.b16 %v3709
        %v4411 = vunpack.c.h.b16 %v3709
        %v4412 = vunpack.c.l.b16 %v3710
        %v4413 = vunpack.c.h.b16 %v3710
        %v4414 = vunpack.c.l.b16 %v3711
        %v4415 = vunpack.c.h.b16 %v3711
        %v4416 = vunpack.c.l.b16 %v3712
        %v4417 = vunpack.c.h.b16 %v3712
        %v4418 = vunpack.c.l.b16 %v3713
        %v4419 = vunpack.c.h.b16 %v3713
        %v4420 = vunpack.c.l.b16 %v3714
        %v4421 = vunpack.c.h.b16 %v3714
        %v4422 = vunpack.c.l.b16 %v3715
        %v4423 = vunpack.c.h.b16 %v3715
        %v4424 = vunpack.c.l.b16 %v3716
        %v4425 = vunpack.c.h.b16 %v3716
        %v4426 = vunpack.c.l.b16 %v3717
        %v4427 = vunpack.c.h.b16 %v3717
        %v4428 = vunpack.c.l.b16 %v3718
        %v4429 = vunpack.c.h.b16 %v3718
        %v4430 = vunpack.c.l.b16 %v3719
        %v4431 = vunpack.c.h.b16 %v3719
        %v4432 = vunpack.c.l.b16 %v3720
        %v4433 = vunpack.c.h.b16 %v3720
        %v4434 = vunpack.c.l.b16 %v3721
        %v4435 = vunpack.c.h.b16 %v3721
        %v4436 = vunpack.c.l.b16 %v3722
        %v4437 = vunpack.c.h.b16 %v3722
        %v4438 = vunpack.c.l.b16 %v3723
        %v4439 = vunpack.c.h.b16 %v3723
        %v4440 = vunpack.c.l.b16 %v3724
        %v4441 = vunpack.c.h.b16 %v3724
        %v4442 = vunpack.c.l.b16 %v3725
        %v4443 = vunpack.c.h.b16 %v3725
        %v4444 = vunpack.c.l.b16 %v3726
        %v4445 = vunpack.c.h.b16 %v3726
        %v4446 = vunpack.c.l.b16 %v3727
        %v4447 = vunpack.c.h.b16 %v3727
        %v4448 = vunpack.c.l.b16 %v3728
        %v4449 = vunpack.c.h.b16 %v3728
        %v4450 = vunpack.c.l.b16 %v3729
        %v4451 = vunpack.c.h.b16 %v3729
        %v4452 = vunpack.c.l.b16 %v3730
        %v4453 = vunpack.c.h.b16 %v3730
        %v4454 = vunpack.c.l.b16 %v3731
        %v4455 = vunpack.c.h.b16 %v3731
        %v4456 = vunpack.c.l.b16 %v3732
        %v4457 = vunpack.c.h.b16 %v3732
        %v4458 = vunpack.c.l.b16 %v3733
        %v4459 = vunpack.c.h.b16 %v3733
        %v4460 = vunpack.c.l.b16 %v3734
        %v4461 = vunpack.c.h.b16 %v3734
        %v4462 = vunpack.c.l.b16 %v3735
        %v4463 = vunpack.c.h.b16 %v3735
        %v4464 = vunpack.c.l.b16 %v3736
        %v4465 = vunpack.c.h.b16 %v3736
        %v4466 = vunpack.c.l.b16 %v3737
        %v4467 = vunpack.c.h.b16 %v3737
        %v4468 = vunpack.c.l.b16 %v3738
        %v4469 = vunpack.c.h.b16 %v3738
        %v4470 = vunpack.c.l.b16 %v3739
        %v4471 = vunpack.c.h.b16 %v3739
        %v4472 = vunpack.c.l.b16 %v3740
        %v4473 = vunpack.c.h.b16 %v3740
        %v4474 = vunpack.c.l.b16 %v3741
        %v4475 = vunpack.c.h.b16 %v3741
        %v4476 = vunpack.c.l.b16 %v3742
        %v4477 = vunpack.c.h.b16 %v3742
        %v4478 = vunpack.c.l.b16 %v3743
        %v4479 = vunpack.c.h.b16 %v3743
        %v4480 = vunpack.c.l.b16 %v3744
        %v4481 = vunpack.c.h.b16 %v3744
        %v4482 = vunpack.c.l.b16 %v3745
        %v4483 = vunpack.c.h.b16 %v3745
        %v4484 = vunpack.c.l.b16 %v3746
        %v4485 = vunpack.c.h.b16 %v3746
        %v4486 = vunpack.c.l.b16 %v3747
        %v4487 = vunpack.c.h.b16 %v3747
        %v4488 = vunpack.c.l.b16 %v3748
        %v4489 = vunpack.c.h.b16 %v3748
        %v4490 = vunpack.c.l.b16 %v3749
        %v4491 = vunpack.c.h.b16 %v3749
        %v4492 = vunpack.c.l.b16 %v3750
        %v4493 = vunpack.c.h.b16 %v3750
        %v4494 = vunpack.c.l.b16 %v3751
        %v4495 = vunpack.c.h.b16 %v3751
        %v4496 = vunpack.c.l.b16 %v3752
        %v4497 = vunpack.c.h.b16 %v3752
        %v4498 = vunpack.c.l.b16 %v3753
        %v4499 = vunpack.c.h.b16 %v3753
        %v4500 = vunpack.c.l.b16 %v3754
        %v4501 = vunpack.c.h.b16 %v3754
        %v4502 = vunpack.c.l.b16 %v3755
        %v4503 = vunpack.c.h.b16 %v3755
        %v4504 = vunpack.c.l.b16 %v3756
        %v4505 = vunpack.c.h.b16 %v3756
        %v4506 = vunpack.c.l.b16 %v3757
        %v4507 = vunpack.c.h.b16 %v3757
        %v4508 = vunpack.c.l.b16 %v3758
        %v4509 = vunpack.c.h.b16 %v3758
        %v4510 = vunpack.c.l.b16 %v3759
        %v4511 = vunpack.c.h.b16 %v3759
        %v4512 = vunpack.c.l.b16 %v3760
        %v4513 = vunpack.c.h.b16 %v3760
        %v4514 = vunpack.c.l.b16 %v3761
        %v4515 = vunpack.c.h.b16 %v3761
        %v4516 = vunpack.c.l.b16 %v3762
        %v4517 = vunpack.c.h.b16 %v3762
        %v4518 = vunpack.c.l.b16 %v3763
        %v4519 = vunpack.c.h.b16 %v3763
        %v4520 = vunpack.c.l.b16 %v3764
        %v4521 = vunpack.c.h.b16 %v3764
        %v4522 = vunpack.c.l.b16 %v3765
        %v4523 = vunpack.c.h.b16 %v3765
        %v4524 = vunpack.c.l.b16 %v3766
        %v4525 = vunpack.c.h.b16 %v3766
        %v4526 = vunpack.c.l.b16 %v3767
        %v4527 = vunpack.c.h.b16 %v3767
        %v4528 = vunpack.c.l.b16 %v3768
        %v4529 = vunpack.c.h.b16 %v3768
        %v4530 = vunpack.c.l.b16 %v3769
        %v4531 = vunpack.c.h.b16 %v3769
        %v4532 = vunpack.c.l.b16 %v3770
        %v4533 = vunpack.c.h.b16 %v3770
        %v4534 = vunpack.c.l.b16 %v3771
        %v4535 = vunpack.c.h.b16 %v3771
        %v4536 = vunpack.c.l.b16 %v3772
        %v4537 = vunpack.c.h.b16 %v3772
        %v4538 = vunpack.c.l.b16 %v3773
        %v4539 = vunpack.c.h.b16 %v3773
        %v4540 = vunpack.c.l.b16 %v3774
        %v4541 = vunpack.c.h.b16 %v3774
        %v4542 = vunpack.c.l.b16 %v3775
        %v4543 = vunpack.c.h.b16 %v3775
        %v4544 = vunpack.c.l.b16 %v3776
        %v4545 = vunpack.c.h.b16 %v3776
        %v4546 = vunpack.c.l.b16 %v3777
        %v4547 = vunpack.c.h.b16 %v3777
        %v4548 = vunpack.c.l.b16 %v3778
        %v4549 = vunpack.c.h.b16 %v3778
        %v4550 = vunpack.c.l.b16 %v3779
        %v4551 = vunpack.c.h.b16 %v3779
        %v4552 = vunpack.c.l.b16 %v3780
        %v4553 = vunpack.c.h.b16 %v3780
        %v4554 = vunpack.c.l.b16 %v3781
        %v4555 = vunpack.c.h.b16 %v3781
        %v4556 = vunpack.c.l.b16 %v3782
        %v4557 = vunpack.c.h.b16 %v3782
        %v4558 = vunpack.c.l.b16 %v3783
        %v4559 = vunpack.c.h.b16 %v3783
        %v4560 = vunpack.c.l.b16 %v3784
        %v4561 = vunpack.c.h.b16 %v3784
        %v4562 = vunpack.c.l.b16 %v3785
        %v4563 = vunpack.c.h.b16 %v3785
        %v4564 = vunpack.c.l.b16 %v3786
        %v4565 = vunpack.c.h.b16 %v3786
        %v4566 = vunpack.c.l.b16 %v3787
        %v4567 = vunpack.c.h.b16 %v3787
        %v4568 = vunpack.c.l.b16 %v3788
        %v4569 = vunpack.c.h.b16 %v3788
        %v4570 = vunpack.c.l.b16 %v3789
        %v4571 = vunpack.c.h.b16 %v3789
        %v4572 = vunpack.c.l.b16 %v3790
        %v4573 = vunpack.c.h.b16 %v3790
        %v4574 = vunpack.c.l.b16 %v3791
        %v4575 = vunpack.c.h.b16 %v3791
        %v4576 = vunpack.c.l.b16 %v3792
        %v4577 = vunpack.c.h.b16 %v3792
        %v4578 = vunpack.c.l.b16 %v3793
        %v4579 = vunpack.c.h.b16 %v3793
        %v4580 = vunpack.c.l.b16 %v3794
        %v4581 = vunpack.c.h.b16 %v3794
        %v4582 = vunpack.c.l.b16 %v3795
        %v4583 = vunpack.c.h.b16 %v3795
        %v4584 = vunpack.c.l.b16 %v3796
        %v4585 = vunpack.c.h.b16 %v3796
        %v4586 = vunpack.c.l.b16 %v3797
        %v4587 = vunpack.c.h.b16 %v3797
        %v4588 = vunpack.c.l.b16 %v3798
        %v4589 = vunpack.c.h.b16 %v3798
        %v4590 = vunpack.c.l.b16 %v3799
        %v4591 = vunpack.c.h.b16 %v3799
        %v4592 = vunpack.c.l.b16 %v3800
        %v4593 = vunpack.c.h.b16 %v3800
        %v4594 = vunpack.c.l.b16 %v3801
        %v4595 = vunpack.c.h.b16 %v3801
        %v4596 = vunpack.c.l.b16 %v3802
        %v4597 = vunpack.c.h.b16 %v3802
        %v4598 = vunpack.c.l.b16 %v3803
        %v4599 = vunpack.c.h.b16 %v3803
        %v4600 = vunpack.c.l.b16 %v3804
        %v4601 = vunpack.c.h.b16 %v3804
        %v4602 = vunpack.c.l.b16 %v3805
        %v4603 = vunpack.c.h.b16 %v3805
        %v4604 = vunpack.c.l.b16 %v3806
        %v4605 = vunpack.c.h.b16 %v3806
        %v4606 = vunpack.c.l.b16 %v3807
        %v4607 = vunpack.c.h.b16 %v3807
        %v4608 = vunpack.c.l.b16 %v3808
        %v4609 = vunpack.c.h.b16 %v3808
        %v4610 = vunpack.c.l.b16 %v3809
        %v4611 = vunpack.c.h.b16 %v3809
        %v4612 = vunpack.c.l.b16 %v3810
        %v4613 = vunpack.c.h.b16 %v3810
        %v4614 = vunpack.c.l.b16 %v3811
        %v4615 = vunpack.c.h.b16 %v3811
        %v4616 = vunpack.c.l.b16 %v3812
        %v4617 = vunpack.c.h.b16 %v3812
        %v4618 = vunpack.c.l.b16 %v3813
        %v4619 = vunpack.c.h.b16 %v3813
        %v4620 = vunpack.c.l.b16 %v3814
        %v4621 = vunpack.c.h.b16 %v3814
        %v4622 = vunpack.c.l.b16 %v3815
        %v4623 = vunpack.c.h.b16 %v3815
        %v4624 = vunpack.c.l.b16 %v3816
        %v4625 = vunpack.c.h.b16 %v3816
        %v4626 = vunpack.c.l.b16 %v3817
        %v4627 = vunpack.c.h.b16 %v3817
        %v4628 = vunpack.c.l.b16 %v3818
        %v4629 = vunpack.c.h.b16 %v3818
        %v4630 = vunpack.c.l.b16 %v3819
        %v4631 = vunpack.c.h.b16 %v3819
        %v4632 = vunpack.c.l.b16 %v3820
        %v4633 = vunpack.c.h.b16 %v3820
        %v4634 = vunpack.c.l.b16 %v3821
        %v4635 = vunpack.c.h.b16 %v3821
        %v4636 = vunpack.c.l.b16 %v3822
        %v4637 = vunpack.c.h.b16 %v3822
        %v4638 = vunpack.c.l.b16 %v3823
        %v4639 = vunpack.c.h.b16 %v3823
        %v4640 = vunpack.c.l.b16 %v3824
        %v4641 = vunpack.c.h.b16 %v3824
        %v4642 = vunpack.c.l.b16 %v3825
        %v4643 = vunpack.c.h.b16 %v3825
        %v4644 = vunpack.c.l.b16 %v3826
        %v4645 = vunpack.c.h.b16 %v3826
        %v4646 = vunpack.c.l.b16 %v3827
        %v4647 = vunpack.c.h.b16 %v3827
        %v4648 = vunpack.c.l.b16 %v3828
        %v4649 = vunpack.c.h.b16 %v3828
        %v4650 = vunpack.c.l.b16 %v3829
        %v4651 = vunpack.c.h.b16 %v3829
        %v4652 = vunpack.c.l.b16 %v3830
        %v4653 = vunpack.c.h.b16 %v3830
        %v4654 = vunpack.c.l.b16 %v3831
        %v4655 = vunpack.c.h.b16 %v3831
        %v4656 = vunpack.c.l.b16 %v3832
        %v4657 = vunpack.c.h.b16 %v3832
        %v4658 = vunpack.c.l.b16 %v3833
        %v4659 = vunpack.c.h.b16 %v3833
        %v4660 = vunpack.c.l.b16 %v3834
        %v4661 = vunpack.c.h.b16 %v3834
        %v4662 = vunpack.c.l.b16 %v3835
        %v4663 = vunpack.c.h.b16 %v3835
        %v4664 = vunpack.c.l.b16 %v3836
        %v4665 = vunpack.c.h.b16 %v3836
        %v4666 = vunpack.c.l.b16 %v3837
        %v4667 = vunpack.c.h.b16 %v3837
        %v4668 = vunpack.c.l.b16 %v3838
        %v4669 = vunpack.c.h.b16 %v3838
        %v4670 = vunpack.c.l.b16 %v3839
        %v4671 = vunpack.c.h.b16 %v3839
        %v4672 = vunpack.c.l.b16 %v3840
        %v4673 = vunpack.c.h.b16 %v3840
        %v4674 = vunpack.c.l.b16 %v3841
        %v4675 = vunpack.c.h.b16 %v3841
        %v4676 = vunpack.c.l.b16 %v3842
        %v4677 = vunpack.c.h.b16 %v3842
        %v4678 = vunpack.c.l.b16 %v3843
        %v4679 = vunpack.c.h.b16 %v3843
        %v4680 = vunpack.c.l.b16 %v3844
        %v4681 = vunpack.c.h.b16 %v3844
        %v4682 = vunpack.c.l.b16 %v3845
        %v4683 = vunpack.c.h.b16 %v3845
        %v4684 = vunpack.c.l.b16 %v3846
        %v4685 = vunpack.c.h.b16 %v3846
        %v4686 = vunpack.c.l.b16 %v3847
        %v4687 = vunpack.c.h.b16 %v3847
        %v4688 = vunpack.c.l.b16 %v3848
        %v4689 = vunpack.c.h.b16 %v3848
        %v4690 = vunpack.c.l.b16 %v3849
        %v4691 = vunpack.c.h.b16 %v3849
        %v4692 = vunpack.c.l.b16 %v3850
        %v4693 = vunpack.c.h.b16 %v3850
        %v4694 = vunpack.c.l.b16 %v3851
        %v4695 = vunpack.c.h.b16 %v3851
        %v4696 = vunpack.c.l.b16 %v3852
        %v4697 = vunpack.c.h.b16 %v3852
        %v4698 = vunpack.c.l.b16 %v3853
        %v4699 = vunpack.c.h.b16 %v3853
        %v4700 = vunpack.c.l.b16 %v3854
        %v4701 = vunpack.c.h.b16 %v3854
        %v4702 = vunpack.c.l.b16 %v3855
        %v4703 = vunpack.c.h.b16 %v3855
        %v4704 = vunpack.c.l.b16 %v3856
        %v4705 = vunpack.c.h.b16 %v3856
        %v4706 = vunpack.c.l.b16 %v3857
        %v4707 = vunpack.c.h.b16 %v3857
        %v4708 = vunpack.c.l.b16 %v3858
        %v4709 = vunpack.c.h.b16 %v3858
        %v4710 = vunpack.c.l.b16 %v3859
        %v4711 = vunpack.c.h.b16 %v3859
        %v4712 = vunpack.c.l.b16 %v3860
        %v4713 = vunpack.c.h.b16 %v3860
        %v4714 = vunpack.c.l.b16 %v3861
        %v4715 = vunpack.c.h.b16 %v3861
        %v4716 = vunpack.c.l.b16 %v3862
        %v4717 = vunpack.c.h.b16 %v3862
        %v4718 = vunpack.c.l.b16 %v3863
        %v4719 = vunpack.c.h.b16 %v3863
        %v4720 = vunpack.c.l.b16 %v3864
        %v4721 = vunpack.c.h.b16 %v3864
        %v4722 = vunpack.c.l.b16 %v3865
        %v4723 = vunpack.c.h.b16 %v3865
        %v4724 = vunpack.c.l.b16 %v3866
        %v4725 = vunpack.c.h.b16 %v3866
        %v4726 = vunpack.c.l.b16 %v3867
        %v4727 = vunpack.c.h.b16 %v3867
        %v4728 = vunpack.c.l.b16 %v3868
        %v4729 = vunpack.c.h.b16 %v3868
        %v4730 = vunpack.c.l.b16 %v3869
        %v4731 = vunpack.c.h.b16 %v3869
        %v4732 = vunpack.c.l.b16 %v3870
        %v4733 = vunpack.c.h.b16 %v3870
        %v4734 = vunpack.c.l.b16 %v3871
        %v4735 = vunpack.c.h.b16 %v3871
        %v4736 = vpack.c.b16 %v4166, %v4160
        %v4737 = vpack.c.b16 %v4167, %v4161
        %v4738 = vpack.c.b16 %v4168, %v4162
        %v4739 = vpack.c.b16 %v4169, %v4163
        %v4740 = vpack.c.b16 %v4170, %v4164
        %v4741 = vpack.c.b16 %v4171, %v4165
        %v4742 = vpack.c.b16 %v4178, %v4172
        %v4743 = vpack.c.b16 %v4179, %v4173
        %v4744 = vpack.c.b16 %v4180, %v4174
        %v4745 = vpack.c.b16 %v4181, %v4175
        %v4746 = vpack.c.b16 %v4182, %v4176
        %v4747 = vpack.c.b16 %v4183, %v4177
        %v4748 = vpack.c.b16 %v4190, %v4184
        %v4749 = vpack.c.b16 %v4191, %v4185
        %v4750 = vpack.c.b16 %v4192, %v4186
        %v4751 = vpack.c.b16 %v4193, %v4187
        %v4752 = vpack.c.b16 %v4194, %v4188
        %v4753 = vpack.c.b16 %v4195, %v4189
        %v4754 = vpack.c.b16 %v4202, %v4196
        %v4755 = vpack.c.b16 %v4203, %v4197
        %v4756 = vpack.c.b16 %v4204, %v4198
        %v4757 = vpack.c.b16 %v4205, %v4199
        %v4758 = vpack.c.b16 %v4206, %v4200
        %v4759 = vpack.c.b16 %v4207, %v4201
        %v4760 = vpack.c.b16 %v4214, %v4208
        %v4761 = vpack.c.b16 %v4215, %v4209
        %v4762 = vpack.c.b16 %v4216, %v4210
        %v4763 = vpack.c.b16 %v4217, %v4211
        %v4764 = vpack.c.b16 %v4218, %v4212
        %v4765 = vpack.c.b16 %v4219, %v4213
        %v4766 = vpack.c.b16 %v4226, %v4220
        %v4767 = vpack.c.b16 %v4227, %v4221
        %v4768 = vpack.c.b16 %v4228, %v4222
        %v4769 = vpack.c.b16 %v4229, %v4223
        %v4770 = vpack.c.b16 %v4230, %v4224
        %v4771 = vpack.c.b16 %v4231, %v4225
        %v4772 = vpack.c.b16 %v4238, %v4232
        %v4773 = vpack.c.b16 %v4239, %v4233
        %v4774 = vpack.c.b16 %v4240, %v4234
        %v4775 = vpack.c.b16 %v4241, %v4235
        %v4776 = vpack.c.b16 %v4242, %v4236
        %v4777 = vpack.c.b16 %v4243, %v4237
        %v4778 = vpack.c.b16 %v4250, %v4244
        %v4779 = vpack.c.b16 %v4251, %v4245
        %v4780 = vpack.c.b16 %v4252, %v4246
        %v4781 = vpack.c.b16 %v4253, %v4247
        %v4782 = vpack.c.b16 %v4254, %v4248
        %v4783 = vpack.c.b16 %v4255, %v4249
        %v4784 = vpack.c.b16 %v4262, %v4256
        %v4785 = vpack.c.b16 %v4263, %v4257
        %v4786 = vpack.c.b16 %v4264, %v4258
        %v4787 = vpack.c.b16 %v4265, %v4259
        %v4788 = vpack.c.b16 %v4266, %v4260
        %v4789 = vpack.c.b16 %v4267, %v4261
        %v4790 = vpack.c.b16 %v4274, %v4268
        %v4791 = vpack.c.b16 %v4275, %v4269
        %v4792 = vpack.c.b16 %v4276, %v4270
        %v4793 = vpack.c.b16 %v4277, %v4271
        %v4794 = vpack.c.b16 %v4278, %v4272
        %v4795 = vpack.c.b16 %v4279, %v4273
        %v4796 = vpack.c.b16 %v4286, %v4280
        %v4797 = vpack.c.b16 %v4287, %v4281
        %v4798 = vpack.c.b16 %v4288, %v4282
        %v4799 = vpack.c.b16 %v4289, %v4283
        %v4800 = vpack.c.b16 %v4290, %v4284
        %v4801 = vpack.c.b16 %v4291, %v4285
        %v4802 = vpack.c.b16 %v4298, %v4292
        %v4803 = vpack.c.b16 %v4299, %v4293
        %v4804 = vpack.c.b16 %v4300, %v4294
        %v4805 = vpack.c.b16 %v4301, %v4295
        %v4806 = vpack.c.b16 %v4302, %v4296
        %v4807 = vpack.c.b16 %v4303, %v4297
        %v4808 = vpack.c.b16 %v4310, %v4304
        %v4809 = vpack.c.b16 %v4311, %v4305
        %v4810 = vpack.c.b16 %v4312, %v4306
        %v4811 = vpack.c.b16 %v4313, %v4307
        %v4812 = vpack.c.b16 %v4314, %v4308
        %v4813 = vpack.c.b16 %v4315, %v4309
        %v4814 = vpack.c.b16 %v4322, %v4316
        %v4815 = vpack.c.b16 %v4323, %v4317
        %v4816 = vpack.c.b16 %v4324, %v4318
        %v4817 = vpack.c.b16 %v4325, %v4319
        %v4818 = vpack.c.b16 %v4326, %v4320
        %v4819 = vpack.c.b16 %v4327, %v4321
        %v4820 = vpack.c.b16 %v4334, %v4328
        %v4821 = vpack.c.b16 %v4335, %v4329
        %v4822 = vpack.c.b16 %v4336, %v4330
        %v4823 = vpack.c.b16 %v4337, %v4331
        %v4824 = vpack.c.b16 %v4338, %v4332
        %v4825 = vpack.c.b16 %v4339, %v4333
        %v4826 = vpack.c.b16 %v4346, %v4340
        %v4827 = vpack.c.b16 %v4347, %v4341
        %v4828 = vpack.c.b16 %v4348, %v4342
        %v4829 = vpack.c.b16 %v4349, %v4343
        %v4830 = vpack.c.b16 %v4350, %v4344
        %v4831 = vpack.c.b16 %v4351, %v4345
        %v4832 = vpack.c.b16 %v4358, %v4352
        %v4833 = vpack.c.b16 %v4359, %v4353
        %v4834 = vpack.c.b16 %v4360, %v4354
        %v4835 = vpack.c.b16 %v4361, %v4355
        %v4836 = vpack.c.b16 %v4362, %v4356
        %v4837 = vpack.c.b16 %v4363, %v4357
        %v4838 = vpack.c.b16 %v4370, %v4364
        %v4839 = vpack.c.b16 %v4371, %v4365
        %v4840 = vpack.c.b16 %v4372, %v4366
        %v4841 = vpack.c.b16 %v4373, %v4367
        %v4842 = vpack.c.b16 %v4374, %v4368
        %v4843 = vpack.c.b16 %v4375, %v4369
        %v4844 = vpack.c.b16 %v4382, %v4376
        %v4845 = vpack.c.b16 %v4383, %v4377
        %v4846 = vpack.c.b16 %v4384, %v4378
        %v4847 = vpack.c.b16 %v4385, %v4379
        %v4848 = vpack.c.b16 %v4386, %v4380
        %v4849 = vpack.c.b16 %v4387, %v4381
        %v4850 = vpack.c.b16 %v4394, %v4388
        %v4851 = vpack.c.b16 %v4395, %v4389
        %v4852 = vpack.c.b16 %v4396, %v4390
        %v4853 = vpack.c.b16 %v4397, %v4391
        %v4854 = vpack.c.b16 %v4398, %v4392
        %v4855 = vpack.c.b16 %v4399, %v4393
        %v4856 = vpack.c.b16 %v4406, %v4400
        %v4857 = vpack.c.b16 %v4407, %v4401
        %v4858 = vpack.c.b16 %v4408, %v4402
        %v4859 = vpack.c.b16 %v4409, %v4403
        %v4860 = vpack.c.b16 %v4410, %v4404
        %v4861 = vpack.c.b16 %v4411, %v4405
        %v4862 = vpack.c.b16 %v4418, %v4412
        %v4863 = vpack.c.b16 %v4419, %v4413
        %v4864 = vpack.c.b16 %v4420, %v4414
        %v4865 = vpack.c.b16 %v4421, %v4415
        %v4866 = vpack.c.b16 %v4422, %v4416
        %v4867 = vpack.c.b16 %v4423, %v4417
        %v4868 = vpack.c.b16 %v4430, %v4424
        %v4869 = vpack.c.b16 %v4431, %v4425
        %v4870 = vpack.c.b16 %v4432, %v4426
        %v4871 = vpack.c.b16 %v4433, %v4427
        %v4872 = vpack.c.b16 %v4434, %v4428
        %v4873 = vpack.c.b16 %v4435, %v4429
        %v4874 = vpack.c.b16 %v4442, %v4436
        %v4875 = vpack.c.b16 %v4443, %v4437
        %v4876 = vpack.c.b16 %v4444, %v4438
        %v4877 = vpack.c.b16 %v4445, %v4439
        %v4878 = vpack.c.b16 %v4446, %v4440
        %v4879 = vpack.c.b16 %v4447, %v4441
        %v4880 = vpack.c.b16 %v4454, %v4448
        %v4881 = vpack.c.b16 %v4455, %v4449
        %v4882 = vpack.c.b16 %v4456, %v4450
        %v4883 = vpack.c.b16 %v4457, %v4451
        %v4884 = vpack.c.b16 %v4458, %v4452
        %v4885 = vpack.c.b16 %v4459, %v4453
        %v4886 = vpack.c.b16 %v4466, %v4460
        %v4887 = vpack.c.b16 %v4467, %v4461
        %v4888 = vpack.c.b16 %v4468, %v4462
        %v4889 = vpack.c.b16 %v4469, %v4463
        %v4890 = vpack.c.b16 %v4470, %v4464
        %v4891 = vpack.c.b16 %v4471, %v4465
        %v4892 = vpack.c.b16 %v4478, %v4472
        %v4893 = vpack.c.b16 %v4479, %v4473
        %v4894 = vpack.c.b16 %v4480, %v4474
        %v4895 = vpack.c.b16 %v4481, %v4475
        %v4896 = vpack.c.b16 %v4482, %v4476
        %v4897 = vpack.c.b16 %v4483, %v4477
        %v4898 = vpack.c.b16 %v4490, %v4484
        %v4899 = vpack.c.b16 %v4491, %v4485
        %v4900 = vpack.c.b16 %v4492, %v4486
        %v4901 = vpack.c.b16 %v4493, %v4487
        %v4902 = vpack.c.b16 %v4494, %v4488
        %v4903 = vpack.c.b16 %v4495, %v4489
        %v4904 = vpack.c.b16 %v4502, %v4496
        %v4905 = vpack.c.b16 %v4503, %v4497
        %v4906 = vpack.c.b16 %v4504, %v4498
        %v4907 = vpack.c.b16 %v4505, %v4499
        %v4908 = vpack.c.b16 %v4506, %v4500
        %v4909 = vpack.c.b16 %v4507, %v4501
        %v4910 = vpack.c.b16 %v4514, %v4508
        %v4911 = vpack.c.b16 %v4515, %v4509
        %v4912 = vpack.c.b16 %v4516, %v4510
        %v4913 = vpack.c.b16 %v4517, %v4511
        %v4914 = vpack.c.b16 %v4518, %v4512
        %v4915 = vpack.c.b16 %v4519, %v4513
        %v4916 = vpack.c.b16 %v4526, %v4520
        %v4917 = vpack.c.b16 %v4527, %v4521
        %v4918 = vpack.c.b16 %v4528, %v4522
        %v4919 = vpack.c.b16 %v4529, %v4523
        %v4920 = vpack.c.b16 %v4530, %v4524
        %v4921 = vpack.c.b16 %v4531, %v4525
        %v4922 = vpack.c.b16 %v4538, %v4532
        %v4923 = vpack.c.b16 %v4539, %v4533
        %v4924 = vpack.c.b16 %v4540, %v4534
        %v4925 = vpack.c.b16 %v4541, %v4535
        %v4926 = vpack.c.b16 %v4542, %v4536
        %v4927 = vpack.c.b16 %v4543, %v4537
        %v4928 = vpack.c.b16 %v4550, %v4544
        %v4929 = vpack.c.b16 %v4551, %v4545
        %v4930 = vpack.c.b16 %v4552, %v4546
        %v4931 = vpack.c.b16 %v4553, %v4547
        %v4932 = vpack.c.b16 %v4554, %v4548
        %v4933 = vpack.c.b16 %v4555, %v4549
        %v4934 = vpack.c.b16 %v4562, %v4556
        %v4935 = vpack.c.b16 %v4563, %v4557
        %v4936 = vpack.c.b16 %v4564, %v4558
        %v4937 = vpack.c.b16 %v4565, %v4559
        %v4938 = vpack.c.b16 %v4566, %v4560
        %v4939 = vpack.c.b16 %v4567, %v4561
        %v4940 = vpack.c.b16 %v4574, %v4568
        %v4941 = vpack.c.b16 %v4575, %v4569
        %v4942 = vpack.c.b16 %v4576, %v4570
        %v4943 = vpack.c.b16 %v4577, %v4571
        %v4944 = vpack.c.b16 %v4578, %v4572
        %v4945 = vpack.c.b16 %v4579, %v4573
        %v4946 = vpack.c.b16 %v4586, %v4580
        %v4947 = vpack.c.b16 %v4587, %v4581
        %v4948 = vpack.c.b16 %v4588, %v4582
        %v4949 = vpack.c.b16 %v4589, %v4583
        %v4950 = vpack.c.b16 %v4590, %v4584
        %v4951 = vpack.c.b16 %v4591, %v4585
        %v4952 = vpack.c.b16 %v4598, %v4592
        %v4953 = vpack.c.b16 %v4599, %v4593
        %v4954 = vpack.c.b16 %v4600, %v4594
        %v4955 = vpack.c.b16 %v4601, %v4595
        %v4956 = vpack.c.b16 %v4602, %v4596
        %v4957 = vpack.c.b16 %v4603, %v4597
        %v4958 = vpack.c.b16 %v4610, %v4604
        %v4959 = vpack.c.b16 %v4611, %v4605
        %v4960 = vpack.c.b16 %v4612, %v4606
        %v4961 = vpack.c.b16 %v4613, %v4607
        %v4962 = vpack.c.b16 %v4614, %v4608
        %v4963 = vpack.c.b16 %v4615, %v4609
        %v4964 = vpack.c.b16 %v4622, %v4616
        %v4965 = vpack.c.b16 %v4623, %v4617
        %v4966 = vpack.c.b16 %v4624, %v4618
        %v4967 = vpack.c.b16 %v4625, %v4619
        %v4968 = vpack.c.b16 %v4626, %v4620
        %v4969 = vpack.c.b16 %v4627, %v4621
        %v4970 = vpack.c.b16 %v4634, %v4628
        %v4971 = vpack.c.b16 %v4635, %v4629
        %v4972 = vpack.c.b16 %v4636, %v4630
        %v4973 = vpack.c.b16 %v4637, %v4631
        %v4974 = vpack.c.b16 %v4638, %v4632
        %v4975 = vpack.c.b16 %v4639, %v4633
        %v4976 = vpack.c.b16 %v4646, %v4640
        %v4977 = vpack.c.b16 %v4647, %v4641
        %v4978 = vpack.c.b16 %v4648, %v4642
        %v4979 = vpack.c.b16 %v4649, %v4643
        %v4980 = vpack.c.b16 %v4650, %v4644
        %v4981 = vpack.c.b16 %v4651, %v4645
        %v4982 = vpack.c.b16 %v4658, %v4652
        %v4983 = vpack.c.b16 %v4659, %v4653
        %v4984 = vpack.c.b16 %v4660, %v4654
        %v4985 = vpack.c.b16 %v4661, %v4655
        %v4986 = vpack.c.b16 %v4662, %v4656
        %v4987 = vpack.c.b16 %v4663, %v4657
        %v4988 = vpack.c.b16 %v4670, %v4664
        %v4989 = vpack.c.b16 %v4671, %v4665
        %v4990 = vpack.c.b16 %v4672, %v4666
        %v4991 = vpack.c.b16 %v4673, %v4667
        %v4992 = vpack.c.b16 %v4674, %v4668
        %v4993 = vpack.c.b16 %v4675, %v4669
        %v4994 = vpack.c.b16 %v4682, %v4676
        %v4995 = vpack.c.b16 %v4683, %v4677
        %v4996 = vpack.c.b16 %v4684, %v4678
        %v4997 = vpack.c.b16 %v4685, %v4679
        %v4998 = vpack.c.b16 %v4686, %v4680
        %v4999 = vpack.c.b16 %v4687, %v4681
        %v5000 = vpack.c.b16 %v4694, %v4688
        %v5001 = vpack.c.b16 %v4695, %v4689
        %v5002 = vpack.c.b16 %v4696, %v4690
        %v5003 = vpack.c.b16 %v4697, %v4691
        %v5004 = vpack.c.b16 %v4698, %v4692
        %v5005 = vpack.c.b16 %v4699, %v4693
        %v5006 = vpack.c.b16 %v4706, %v4700
        %v5007 = vpack.c.b16 %v4707, %v4701
        %v5008 = vpack.c.b16 %v4708, %v4702
        %v5009 = vpack.c.b16 %v4709, %v4703
        %v5010 = vpack.c.b16 %v4710, %v4704
        %v5011 = vpack.c.b16 %v4711, %v4705
        %v5012 = vpack.c.b16 %v4718, %v4712
        %v5013 = vpack.c.b16 %v4719, %v4713
        %v5014 = vpack.c.b16 %v4720, %v4714
        %v5015 = vpack.c.b16 %v4721, %v4715
        %v5016 = vpack.c.b16 %v4722, %v4716
        %v5017 = vpack.c.b16 %v4723, %v4717
        %v5018 = vpack.c.b16 %v4730, %v4724
        %v5019 = vpack.c.b16 %v4731, %v4725
        %v5020 = vpack.c.b16 %v4732, %v4726
        %v5021 = vpack.c.b16 %v4733, %v4727
        %v5022 = vpack.c.b16 %v4734, %v4728
        %v5023 = vpack.c.b16 %v4735, %v4729
        %5312 = vmatprep.subr.bf16.mxu0 %v4737
        %5313 = vmatpush1.bf16.msra.mxu0 %v4736
        %5314 = vmatprep.subr.bf16.mxu0 %v4743
        %5315 = vmatpush1.bf16.msra.mxu0 %v4742
        %5316 = vmatprep.subr.bf16.mxu0 %v4749
        %5317 = vmatpush1.bf16.msra.mxu0 %v4748
        %5318 = vmatprep.subr.bf16.mxu0 %v4755
        %5319 = vmatpush1.bf16.msra.mxu0 %v4754
        %5320 = vmatprep.subr.bf16.mxu0 %v4761
        %5321 = vmatpush1.bf16.msra.mxu0 %v4760
        %5322 = vmatprep.subr.bf16.mxu0 %v4767
        %5323 = vmatpush1.bf16.msra.mxu0 %v4766
        %5324 = vmatprep.subr.bf16.mxu0 %v4773
        %5325 = vmatpush1.bf16.msra.mxu0 %v4772
        %5326 = vmatprep.subr.bf16.mxu0 %v4779
        %5327 = vmatpush1.bf16.msra.mxu0 %v4778
        %5328 = vmatprep.subr.bf16.mxu0 %v4785
        %5329 = vmatpush1.bf16.msra.mxu0 %v4784
        %5330 = vmatprep.subr.bf16.mxu0 %v4791
        %5331 = vmatpush1.bf16.msra.mxu0 %v4790
        %5332 = vmatprep.subr.bf16.mxu0 %v4797
        %5333 = vmatpush1.bf16.msra.mxu0 %v4796
        %5334 = vmatprep.subr.bf16.mxu0 %v4803
        %5335 = vmatpush1.bf16.msra.mxu0 %v4802
        %5336 = vmatprep.subr.bf16.mxu0 %v4809
        %5337 = vmatpush1.bf16.msra.mxu0 %v4808
        %5338 = vmatprep.subr.bf16.mxu0 %v4815
        %5339 = vmatpush1.bf16.msra.mxu0 %v4814
        %5340 = vmatprep.subr.bf16.mxu0 %v4821
        %5341 = vmatpush1.bf16.msra.mxu0 %v4820
        %5342 = vmatprep.subr.bf16.mxu0 %v4827
        %5343 = vmatpush1.bf16.msra.mxu0 %v4826
        %5344 = vmatprep.mubr.bf16.mxu0 %v3537
        %5345 = vmatmul.mubr.bf16.gmra.mrb[0].mxu0 %v3536
        %v5346 = vpop.f32.mrb[0].mxu0
        %v5347 = vadd.f32 0.0, %v5346
        %v5348 = vpop.f32.mrb[0].mxu0
        %v5349 = vadd.f32 0.0, %v5348
        %v5350 = vpop.f32.mrb[0].mxu0
        %v5351 = vadd.f32 0.0, %v5350
        %v5352 = vpop.f32.mrb[0].mxu0
        %v5353 = vadd.f32 0.0, %v5352
        %5354 = vmatprep.mubr.bf16.mxu0 %v3543
        %5355 = vmatmul.mubr.bf16.gmra.mrb[0].mxu0 %v3542
        %v5356 = vpop.f32.mrb[0].mxu0
        %v5357 = vadd.f32 0.0, %v5356
        %v5358 = vpop.f32.mrb[0].mxu0
        %v5359 = vadd.f32 0.0, %v5358
        %v5360 = vpop.f32.mrb[0].mxu0
        %v5361 = vadd.f32 0.0, %v5360
        %v5362 = vpop.f32.mrb[0].mxu0
        %v5363 = vadd.f32 0.0, %v5362
        %5364 = vmatprep.mubr.bf16.mxu0 %v3549
        %5365 = vmatmul.mubr.bf16.gmra.mrb[0].mxu0 %v3548
        %v5366 = vpop.f32.mrb[0].mxu0
        %v5367 = vadd.f32 0.0, %v5366
        %v5368 = vpop.f32.mrb[0].mxu0
        %v5369 = vadd.f32 0.0, %v5368
        %v5370 = vpop.f32.mrb[0].mxu0
        %v5371 = vadd.f32 0.0, %v5370
        %v5372 = vpop.f32.mrb[0].mxu0
        %v5373 = vadd.f32 0.0, %v5372
        %5374 = vmatprep.mubr.bf16.mxu0 %v3555
        %5375 = vmatmul.mubr.bf16.gmra.mrb[0].mxu0 %v3554
        %v5376 = vpop.f32.mrb[0].mxu0
        %v5377 = vadd.f32 0.0, %v5376
        %v5378 = vpop.f32.mrb[0].mxu0
        %v5379 = vadd.f32 0.0, %v5378
        %v5380 = vpop.f32.mrb[0].mxu0
        %v5381 = vadd.f32 0.0, %v5380
        %v5382 = vpop.f32.mrb[0].mxu0
        %v5383 = vadd.f32 0.0, %v5382
        %5384 = vmatprep.mubr.bf16.mxu0 %v3561
        %5385 = vmatmul.mubr.bf16.gmra.mrb[0].mxu0 %v3560
        %v5386 = vpop.f32.mrb[0].mxu0
        %v5387 = vadd.f32 0.0, %v5386
        %v5388 = vpop.f32.mrb[0].mxu0
        %v5389 = vadd.f32 0.0, %v5388
        %v5390 = vpop.f32.mrb[0].mxu0
        %v5391 = vadd.f32 0.0, %v5390
        %v5392 = vpop.f32.mrb[0].mxu0
        %v5393 = vadd.f32 0.0, %v5392
        %5394 = vmatprep.mubr.bf16.mxu0 %v3567
        %5395 = vmatmul.mubr.bf16.gmra.mrb[0].mxu0 %v3566
        %v5396 = vpop.f32.mrb[0].mxu0
        %v5397 = vadd.f32 0.0, %v5396
        %v5398 = vpop.f32.mrb[0].mxu0
        %v5399 = vadd.f32 0.0, %v5398
        %v5400 = vpop.f32.mrb[0].mxu0
        %v5401 = vadd.f32 0.0, %v5400
        %v5402 = vpop.f32.mrb[0].mxu0
        %v5403 = vadd.f32 0.0, %v5402
        %5404 = vmatprep.mubr.bf16.mxu0 %v3573
        %5405 = vmatmul.mubr.bf16.gmra.mrb[0].mxu0 %v3572
        %v5406 = vpop.f32.mrb[0].mxu0
        %v5407 = vadd.f32 0.0, %v5406
        %v5408 = vpop.f32.mrb[0].mxu0
        %v5409 = vadd.f32 0.0, %v5408
        %v5410 = vpop.f32.mrb[0].mxu0
        %v5411 = vadd.f32 0.0, %v5410
        %v5412 = vpop.f32.mrb[0].mxu0
        %v5413 = vadd.f32 0.0, %v5412
        %5414 = vmatprep.mubr.bf16.mxu0 %v3579
        %5415 = vmatmul.mubr.bf16.gmra.mrb[0].mxu0 %v3578
        %v5416 = vpop.f32.mrb[0].mxu0
        %v5417 = vadd.f32 0.0, %v5416
        %v5418 = vpop.f32.mrb[0].mxu0
        %v5419 = vadd.f32 0.0, %v5418
        %v5420 = vpop.f32.mrb[0].mxu0
        %v5421 = vpop.f32.mrb[0].mxu0
        %5422 = vdwg.mxu0
        %5423 = vmatprep.subr.bf16.mxu0 %v4833
        %5424 = vmatpush1.bf16.msra.mxu0 %v4832
        %5425 = vmatprep.subr.bf16.mxu0 %v4839
        %5426 = vmatpush1.bf16.msra.mxu0 %v4838
        %5427 = vmatprep.subr.bf16.mxu0 %v4845
        %5428 = vmatpush1.bf16.msra.mxu0 %v4844
        %5429 = vmatprep.subr.bf16.mxu0 %v4851
        %5430 = vmatpush1.bf16.msra.mxu0 %v4850
        %5431 = vmatprep.subr.bf16.mxu0 %v4857
        %5432 = vmatpush1.bf16.msra.mxu0 %v4856
        %5433 = vmatprep.subr.bf16.mxu0 %v4863
        %5434 = vmatpush1.bf16.msra.mxu0 %v4862
        %5435 = vmatprep.subr.bf16.mxu0 %v4869
        %5436 = vmatpush1.bf16.msra.mxu0 %v4868
        %5437 = vmatprep.subr.bf16.mxu0 %v4875
        %5438 = vmatpush1.bf16.msra.mxu0 %v4874
        %5439 = vmatprep.subr.bf16.mxu0 %v4881
        %5440 = vmatpush1.bf16.msra.mxu0 %v4880
        %5441 = vmatprep.subr.bf16.mxu0 %v4887
        %5442 = vmatpush1.bf16.msra.mxu0 %v4886
        %5443 = vmatprep.subr.bf16.mxu0 %v4893
        %5444 = vmatpush1.bf16.msra.mxu0 %v4892
        %5445 = vmatprep.subr.bf16.mxu0 %v4899
        %5446 = vmatpush1.bf16.msra.mxu0 %v4898
        %5447 = vmatprep.subr.bf16.mxu0 %v4905
        %5448 = vmatpush1.bf16.msra.mxu0 %v4904
        %5449 = vmatprep.subr.bf16.mxu0 %v4911
        %5450 = vmatpush1.bf16.msra.mxu0 %v4910
        %5451 = vmatprep.subr.bf16.mxu0 %v4917
        %5452 = vmatpush1.bf16.msra.mxu0 %v4916
        %5453 = vmatprep.subr.bf16.mxu0 %v4923
        %5454 = vmatpush1.bf16.msra.mxu0 %v4922
        %5455 = vmatprep.mubr.bf16.mxu0 %v3539
        %5456 = vmatmul.mubr.bf16.gmra.mrb[0].mxu0 %v3538
        %v5457 = vpop.f32.mrb[0].mxu0
        %v5458 = vadd.f32 %v5347, %v5457
        %v5459 = vpop.f32.mrb[0].mxu0
        %v5460 = vadd.f32 %v5349, %v5459
        %v5461 = vpop.f32.mrb[0].mxu0
        %v5462 = vadd.f32 %v5351, %v5461
        %v5463 = vpop.f32.mrb[0].mxu0
        %v5464 = vadd.f32 %v5353, %v5463
        %5465 = vmatprep.mubr.bf16.mxu0 %v3545
        %5466 = vmatmul.mubr.bf16.gmra.mrb[0].mxu0 %v3544
        %v5467 = vpop.f32.mrb[0].mxu0
        %v5468 = vadd.f32 %v5357, %v5467
        %v5469 = vpop.f32.mrb[0].mxu0
        %v5470 = vadd.f32 %v5359, %v5469
        %v5471 = vpop.f32.mrb[0].mxu0
        %v5472 = vadd.f32 %v5361, %v5471
        %v5473 = vpop.f32.mrb[0].mxu0
        %v5474 = vadd.f32 %v5363, %v5473
        %5475 = vmatprep.mubr.bf16.mxu0 %v3551
        %5476 = vmatmul.mubr.bf16.gmra.mrb[0].mxu0 %v3550
        %v5477 = vpop.f32.mrb[0].mxu0
        %v5478 = vadd.f32 %v5367, %v5477
        %v5479 = vpop.f32.mrb[0].mxu0
        %v5480 = vadd.f32 %v5369, %v5479
        %v5481 = vpop.f32.mrb[0].mxu0
        %v5482 = vadd.f32 %v5371, %v5481
        %v5483 = vpop.f32.mrb[0].mxu0
        %v5484 = vadd.f32 %v5373, %v5483
        %5485 = vmatprep.mubr.bf16.mxu0 %v3557
        %5486 = vmatmul.mubr.bf16.gmra.mrb[0].mxu0 %v3556
        %v5487 = vpop.f32.mrb[0].mxu0
        %v5488 = vadd.f32 %v5377, %v5487
        %v5489 = vpop.f32.mrb[0].mxu0
        %v5490 = vadd.f32 %v5379, %v5489
        %v5491 = vpop.f32.mrb[0].mxu0
        %v5492 = vadd.f32 %v5381, %v5491
        %v5493 = vpop.f32.mrb[0].mxu0
        %v5494 = vadd.f32 %v5383, %v5493
        %5495 = vmatprep.mubr.bf16.mxu0 %v3563
        %5496 = vmatmul.mubr.bf16.gmra.mrb[0].mxu0 %v3562
        %v5497 = vpop.f32.mrb[0].mxu0
        %v5498 = vadd.f32 %v5387, %v5497
        %v5499 = vpop.f32.mrb[0].mxu0
        %v5500 = vadd.f32 %v5389, %v5499
        %v5501 = vpop.f32.mrb[0].mxu0
        %v5502 = vadd.f32 %v5391, %v5501
        %v5503 = vpop.f32.mrb[0].mxu0
        %v5504 = vadd.f32 %v5393, %v5503
        %5505 = vmatprep.mubr.bf16.mxu0 %v3569
        %5506 = vmatmul.mubr.bf16.gmra.mrb[0].mxu0 %v3568
        %v5507 = vpop.f32.mrb[0].mxu0
        %v5508 = vadd.f32 %v5397, %v5507
        %v5509 = vpop.f32.mrb[0].mxu0
        %v5510 = vadd.f32 %v5399, %v5509
        %v5511 = vpop.f32.mrb[0].mxu0
        %v5512 = vadd.f32 %v5401, %v5511
        %v5513 = vpop.f32.mrb[0].mxu0
        %v5514 = vadd.f32 %v5403, %v5513
        %5515 = vmatprep.mubr.bf16.mxu0 %v3575
        %5516 = vmatmul.mubr.bf16.gmra.mrb[0].mxu0 %v3574
        %v5517 = vpop.f32.mrb[0].mxu0
        %v5518 = vadd.f32 %v5407, %v5517
        %v5519 = vpop.f32.mrb[0].mxu0
        %v5520 = vadd.f32 %v5409, %v5519
        %v5521 = vpop.f32.mrb[0].mxu0
        %v5522 = vadd.f32 %v5411, %v5521
        %v5523 = vpop.f32.mrb[0].mxu0
        %v5524 = vadd.f32 %v5413, %v5523
        %5525 = vmatprep.mubr.bf16.mxu0 %v3581
        %5526 = vmatmul.mubr.bf16.gmra.mrb[0].mxu0 %v3580
        %v5527 = vpop.f32.mrb[0].mxu0
        %v5528 = vadd.f32 %v5417, %v5527
        %v5529 = vpop.f32.mrb[0].mxu0
        %v5530 = vadd.f32 %v5419, %v5529
        %v5531 = vpop.f32.mrb[0].mxu0
        %v5532 = vpop.f32.mrb[0].mxu0
        %5533 = vdwg.mxu0
        %5534 = vmatprep.subr.bf16.mxu0 %v4929
        %5535 = vmatpush1.bf16.msra.mxu0 %v4928
        %5536 = vmatprep.subr.bf16.mxu0 %v4935
        %5537 = vmatpush1.bf16.msra.mxu0 %v4934
        %5538 = vmatprep.subr.bf16.mxu0 %v4941
        %5539 = vmatpush1.bf16.msra.mxu0 %v4940
        %5540 = vmatprep.subr.bf16.mxu0 %v4947
        %5541 = vmatpush1.bf16.msra.mxu0 %v4946
        %5542 = vmatprep.subr.bf16.mxu0 %v4953
        %5543 = vmatpush1.bf16.msra.mxu0 %v4952
        %5544 = vmatprep.subr.bf16.mxu0 %v4959
        %5545 = vmatpush1.bf16.msra.mxu0 %v4958
        %5546 = vmatprep.subr.bf16.mxu0 %v4965
        %5547 = vmatpush1.bf16.msra.mxu0 %v4964
        %5548 = vmatprep.subr.bf16.mxu0 %v4971
        %5549 = vmatpush1.bf16.msra.mxu0 %v4970
        %5550 = vmatprep.subr.bf16.mxu0 %v4977
        %5551 = vmatpush1.bf16.msra.mxu0 %v4976
        %5552 = vmatprep.subr.bf16.mxu0 %v4983
        %5553 = vmatpush1.bf16.msra.mxu0 %v4982
        %5554 = vmatprep.subr.bf16.mxu0 %v4989
        %5555 = vmatpush1.bf16.msra.mxu0 %v4988
        %5556 = vmatprep.subr.bf16.mxu0 %v4995
        %5557 = vmatpush1.bf16.msra.mxu0 %v4994
        %5558 = vmatprep.subr.bf16.mxu0 %v5001
        %5559 = vmatpush1.bf16.msra.mxu0 %v5000
        %5560 = vmatprep.subr.bf16.mxu0 %v5007
        %5561 = vmatpush1.bf16.msra.mxu0 %v5006
        %5562 = vmatprep.subr.bf16.mxu0 %v5013
        %5563 = vmatpush1.bf16.msra.mxu0 %v5012
        %5564 = vmatprep.subr.bf16.mxu0 %v5019
        %5565 = vmatpush1.bf16.msra.mxu0 %v5018
        %5566 = vmatprep.mubr.bf16.mxu0 %v3541
        %5567 = vmatmul.mubr.bf16.gmra.mrb[0].mxu0 %v3540
        %v5568 = vpop.f32.mrb[0].mxu0
        %v5569 = vadd.f32 %v5458, %v5568
        %v5570 = vpop.f32.mrb[0].mxu0
        %v5571 = vadd.f32 %v5460, %v5570
        %v5572 = vpop.f32.mrb[0].mxu0
        %v5573 = vadd.f32 %v5462, %v5572
        %v5574 = vpop.f32.mrb[0].mxu0
        %v5575 = vadd.f32 %v5464, %v5574
        %5576 = vmatprep.mubr.bf16.mxu0 %v3547
        %5577 = vmatmul.mubr.bf16.gmra.mrb[0].mxu0 %v3546
        %v5578 = vpop.f32.mrb[0].mxu0
        %v5579 = vadd.f32 %v5468, %v5578
        %v5580 = vpop.f32.mrb[0].mxu0
        %v5581 = vadd.f32 %v5470, %v5580
        %v5582 = vpop.f32.mrb[0].mxu0
        %v5583 = vadd.f32 %v5472, %v5582
        %v5584 = vpop.f32.mrb[0].mxu0
        %v5585 = vadd.f32 %v5474, %v5584
        %5586 = vmatprep.mubr.bf16.mxu0 %v3553
        %5587 = vmatmul.mubr.bf16.gmra.mrb[0].mxu0 %v3552
        %v5588 = vpop.f32.mrb[0].mxu0
        %v5589 = vadd.f32 %v5478, %v5588
        %v5590 = vpop.f32.mrb[0].mxu0
        %v5591 = vadd.f32 %v5480, %v5590
        %v5592 = vpop.f32.mrb[0].mxu0
        %v5593 = vadd.f32 %v5482, %v5592
        %v5594 = vpop.f32.mrb[0].mxu0
        %v5595 = vadd.f32 %v5484, %v5594
        %5596 = vmatprep.mubr.bf16.mxu0 %v3559
        %5597 = vmatmul.mubr.bf16.gmra.mrb[0].mxu0 %v3558
        %v5598 = vpop.f32.mrb[0].mxu0
        %v5599 = vadd.f32 %v5488, %v5598
        %v5600 = vpop.f32.mrb[0].mxu0
        %v5601 = vadd.f32 %v5490, %v5600
        %v5602 = vpop.f32.mrb[0].mxu0
        %v5603 = vadd.f32 %v5492, %v5602
        %v5604 = vpop.f32.mrb[0].mxu0
        %v5605 = vadd.f32 %v5494, %v5604
        %5606 = vmatprep.mubr.bf16.mxu0 %v3565
        %5607 = vmatmul.mubr.bf16.gmra.mrb[0].mxu0 %v3564
        %v5608 = vpop.f32.mrb[0].mxu0
        %v5609 = vadd.f32 %v5498, %v5608
        %v5610 = vpop.f32.mrb[0].mxu0
        %v5611 = vadd.f32 %v5500, %v5610
        %v5612 = vpop.f32.mrb[0].mxu0
        %v5613 = vadd.f32 %v5502, %v5612
        %v5614 = vpop.f32.mrb[0].mxu0
        %v5615 = vadd.f32 %v5504, %v5614
        %5616 = vmatprep.mubr.bf16.mxu0 %v3571
        %5617 = vmatmul.mubr.bf16.gmra.mrb[0].mxu0 %v3570
        %v5618 = vpop.f32.mrb[0].mxu0
        %v5619 = vadd.f32 %v5508, %v5618
        %v5620 = vpop.f32.mrb[0].mxu0
        %v5621 = vadd.f32 %v5510, %v5620
        %v5622 = vpop.f32.mrb[0].mxu0
        %v5623 = vadd.f32 %v5512, %v5622
        %v5624 = vpop.f32.mrb[0].mxu0
        %v5625 = vadd.f32 %v5514, %v5624
        %5626 = vmatprep.mubr.bf16.mxu0 %v3577
        %5627 = vmatmul.mubr.bf16.gmra.mrb[0].mxu0 %v3576
        %v5628 = vpop.f32.mrb[0].mxu0
        %v5629 = vadd.f32 %v5518, %v5628
        %v5630 = vpop.f32.mrb[0].mxu0
        %v5631 = vadd.f32 %v5520, %v5630
        %v5632 = vpop.f32.mrb[0].mxu0
        %v5633 = vadd.f32 %v5522, %v5632
        %v5634 = vpop.f32.mrb[0].mxu0
        %v5635 = vadd.f32 %v5524, %v5634
        %5636 = vmatprep.mubr.bf16.mxu0 %v3583
        %5637 = vmatmul.mubr.bf16.gmra.mrb[0].mxu0 %v3582
        %v5638 = vpop.f32.mrb[0].mxu0
        %v5639 = vadd.f32 %v5528, %v5638
        %v5640 = vpop.f32.mrb[0].mxu0
        %v5641 = vadd.f32 %v5530, %v5640
        %v5642 = vpop.f32.mrb[0].mxu0
        %v5643 = vpop.f32.mrb[0].mxu0
        %5644 = vdwg.mxu0
        %5645 = vmatprep.subr.bf16.mxu0 %v4739
        %5646 = vmatpush1.bf16.msra.mxu0 %v4738
        %5647 = vmatprep.subr.bf16.mxu0 %v4745
        %5648 = vmatpush1.bf16.msra.mxu0 %v4744
        %5649 = vmatprep.subr.bf16.mxu0 %v4751
        %5650 = vmatpush1.bf16.msra.mxu0 %v4750
        %5651 = vmatprep.subr.bf16.mxu0 %v4757
        %5652 = vmatpush1.bf16.msra.mxu0 %v4756
        %5653 = vmatprep.subr.bf16.mxu0 %v4763
        %5654 = vmatpush1.bf16.msra.mxu0 %v4762
        %5655 = vmatprep.subr.bf16.mxu0 %v4769
        %5656 = vmatpush1.bf16.msra.mxu0 %v4768
        %5657 = vmatprep.subr.bf16.mxu0 %v4775
        %5658 = vmatpush1.bf16.msra.mxu0 %v4774
        %5659 = vmatprep.subr.bf16.mxu0 %v4781
        %5660 = vmatpush1.bf16.msra.mxu0 %v4780
        %5661 = vmatprep.subr.bf16.mxu0 %v4787
        %5662 = vmatpush1.bf16.msra.mxu0 %v4786
        %5663 = vmatprep.subr.bf16.mxu0 %v4793
        %5664 = vmatpush1.bf16.msra.mxu0 %v4792
        %5665 = vmatprep.subr.bf16.mxu0 %v4799
        %5666 = vmatpush1.bf16.msra.mxu0 %v4798
        %5667 = vmatprep.subr.bf16.mxu0 %v4805
        %5668 = vmatpush1.bf16.msra.mxu0 %v4804
        %5669 = vmatprep.subr.bf16.mxu0 %v4811
        %5670 = vmatpush1.bf16.msra.mxu0 %v4810
        %5671 = vmatprep.subr.bf16.mxu0 %v4817
        %5672 = vmatpush1.bf16.msra.mxu0 %v4816
        %5673 = vmatprep.subr.bf16.mxu0 %v4823
        %5674 = vmatpush1.bf16.msra.mxu0 %v4822
        %5675 = vmatprep.subr.bf16.mxu0 %v4829
        %5676 = vmatpush1.bf16.msra.mxu0 %v4828
        %5677 = vmatprep.mubr.bf16.mxu0 %v3537
        %5678 = vmatmul.mubr.bf16.gmra.mrb[0].mxu0 %v3536
        %v5679 = vpop.f32.mrb[0].mxu0
        %v5680 = vadd.f32 0.0, %v5679
        %v5681 = vpop.f32.mrb[0].mxu0
        %v5682 = vadd.f32 0.0, %v5681
        %v5683 = vpop.f32.mrb[0].mxu0
        %v5684 = vadd.f32 0.0, %v5683
        %v5685 = vpop.f32.mrb[0].mxu0
        %v5686 = vadd.f32 0.0, %v5685
        %5687 = vmatprep.mubr.bf16.mxu0 %v3543
        %5688 = vmatmul.mubr.bf16.gmra.mrb[0].mxu0 %v3542
        %v5689 = vpop.f32.mrb[0].mxu0
        %v5690 = vadd.f32 0.0, %v5689
        %v5691 = vpop.f32.mrb[0].mxu0
        %v5692 = vadd.f32 0.0, %v5691
        %v5693 = vpop.f32.mrb[0].mxu0
        %v5694 = vadd.f32 0.0, %v5693
        %v5695 = vpop.f32.mrb[0].mxu0
        %v5696 = vadd.f32 0.0, %v5695
        %5697 = vmatprep.mubr.bf16.mxu0 %v3549
        %5698 = vmatmul.mubr.bf16.gmra.mrb[0].mxu0 %v3548
        %v5699 = vpop.f32.mrb[0].mxu0
        %v5700 = vadd.f32 0.0, %v5699
        %v5701 = vpop.f32.mrb[0].mxu0
        %v5702 = vadd.f32 0.0, %v5701
        %v5703 = vpop.f32.mrb[0].mxu0
        %v5704 = vadd.f32 0.0, %v5703
        %v5705 = vpop.f32.mrb[0].mxu0
        %v5706 = vadd.f32 0.0, %v5705
        %5707 = vmatprep.mubr.bf16.mxu0 %v3555
        %5708 = vmatmul.mubr.bf16.gmra.mrb[0].mxu0 %v3554
        %v5709 = vpop.f32.mrb[0].mxu0
        %v5710 = vadd.f32 0.0, %v5709
        %v5711 = vpop.f32.mrb[0].mxu0
        %v5712 = vadd.f32 0.0, %v5711
        %v5713 = vpop.f32.mrb[0].mxu0
        %v5714 = vadd.f32 0.0, %v5713
        %v5715 = vpop.f32.mrb[0].mxu0
        %v5716 = vadd.f32 0.0, %v5715
        %5717 = vmatprep.mubr.bf16.mxu0 %v3561
        %5718 = vmatmul.mubr.bf16.gmra.mrb[0].mxu0 %v3560
        %v5719 = vpop.f32.mrb[0].mxu0
        %v5720 = vadd.f32 0.0, %v5719
        %v5721 = vpop.f32.mrb[0].mxu0
        %v5722 = vadd.f32 0.0, %v5721
        %v5723 = vpop.f32.mrb[0].mxu0
        %v5724 = vadd.f32 0.0, %v5723
        %v5725 = vpop.f32.mrb[0].mxu0
        %v5726 = vadd.f32 0.0, %v5725
        %5727 = vmatprep.mubr.bf16.mxu0 %v3567
        %5728 = vmatmul.mubr.bf16.gmra.mrb[0].mxu0 %v3566
        %v5729 = vpop.f32.mrb[0].mxu0
        %v5730 = vadd.f32 0.0, %v5729
        %v5731 = vpop.f32.mrb[0].mxu0
        %v5732 = vadd.f32 0.0, %v5731
        %v5733 = vpop.f32.mrb[0].mxu0
        %v5734 = vadd.f32 0.0, %v5733
        %v5735 = vpop.f32.mrb[0].mxu0
        %v5736 = vadd.f32 0.0, %v5735
        %5737 = vmatprep.mubr.bf16.mxu0 %v3573
        %5738 = vmatmul.mubr.bf16.gmra.mrb[0].mxu0 %v3572
        %v5739 = vpop.f32.mrb[0].mxu0
        %v5740 = vadd.f32 0.0, %v5739
        %v5741 = vpop.f32.mrb[0].mxu0
        %v5742 = vadd.f32 0.0, %v5741
        %v5743 = vpop.f32.mrb[0].mxu0
        %v5744 = vadd.f32 0.0, %v5743
        %v5745 = vpop.f32.mrb[0].mxu0
        %v5746 = vadd.f32 0.0, %v5745
        %5747 = vmatprep.mubr.bf16.mxu0 %v3579
        %5748 = vmatmul.mubr.bf16.gmra.mrb[0].mxu0 %v3578
        %v5749 = vpop.f32.mrb[0].mxu0
        %v5750 = vadd.f32 0.0, %v5749
        %v5751 = vpop.f32.mrb[0].mxu0
        %v5752 = vadd.f32 0.0, %v5751
        %v5753 = vpop.f32.mrb[0].mxu0
        %v5754 = vpop.f32.mrb[0].mxu0
        %5755 = vdwg.mxu0
        %5756 = vmatprep.subr.bf16.mxu0 %v4835
        %5757 = vmatpush1.bf16.msra.mxu0 %v4834
        %5758 = vmatprep.subr.bf16.mxu0 %v4841
        %5759 = vmatpush1.bf16.msra.mxu0 %v4840
        %5760 = vmatprep.subr.bf16.mxu0 %v4847
        %5761 = vmatpush1.bf16.msra.mxu0 %v4846
        %5762 = vmatprep.subr.bf16.mxu0 %v4853
        %5763 = vmatpush1.bf16.msra.mxu0 %v4852
        %5764 = vmatprep.subr.bf16.mxu0 %v4859
        %5765 = vmatpush1.bf16.msra.mxu0 %v4858
        %5766 = vmatprep.subr.bf16.mxu0 %v4865
        %5767 = vmatpush1.bf16.msra.mxu0 %v4864
        %5768 = vmatprep.subr.bf16.mxu0 %v4871
        %5769 = vmatpush1.bf16.msra.mxu0 %v4870
        %5770 = vmatprep.subr.bf16.mxu0 %v4877
        %5771 = vmatpush1.bf16.msra.mxu0 %v4876
        %5772 = vmatprep.subr.bf16.mxu0 %v4883
        %5773 = vmatpush1.bf16.msra.mxu0 %v4882
        %5774 = vmatprep.subr.bf16.mxu0 %v4889
        %5775 = vmatpush1.bf16.msra.mxu0 %v4888
        %5776 = vmatprep.subr.bf16.mxu0 %v4895
        %5777 = vmatpush1.bf16.msra.mxu0 %v4894
        %5778 = vmatprep.subr.bf16.mxu0 %v4901
        %5779 = vmatpush1.bf16.msra.mxu0 %v4900
        %5780 = vmatprep.subr.bf16.mxu0 %v4907
        %5781 = vmatpush1.bf16.msra.mxu0 %v4906
        %5782 = vmatprep.subr.bf16.mxu0 %v4913
        %5783 = vmatpush1.bf16.msra.mxu0 %v4912
        %5784 = vmatprep.subr.bf16.mxu0 %v4919
        %5785 = vmatpush1.bf16.msra.mxu0 %v4918
        %5786 = vmatprep.subr.bf16.mxu0 %v4925
        %5787 = vmatpush1.bf16.msra.mxu0 %v4924
        %5788 = vmatprep.mubr.bf16.mxu0 %v3539
        %5789 = vmatmul.mubr.bf16.gmra.mrb[0].mxu0 %v3538
        %v5790 = vpop.f32.mrb[0].mxu0
        %v5791 = vadd.f32 %v5680, %v5790
        %v5792 = vpop.f32.mrb[0].mxu0
        %v5793 = vadd.f32 %v5682, %v5792
        %v5794 = vpop.f32.mrb[0].mxu0
        %v5795 = vadd.f32 %v5684, %v5794
        %v5796 = vpop.f32.mrb[0].mxu0
        %v5797 = vadd.f32 %v5686, %v5796
        %5798 = vmatprep.mubr.bf16.mxu0 %v3545
        %5799 = vmatmul.mubr.bf16.gmra.mrb[0].mxu0 %v3544
        %v5800 = vpop.f32.mrb[0].mxu0
        %v5801 = vadd.f32 %v5690, %v5800
        %v5802 = vpop.f32.mrb[0].mxu0
        %v5803 = vadd.f32 %v5692, %v5802
        %v5804 = vpop.f32.mrb[0].mxu0
        %v5805 = vadd.f32 %v5694, %v5804
        %v5806 = vpop.f32.mrb[0].mxu0
        %v5807 = vadd.f32 %v5696, %v5806
        %5808 = vmatprep.mubr.bf16.mxu0 %v3551
        %5809 = vmatmul.mubr.bf16.gmra.mrb[0].mxu0 %v3550
        %v5810 = vpop.f32.mrb[0].mxu0
        %v5811 = vadd.f32 %v5700, %v5810
        %v5812 = vpop.f32.mrb[0].mxu0
        %v5813 = vadd.f32 %v5702, %v5812
        %v5814 = vpop.f32.mrb[0].mxu0
        %v5815 = vadd.f32 %v5704, %v5814
        %v5816 = vpop.f32.mrb[0].mxu0
        %v5817 = vadd.f32 %v5706, %v5816
        %5818 = vmatprep.mubr.bf16.mxu0 %v3557
        %5819 = vmatmul.mubr.bf16.gmra.mrb[0].mxu0 %v3556
        %v5820 = vpop.f32.mrb[0].mxu0
        %v5821 = vadd.f32 %v5710, %v5820
        %v5822 = vpop.f32.mrb[0].mxu0
        %v5823 = vadd.f32 %v5712, %v5822
        %v5824 = vpop.f32.mrb[0].mxu0
        %v5825 = vadd.f32 %v5714, %v5824
        %v5826 = vpop.f32.mrb[0].mxu0
        %v5827 = vadd.f32 %v5716, %v5826
        %5828 = vmatprep.mubr.bf16.mxu0 %v3563
        %5829 = vmatmul.mubr.bf16.gmra.mrb[0].mxu0 %v3562
        %v5830 = vpop.f32.mrb[0].mxu0
        %v5831 = vadd.f32 %v5720, %v5830
        %v5832 = vpop.f32.mrb[0].mxu0
        %v5833 = vadd.f32 %v5722, %v5832
        %v5834 = vpop.f32.mrb[0].mxu0
        %v5835 = vadd.f32 %v5724, %v5834
        %v5836 = vpop.f32.mrb[0].mxu0
        %v5837 = vadd.f32 %v5726, %v5836
        %5838 = vmatprep.mubr.bf16.mxu0 %v3569
        %5839 = vmatmul.mubr.bf16.gmra.mrb[0].mxu0 %v3568
        %v5840 = vpop.f32.mrb[0].mxu0
        %v5841 = vadd.f32 %v5730, %v5840
        %v5842 = vpop.f32.mrb[0].mxu0
        %v5843 = vadd.f32 %v5732, %v5842
        %v5844 = vpop.f32.mrb[0].mxu0
        %v5845 = vadd.f32 %v5734, %v5844
        %v5846 = vpop.f32.mrb[0].mxu0
        %v5847 = vadd.f32 %v5736, %v5846
        %5848 = vmatprep.mubr.bf16.mxu0 %v3575
        %5849 = vmatmul.mubr.bf16.gmra.mrb[0].mxu0 %v3574
        %v5850 = vpop.f32.mrb[0].mxu0
        %v5851 = vadd.f32 %v5740, %v5850
        %v5852 = vpop.f32.mrb[0].mxu0
        %v5853 = vadd.f32 %v5742, %v5852
        %v5854 = vpop.f32.mrb[0].mxu0
        %v5855 = vadd.f32 %v5744, %v5854
        %v5856 = vpop.f32.mrb[0].mxu0
        %v5857 = vadd.f32 %v5746, %v5856
        %5858 = vmatprep.mubr.bf16.mxu0 %v3581
        %5859 = vmatmul.mubr.bf16.gmra.mrb[0].mxu0 %v3580
        %v5860 = vpop.f32.mrb[0].mxu0
        %v5861 = vadd.f32 %v5750, %v5860
        %v5862 = vpop.f32.mrb[0].mxu0
        %v5863 = vadd.f32 %v5752, %v5862
        %v5864 = vpop.f32.mrb[0].mxu0
        %v5865 = vpop.f32.mrb[0].mxu0
        %5866 = vdwg.mxu0
        %5867 = vmatprep.subr.bf16.mxu0 %v4931
        %5868 = vmatpush1.bf16.msra.mxu0 %v4930
        %5869 = vmatprep.subr.bf16.mxu0 %v4937
        %5870 = vmatpush1.bf16.msra.mxu0 %v4936
        %5871 = vmatprep.subr.bf16.mxu0 %v4943
        %5872 = vmatpush1.bf16.msra.mxu0 %v4942
        %5873 = vmatprep.subr.bf16.mxu0 %v4949
        %5874 = vmatpush1.bf16.msra.mxu0 %v4948
        %5875 = vmatprep.subr.bf16.mxu0 %v4955
        %5876 = vmatpush1.bf16.msra.mxu0 %v4954
        %5877 = vmatprep.subr.bf16.mxu0 %v4961
        %5878 = vmatpush1.bf16.msra.mxu0 %v4960
        %5879 = vmatprep.subr.bf16.mxu0 %v4967
        %5880 = vmatpush1.bf16.msra.mxu0 %v4966
        %5881 = vmatprep.subr.bf16.mxu0 %v4973
        %5882 = vmatpush1.bf16.msra.mxu0 %v4972
        %5883 = vmatprep.subr.bf16.mxu0 %v4979
        %5884 = vmatpush1.bf16.msra.mxu0 %v4978
        %5885 = vmatprep.subr.bf16.mxu0 %v4985
        %5886 = vmatpush1.bf16.msra.mxu0 %v4984
        %5887 = vmatprep.subr.bf16.mxu0 %v4991
        %5888 = vmatpush1.bf16.msra.mxu0 %v4990
        %5889 = vmatprep.subr.bf16.mxu0 %v4997
        %5890 = vmatpush1.bf16.msra.mxu0 %v4996
        %5891 = vmatprep.subr.bf16.mxu0 %v5003
        %5892 = vmatpush1.bf16.msra.mxu0 %v5002
        %5893 = vmatprep.subr.bf16.mxu0 %v5009
        %5894 = vmatpush1.bf16.msra.mxu0 %v5008
        %5895 = vmatprep.subr.bf16.mxu0 %v5015
        %5896 = vmatpush1.bf16.msra.mxu0 %v5014
        %5897 = vmatprep.subr.bf16.mxu0 %v5021
        %5898 = vmatpush1.bf16.msra.mxu0 %v5020
        %5899 = vmatprep.mubr.bf16.mxu0 %v3541
        %5900 = vmatmul.mubr.bf16.gmra.mrb[0].mxu0 %v3540
        %v5901 = vpop.f32.mrb[0].mxu0
        %v5902 = vadd.f32 %v5791, %v5901
        %v5903 = vpop.f32.mrb[0].mxu0
        %v5904 = vadd.f32 %v5793, %v5903
        %v5905 = vpop.f32.mrb[0].mxu0
        %v5906 = vadd.f32 %v5795, %v5905
        %v5907 = vpop.f32.mrb[0].mxu0
        %v5908 = vadd.f32 %v5797, %v5907
        %5909 = vmatprep.mubr.bf16.mxu0 %v3547
        %5910 = vmatmul.mubr.bf16.gmra.mrb[0].mxu0 %v3546
        %v5911 = vpop.f32.mrb[0].mxu0
        %v5912 = vadd.f32 %v5801, %v5911
        %v5913 = vpop.f32.mrb[0].mxu0
        %v5914 = vadd.f32 %v5803, %v5913
        %v5915 = vpop.f32.mrb[0].mxu0
        %v5916 = vadd.f32 %v5805, %v5915
        %v5917 = vpop.f32.mrb[0].mxu0
        %v5918 = vadd.f32 %v5807, %v5917
        %5919 = vmatprep.mubr.bf16.mxu0 %v3553
        %5920 = vmatmul.mubr.bf16.gmra.mrb[0].mxu0 %v3552
        %v5921 = vpop.f32.mrb[0].mxu0
        %v5922 = vadd.f32 %v5811, %v5921
        %v5923 = vpop.f32.mrb[0].mxu0
        %v5924 = vadd.f32 %v5813, %v5923
        %v5925 = vpop.f32.mrb[0].mxu0
        %v5926 = vadd.f32 %v5815, %v5925
        %v5927 = vpop.f32.mrb[0].mxu0
        %v5928 = vadd.f32 %v5817, %v5927
        %5929 = vmatprep.mubr.bf16.mxu0 %v3559
        %5930 = vmatmul.mubr.bf16.gmra.mrb[0].mxu0 %v3558
        %v5931 = vpop.f32.mrb[0].mxu0
        %v5932 = vadd.f32 %v5821, %v5931
        %v5933 = vpop.f32.mrb[0].mxu0
        %v5934 = vadd.f32 %v5823, %v5933
        %v5935 = vpop.f32.mrb[0].mxu0
        %v5936 = vadd.f32 %v5825, %v5935
        %v5937 = vpop.f32.mrb[0].mxu0
        %v5938 = vadd.f32 %v5827, %v5937
        %5939 = vmatprep.mubr.bf16.mxu0 %v3565
        %5940 = vmatmul.mubr.bf16.gmra.mrb[0].mxu0 %v3564
        %v5941 = vpop.f32.mrb[0].mxu0
        %v5942 = vadd.f32 %v5831, %v5941
        %v5943 = vpop.f32.mrb[0].mxu0
        %v5944 = vadd.f32 %v5833, %v5943
        %v5945 = vpop.f32.mrb[0].mxu0
        %v5946 = vadd.f32 %v5835, %v5945
        %v5947 = vpop.f32.mrb[0].mxu0
        %v5948 = vadd.f32 %v5837, %v5947
        %5949 = vmatprep.mubr.bf16.mxu0 %v3571
        %5950 = vmatmul.mubr.bf16.gmra.mrb[0].mxu0 %v3570
        %v5951 = vpop.f32.mrb[0].mxu0
        %v5952 = vadd.f32 %v5841, %v5951
        %v5953 = vpop.f32.mrb[0].mxu0
        %v5954 = vadd.f32 %v5843, %v5953
        %v5955 = vpop.f32.mrb[0].mxu0
        %v5956 = vadd.f32 %v5845, %v5955
        %v5957 = vpop.f32.mrb[0].mxu0
        %v5958 = vadd.f32 %v5847, %v5957
        %5959 = vmatprep.mubr.bf16.mxu0 %v3577
        %5960 = vmatmul.mubr.bf16.gmra.mrb[0].mxu0 %v3576
        %v5961 = vpop.f32.mrb[0].mxu0
        %v5962 = vadd.f32 %v5851, %v5961
        %v5963 = vpop.f32.mrb[0].mxu0
        %v5964 = vadd.f32 %v5853, %v5963
        %v5965 = vpop.f32.mrb[0].mxu0
        %v5966 = vadd.f32 %v5855, %v5965
        %v5967 = vpop.f32.mrb[0].mxu0
        %v5968 = vadd.f32 %v5857, %v5967
        %5969 = vmatprep.mubr.bf16.mxu0 %v3583
        %5970 = vmatmul.mubr.bf16.gmra.mrb[0].mxu0 %v3582
        %v5971 = vpop.f32.mrb[0].mxu0
        %v5972 = vadd.f32 %v5861, %v5971
        %v5973 = vpop.f32.mrb[0].mxu0
        %v5974 = vadd.f32 %v5863, %v5973
        %v5975 = vpop.f32.mrb[0].mxu0
        %v5976 = vpop.f32.mrb[0].mxu0
        %5977 = vdwg.mxu0
        %5978 = vmatprep.subr.bf16.mxu0 %v4741
        %5979 = vmatpush1.bf16.msra.mxu0 %v4740
        %5980 = vmatprep.subr.bf16.mxu0 %v4747
        %5981 = vmatpush1.bf16.msra.mxu0 %v4746
        %5982 = vmatprep.subr.bf16.mxu0 %v4753
        %5983 = vmatpush1.bf16.msra.mxu0 %v4752
        %5984 = vmatprep.subr.bf16.mxu0 %v4759
        %5985 = vmatpush1.bf16.msra.mxu0 %v4758
        %5986 = vmatprep.subr.bf16.mxu0 %v4765
        %5987 = vmatpush1.bf16.msra.mxu0 %v4764
        %5988 = vmatprep.subr.bf16.mxu0 %v4771
        %5989 = vmatpush1.bf16.msra.mxu0 %v4770
        %5990 = vmatprep.subr.bf16.mxu0 %v4777
        %5991 = vmatpush1.bf16.msra.mxu0 %v4776
        %5992 = vmatprep.subr.bf16.mxu0 %v4783
        %5993 = vmatpush1.bf16.msra.mxu0 %v4782
        %5994 = vmatprep.subr.bf16.mxu0 %v4789
        %5995 = vmatpush1.bf16.msra.mxu0 %v4788
        %5996 = vmatprep.subr.bf16.mxu0 %v4795
        %5997 = vmatpush1.bf16.msra.mxu0 %v4794
        %5998 = vmatprep.subr.bf16.mxu0 %v4801
        %5999 = vmatpush1.bf16.msra.mxu0 %v4800
        %6000 = vmatprep.subr.bf16.mxu0 %v4807
        %6001 = vmatpush1.bf16.msra.mxu0 %v4806
        %6002 = vmatprep.subr.bf16.mxu0 %v4813
        %6003 = vmatpush1.bf16.msra.mxu0 %v4812
        %6004 = vmatprep.subr.bf16.mxu0 %v4819
        %6005 = vmatpush1.bf16.msra.mxu0 %v4818
        %6006 = vmatprep.subr.bf16.mxu0 %v4825
        %6007 = vmatpush1.bf16.msra.mxu0 %v4824
        %6008 = vmatprep.subr.bf16.mxu0 %v4831
        %6009 = vmatpush1.bf16.msra.mxu0 %v4830
        %6010 = vmatprep.mubr.bf16.mxu0 %v3537
        %6011 = vmatmul.mubr.bf16.gmra.mrb[0].mxu0 %v3536
        %v6012 = vpop.f32.mrb[0].mxu0
        %v6013 = vadd.f32 0.0, %v6012
        %v6014 = vpop.f32.mrb[0].mxu0
        %v6015 = vadd.f32 0.0, %v6014
        %v6016 = vpop.f32.mrb[0].mxu0
        %v6017 = vadd.f32 0.0, %v6016
        %v6018 = vpop.f32.mrb[0].mxu0
        %v6019 = vadd.f32 0.0, %v6018
        %6020 = vmatprep.mubr.bf16.mxu0 %v3543
        %6021 = vmatmul.mubr.bf16.gmra.mrb[0].mxu0 %v3542
        %v6022 = vpop.f32.mrb[0].mxu0
        %v6023 = vadd.f32 0.0, %v6022
        %v6024 = vpop.f32.mrb[0].mxu0
        %v6025 = vadd.f32 0.0, %v6024
        %v6026 = vpop.f32.mrb[0].mxu0
        %v6027 = vadd.f32 0.0, %v6026
        %v6028 = vpop.f32.mrb[0].mxu0
        %v6029 = vadd.f32 0.0, %v6028
        %6030 = vmatprep.mubr.bf16.mxu0 %v3549
        %6031 = vmatmul.mubr.bf16.gmra.mrb[0].mxu0 %v3548
        %v6032 = vpop.f32.mrb[0].mxu0
        %v6033 = vadd.f32 0.0, %v6032
        %v6034 = vpop.f32.mrb[0].mxu0
        %v6035 = vadd.f32 0.0, %v6034
        %v6036 = vpop.f32.mrb[0].mxu0
        %v6037 = vadd.f32 0.0, %v6036
        %v6038 = vpop.f32.mrb[0].mxu0
        %v6039 = vadd.f32 0.0, %v6038
        %6040 = vmatprep.mubr.bf16.mxu0 %v3555
        %6041 = vmatmul.mubr.bf16.gmra.mrb[0].mxu0 %v3554
        %v6042 = vpop.f32.mrb[0].mxu0
        %v6043 = vadd.f32 0.0, %v6042
        %v6044 = vpop.f32.mrb[0].mxu0
        %v6045 = vadd.f32 0.0, %v6044
        %v6046 = vpop.f32.mrb[0].mxu0
        %v6047 = vadd.f32 0.0, %v6046
        %v6048 = vpop.f32.mrb[0].mxu0
        %v6049 = vadd.f32 0.0, %v6048
        %6050 = vmatprep.mubr.bf16.mxu0 %v3561
        %6051 = vmatmul.mubr.bf16.gmra.mrb[0].mxu0 %v3560
        %v6052 = vpop.f32.mrb[0].mxu0
        %v6053 = vadd.f32 0.0, %v6052
        %v6054 = vpop.f32.mrb[0].mxu0
        %v6055 = vadd.f32 0.0, %v6054
        %v6056 = vpop.f32.mrb[0].mxu0
        %v6057 = vadd.f32 0.0, %v6056
        %v6058 = vpop.f32.mrb[0].mxu0
        %v6059 = vadd.f32 0.0, %v6058
        %6060 = vmatprep.mubr.bf16.mxu0 %v3567
        %6061 = vmatmul.mubr.bf16.gmra.mrb[0].mxu0 %v3566
        %v6062 = vpop.f32.mrb[0].mxu0
        %v6063 = vadd.f32 0.0, %v6062
        %v6064 = vpop.f32.mrb[0].mxu0
        %v6065 = vadd.f32 0.0, %v6064
        %v6066 = vpop.f32.mrb[0].mxu0
        %v6067 = vadd.f32 0.0, %v6066
        %v6068 = vpop.f32.mrb[0].mxu0
        %v6069 = vadd.f32 0.0, %v6068
        %6070 = vmatprep.mubr.bf16.mxu0 %v3573
        %6071 = vmatmul.mubr.bf16.gmra.mrb[0].mxu0 %v3572
        %v6072 = vpop.f32.mrb[0].mxu0
        %v6073 = vadd.f32 0.0, %v6072
        %v6074 = vpop.f32.mrb[0].mxu0
        %v6075 = vadd.f32 0.0, %v6074
        %v6076 = vpop.f32.mrb[0].mxu0
        %v6077 = vadd.f32 0.0, %v6076
        %v6078 = vpop.f32.mrb[0].mxu0
        %v6079 = vadd.f32 0.0, %v6078
        %6080 = vmatprep.mubr.bf16.mxu0 %v3579
        %6081 = vmatmul.mubr.bf16.gmra.mrb[0].mxu0 %v3578
        %v6082 = vpop.f32.mrb[0].mxu0
        %v6083 = vadd.f32 0.0, %v6082
        %v6084 = vpop.f32.mrb[0].mxu0
        %v6085 = vadd.f32 0.0, %v6084
        %v6086 = vpop.f32.mrb[0].mxu0
        %v6087 = vpop.f32.mrb[0].mxu0
        %6088 = vdwg.mxu0
        %6089 = vmatprep.subr.bf16.mxu0 %v4837
        %6090 = vmatpush1.bf16.msra.mxu0 %v4836
        %6091 = vmatprep.subr.bf16.mxu0 %v4843
        %6092 = vmatpush1.bf16.msra.mxu0 %v4842
        %6093 = vmatprep.subr.bf16.mxu0 %v4849
        %6094 = vmatpush1.bf16.msra.mxu0 %v4848
        %6095 = vmatprep.subr.bf16.mxu0 %v4855
        %6096 = vmatpush1.bf16.msra.mxu0 %v4854
        %6097 = vmatprep.subr.bf16.mxu0 %v4861
        %6098 = vmatpush1.bf16.msra.mxu0 %v4860
        %6099 = vmatprep.subr.bf16.mxu0 %v4867
        %6100 = vmatpush1.bf16.msra.mxu0 %v4866
        %6101 = vmatprep.subr.bf16.mxu0 %v4873
        %6102 = vmatpush1.bf16.msra.mxu0 %v4872
        %6103 = vmatprep.subr.bf16.mxu0 %v4879
        %6104 = vmatpush1.bf16.msra.mxu0 %v4878
        %6105 = vmatprep.subr.bf16.mxu0 %v4885
        %6106 = vmatpush1.bf16.msra.mxu0 %v4884
        %6107 = vmatprep.subr.bf16.mxu0 %v4891
        %6108 = vmatpush1.bf16.msra.mxu0 %v4890
        %6109 = vmatprep.subr.bf16.mxu0 %v4897
        %6110 = vmatpush1.bf16.msra.mxu0 %v4896
        %6111 = vmatprep.subr.bf16.mxu0 %v4903
        %6112 = vmatpush1.bf16.msra.mxu0 %v4902
        %6113 = vmatprep.subr.bf16.mxu0 %v4909
        %6114 = vmatpush1.bf16.msra.mxu0 %v4908
        %6115 = vmatprep.subr.bf16.mxu0 %v4915
        %6116 = vmatpush1.bf16.msra.mxu0 %v4914
        %6117 = vmatprep.subr.bf16.mxu0 %v4921
        %6118 = vmatpush1.bf16.msra.mxu0 %v4920
        %6119 = vmatprep.subr.bf16.mxu0 %v4927
        %6120 = vmatpush1.bf16.msra.mxu0 %v4926
        %6121 = vmatprep.mubr.bf16.mxu0 %v3539
        %6122 = vmatmul.mubr.bf16.gmra.mrb[0].mxu0 %v3538
        %v6123 = vpop.f32.mrb[0].mxu0
        %v6124 = vadd.f32 %v6013, %v6123
        %v6125 = vpop.f32.mrb[0].mxu0
        %v6126 = vadd.f32 %v6015, %v6125
        %v6127 = vpop.f32.mrb[0].mxu0
        %v6128 = vadd.f32 %v6017, %v6127
        %v6129 = vpop.f32.mrb[0].mxu0
        %v6130 = vadd.f32 %v6019, %v6129
        %6131 = vmatprep.mubr.bf16.mxu0 %v3545
        %6132 = vmatmul.mubr.bf16.gmra.mrb[0].mxu0 %v3544
        %v6133 = vpop.f32.mrb[0].mxu0
        %v6134 = vadd.f32 %v6023, %v6133
        %v6135 = vpop.f32.mrb[0].mxu0
        %v6136 = vadd.f32 %v6025, %v6135
        %v6137 = vpop.f32.mrb[0].mxu0
        %v6138 = vadd.f32 %v6027, %v6137
        %v6139 = vpop.f32.mrb[0].mxu0
        %v6140 = vadd.f32 %v6029, %v6139
        %6141 = vmatprep.mubr.bf16.mxu0 %v3551
        %6142 = vmatmul.mubr.bf16.gmra.mrb[0].mxu0 %v3550
        %v6143 = vpop.f32.mrb[0].mxu0
        %v6144 = vadd.f32 %v6033, %v6143
        %v6145 = vpop.f32.mrb[0].mxu0
        %v6146 = vadd.f32 %v6035, %v6145
        %v6147 = vpop.f32.mrb[0].mxu0
        %v6148 = vadd.f32 %v6037, %v6147
        %v6149 = vpop.f32.mrb[0].mxu0
        %v6150 = vadd.f32 %v6039, %v6149
        %6151 = vmatprep.mubr.bf16.mxu0 %v3557
        %6152 = vmatmul.mubr.bf16.gmra.mrb[0].mxu0 %v3556
        %v6153 = vpop.f32.mrb[0].mxu0
        %v6154 = vadd.f32 %v6043, %v6153
        %v6155 = vpop.f32.mrb[0].mxu0
        %v6156 = vadd.f32 %v6045, %v6155
        %v6157 = vpop.f32.mrb[0].mxu0
        %v6158 = vadd.f32 %v6047, %v6157
        %v6159 = vpop.f32.mrb[0].mxu0
        %v6160 = vadd.f32 %v6049, %v6159
        %6161 = vmatprep.mubr.bf16.mxu0 %v3563
        %6162 = vmatmul.mubr.bf16.gmra.mrb[0].mxu0 %v3562
        %v6163 = vpop.f32.mrb[0].mxu0
        %v6164 = vadd.f32 %v6053, %v6163
        %v6165 = vpop.f32.mrb[0].mxu0
        %v6166 = vadd.f32 %v6055, %v6165
        %v6167 = vpop.f32.mrb[0].mxu0
        %v6168 = vadd.f32 %v6057, %v6167
        %v6169 = vpop.f32.mrb[0].mxu0
        %v6170 = vadd.f32 %v6059, %v6169
        %6171 = vmatprep.mubr.bf16.mxu0 %v3569
        %6172 = vmatmul.mubr.bf16.gmra.mrb[0].mxu0 %v3568
        %v6173 = vpop.f32.mrb[0].mxu0
        %v6174 = vadd.f32 %v6063, %v6173
        %v6175 = vpop.f32.mrb[0].mxu0
        %v6176 = vadd.f32 %v6065, %v6175
        %v6177 = vpop.f32.mrb[0].mxu0
        %v6178 = vadd.f32 %v6067, %v6177
        %v6179 = vpop.f32.mrb[0].mxu0
        %v6180 = vadd.f32 %v6069, %v6179
        %6181 = vmatprep.mubr.bf16.mxu0 %v3575
        %6182 = vmatmul.mubr.bf16.gmra.mrb[0].mxu0 %v3574
        %v6183 = vpop.f32.mrb[0].mxu0
        %v6184 = vadd.f32 %v6073, %v6183
        %v6185 = vpop.f32.mrb[0].mxu0
        %v6186 = vadd.f32 %v6075, %v6185
        %v6187 = vpop.f32.mrb[0].mxu0
        %v6188 = vadd.f32 %v6077, %v6187
        %v6189 = vpop.f32.mrb[0].mxu0
        %v6190 = vadd.f32 %v6079, %v6189
        %6191 = vmatprep.mubr.bf16.mxu0 %v3581
        %6192 = vmatmul.mubr.bf16.gmra.mrb[0].mxu0 %v3580
        %v6193 = vpop.f32.mrb[0].mxu0
        %v6194 = vadd.f32 %v6083, %v6193
        %v6195 = vpop.f32.mrb[0].mxu0
        %v6196 = vadd.f32 %v6085, %v6195
        %v6197 = vpop.f32.mrb[0].mxu0
        %v6198 = vpop.f32.mrb[0].mxu0
        %6199 = vdwg.mxu0
        %6200 = vmatprep.subr.bf16.mxu0 %v4933
        %6201 = vmatpush1.bf16.msra.mxu0 %v4932
        %6202 = vmatprep.subr.bf16.mxu0 %v4939
        %6203 = vmatpush1.bf16.msra.mxu0 %v4938
        %6204 = vmatprep.subr.bf16.mxu0 %v4945
        %6205 = vmatpush1.bf16.msra.mxu0 %v4944
        %6206 = vmatprep.subr.bf16.mxu0 %v4951
        %6207 = vmatpush1.bf16.msra.mxu0 %v4950
        %6208 = vmatprep.subr.bf16.mxu0 %v4957
        %6209 = vmatpush1.bf16.msra.mxu0 %v4956
        %6210 = vmatprep.subr.bf16.mxu0 %v4963
        %6211 = vmatpush1.bf16.msra.mxu0 %v4962
        %6212 = vmatprep.subr.bf16.mxu0 %v4969
        %6213 = vmatpush1.bf16.msra.mxu0 %v4968
        %6214 = vmatprep.subr.bf16.mxu0 %v4975
        %6215 = vmatpush1.bf16.msra.mxu0 %v4974
        %6216 = vmatprep.subr.bf16.mxu0 %v4981
        %6217 = vmatpush1.bf16.msra.mxu0 %v4980
        %6218 = vmatprep.subr.bf16.mxu0 %v4987
        %6219 = vmatpush1.bf16.msra.mxu0 %v4986
        %6220 = vmatprep.subr.bf16.mxu0 %v4993
        %6221 = vmatpush1.bf16.msra.mxu0 %v4992
        %6222 = vmatprep.subr.bf16.mxu0 %v4999
        %6223 = vmatpush1.bf16.msra.mxu0 %v4998
        %6224 = vmatprep.subr.bf16.mxu0 %v5005
        %6225 = vmatpush1.bf16.msra.mxu0 %v5004
        %6226 = vmatprep.subr.bf16.mxu0 %v5011
        %6227 = vmatpush1.bf16.msra.mxu0 %v5010
        %6228 = vmatprep.subr.bf16.mxu0 %v5017
        %6229 = vmatpush1.bf16.msra.mxu0 %v5016
        %6230 = vmatprep.subr.bf16.mxu0 %v5023
        %6231 = vmatpush1.bf16.msra.mxu0 %v5022
        %6232 = vmatprep.mubr.bf16.mxu0 %v3541
        %6233 = vmatmul.mubr.bf16.gmra.mrb[0].mxu0 %v3540
        %v6234 = vpop.f32.mrb[0].mxu0
        %v6235 = vadd.f32 %v6124, %v6234
        %v6236 = vpop.f32.mrb[0].mxu0
        %v6237 = vadd.f32 %v6126, %v6236
        %v6238 = vpop.f32.mrb[0].mxu0
        %v6239 = vadd.f32 %v6128, %v6238
        %v6240 = vpop.f32.mrb[0].mxu0
        %v6241 = vadd.f32 %v6130, %v6240
        %6242 = vmatprep.mubr.bf16.mxu0 %v3547
        %6243 = vmatmul.mubr.bf16.gmra.mrb[0].mxu0 %v3546
        %v6244 = vpop.f32.mrb[0].mxu0
        %v6245 = vadd.f32 %v6134, %v6244
        %v6246 = vpop.f32.mrb[0].mxu0
        %v6247 = vadd.f32 %v6136, %v6246
        %v6248 = vpop.f32.mrb[0].mxu0
        %v6249 = vadd.f32 %v6138, %v6248
        %v6250 = vpop.f32.mrb[0].mxu0
        %v6251 = vadd.f32 %v6140, %v6250
        %6252 = vmatprep.mubr.bf16.mxu0 %v3553
        %6253 = vmatmul.mubr.bf16.gmra.mrb[0].mxu0 %v3552
        %v6254 = vpop.f32.mrb[0].mxu0
        %v6255 = vadd.f32 %v6144, %v6254
        %v6256 = vpop.f32.mrb[0].mxu0
        %v6257 = vadd.f32 %v6146, %v6256
        %v6258 = vpop.f32.mrb[0].mxu0
        %v6259 = vadd.f32 %v6148, %v6258
        %v6260 = vpop.f32.mrb[0].mxu0
        %v6261 = vadd.f32 %v6150, %v6260
        %6262 = vmatprep.mubr.bf16.mxu0 %v3559
        %6263 = vmatmul.mubr.bf16.gmra.mrb[0].mxu0 %v3558
        %v6264 = vpop.f32.mrb[0].mxu0
        %v6265 = vadd.f32 %v6154, %v6264
        %v6266 = vpop.f32.mrb[0].mxu0
        %v6267 = vadd.f32 %v6156, %v6266
        %v6268 = vpop.f32.mrb[0].mxu0
        %v6269 = vadd.f32 %v6158, %v6268
        %v6270 = vpop.f32.mrb[0].mxu0
        %v6271 = vadd.f32 %v6160, %v6270
        %6272 = vmatprep.mubr.bf16.mxu0 %v3565
        %6273 = vmatmul.mubr.bf16.gmra.mrb[0].mxu0 %v3564
        %v6274 = vpop.f32.mrb[0].mxu0
        %v6275 = vadd.f32 %v6164, %v6274
        %v6276 = vpop.f32.mrb[0].mxu0
        %v6277 = vadd.f32 %v6166, %v6276
        %v6278 = vpop.f32.mrb[0].mxu0
        %v6279 = vadd.f32 %v6168, %v6278
        %v6280 = vpop.f32.mrb[0].mxu0
        %v6281 = vadd.f32 %v6170, %v6280
        %6282 = vmatprep.mubr.bf16.mxu0 %v3571
        %6283 = vmatmul.mubr.bf16.gmra.mrb[0].mxu0 %v3570
        %v6284 = vpop.f32.mrb[0].mxu0
        %v6285 = vadd.f32 %v6174, %v6284
        %v6286 = vpop.f32.mrb[0].mxu0
        %v6287 = vadd.f32 %v6176, %v6286
        %v6288 = vpop.f32.mrb[0].mxu0
        %v6289 = vadd.f32 %v6178, %v6288
        %v6290 = vpop.f32.mrb[0].mxu0
        %v6291 = vadd.f32 %v6180, %v6290
        %6292 = vmatprep.mubr.bf16.mxu0 %v3577
        %6293 = vmatmul.mubr.bf16.gmra.mrb[0].mxu0 %v3576
        %v6294 = vpop.f32.mrb[0].mxu0
        %v6295 = vadd.f32 %v6184, %v6294
        %v6296 = vpop.f32.mrb[0].mxu0
        %v6297 = vadd.f32 %v6186, %v6296
        %v6298 = vpop.f32.mrb[0].mxu0
        %v6299 = vadd.f32 %v6188, %v6298
        %v6300 = vpop.f32.mrb[0].mxu0
        %v6301 = vadd.f32 %v6190, %v6300
        %6302 = vmatprep.mubr.bf16.mxu0 %v3583
        %6303 = vmatmul.mubr.bf16.gmra.mrb[0].mxu0 %v3582
        %v6304 = vpop.f32.mrb[0].mxu0
        %v6305 = vadd.f32 %v6194, %v6304
        %v6306 = vpop.f32.mrb[0].mxu0
        %v6307 = vadd.f32 %v6196, %v6306
        %v6308 = vpop.f32.mrb[0].mxu0
        %v6309 = vpop.f32.mrb[0].mxu0
        %6310 = vdwg.mxu0
        %v6311 = vadd.f32 %v3446, %v5569
        %v6312 = vadd.f32 %v3447, %v5571
        %v6313 = vadd.f32 %v3448, %v5902
        %v6314 = vadd.f32 %v3449, %v5904
        %v6315 = vadd.f32 %v3450, %v6235
        %v6316 = vadd.f32 %v3451, %v6237
        %v6317 = vadd.f32 %v3452, %v5573
        %v6318 = vadd.f32 %v3453, %v5575
        %v6319 = vadd.f32 %v3454, %v5906
        %v6320 = vadd.f32 %v3455, %v5908
        %v6321 = vadd.f32 %v3456, %v6239
        %v6322 = vadd.f32 %v3457, %v6241
        %v6323 = vadd.f32 %v3458, %v5579
        %v6324 = vadd.f32 %v3459, %v5581
        %v6325 = vadd.f32 %v3460, %v5912
        %v6326 = vadd.f32 %v3461, %v5914
        %v6327 = vadd.f32 %v3462, %v6245
        %v6328 = vadd.f32 %v3463, %v6247
        %v6329 = vadd.f32 %v3464, %v5583
        %v6330 = vadd.f32 %v3465, %v5585
        %v6331 = vadd.f32 %v3466, %v5916
        %v6332 = vadd.f32 %v3467, %v5918
        %v6333 = vadd.f32 %v3468, %v6249
        %v6334 = vadd.f32 %v3469, %v6251
        %v6335 = vadd.f32 %v3470, %v5589
        %v6336 = vadd.f32 %v3471, %v5591
        %v6337 = vadd.f32 %v3472, %v5922
        %v6338 = vadd.f32 %v3473, %v5924
        %v6339 = vadd.f32 %v3474, %v6255
        %v6340 = vadd.f32 %v3475, %v6257
        %v6341 = vadd.f32 %v3476, %v5593
        %v6342 = vadd.f32 %v3477, %v5595
        %v6343 = vadd.f32 %v3478, %v5926
        %v6344 = vadd.f32 %v3479, %v5928
        %v6345 = vadd.f32 %v3480, %v6259
        %v6346 = vadd.f32 %v3481, %v6261
        %v6347 = vadd.f32 %v3482, %v5599
        %v6348 = vadd.f32 %v3483, %v5601
        %v6349 = vadd.f32 %v3484, %v5932
        %v6350 = vadd.f32 %v3485, %v5934
        %v6351 = vadd.f32 %v3486, %v6265
        %v6352 = vadd.f32 %v3487, %v6267
        %v6353 = vadd.f32 %v3488, %v5603
        %v6354 = vadd.f32 %v3489, %v5605
        %v6355 = vadd.f32 %v3490, %v5936
        %v6356 = vadd.f32 %v3491, %v5938
        %v6357 = vadd.f32 %v3492, %v6269
        %v6358 = vadd.f32 %v3493, %v6271
        %v6359 = vadd.f32 %v3494, %v5609
        %v6360 = vadd.f32 %v3495, %v5611
        %v6361 = vadd.f32 %v3496, %v5942
        %v6362 = vadd.f32 %v3497, %v5944
        %v6363 = vadd.f32 %v3498, %v6275
        %v6364 = vadd.f32 %v3499, %v6277
        %v6365 = vadd.f32 %v3500, %v5613
        %v6366 = vadd.f32 %v3501, %v5615
        %v6367 = vadd.f32 %v3502, %v5946
        %v6368 = vadd.f32 %v3503, %v5948
        %v6369 = vadd.f32 %v3504, %v6279
        %v6370 = vadd.f32 %v3505, %v6281
        %v6371 = vadd.f32 %v3506, %v5619
        %v6372 = vadd.f32 %v3507, %v5621
        %v6373 = vadd.f32 %v3508, %v5952
        %v6374 = vadd.f32 %v3509, %v5954
        %v6375 = vadd.f32 %v3510, %v6285
        %v6376 = vadd.f32 %v3511, %v6287
        %v6377 = vadd.f32 %v3512, %v5623
        %v6378 = vadd.f32 %v3513, %v5625
        %v6379 = vadd.f32 %v3514, %v5956
        %v6380 = vadd.f32 %v3515, %v5958
        %v6381 = vadd.f32 %v3516, %v6289
        %v6382 = vadd.f32 %v3517, %v6291
        %v6383 = vadd.f32 %v3518, %v5629
        %v6384 = vadd.f32 %v3519, %v5631
        %v6385 = vadd.f32 %v3520, %v5962
        %v6386 = vadd.f32 %v3521, %v5964
        %v6387 = vadd.f32 %v3522, %v6295
        %v6388 = vadd.f32 %v3523, %v6297
        %v6389 = vadd.f32 %v3524, %v5633
        %v6390 = vadd.f32 %v3525, %v5635
        %v6391 = vadd.f32 %v3526, %v5966
        %v6392 = vadd.f32 %v3527, %v5968
        %v6393 = vadd.f32 %v3528, %v6299
        %v6394 = vadd.f32 %v3529, %v6301
        %v6395 = vadd.f32 %v3530, %v5639
        %v6396 = vadd.f32 %v3531, %v5641
        %v6397 = vadd.f32 %v3532, %v5972
        %v6398 = vadd.f32 %v3533, %v5974
        %v6399 = vadd.f32 %v3534, %v6305
        %v6400 = vadd.f32 %v3535, %v6307
        %6401 = vst [vmem:[#allocation2] sm:$0xff] %v6311
        %6402 = vst [vmem:[#allocation2 + $0x8] sm:$0xff] %v6312
        %6403 = vst [vmem:[#allocation2 + $0x10] sm:$0xff] %v6313
        %6404 = vst [vmem:[#allocation2 + $0x18] sm:$0xff] %v6314
        %6405 = vst [vmem:[#allocation2 + $0x20] sm:$0xff] %v6315
        %6406 = vst [vmem:[#allocation2 + $0x28] sm:$0xff] %v6316
        %6407 = vst [vmem:[#allocation2 + $0x30] sm:$0xff] %v6317
        %6408 = vst [vmem:[#allocation2 + $0x38] sm:$0xff] %v6318
        %6409 = vst [vmem:[#allocation2 + $0x40] sm:$0xff] %v6319
        %6410 = vst [vmem:[#allocation2 + $0x48] sm:$0xff] %v6320
        %6411 = vst [vmem:[#allocation2 + $0x50] sm:$0xff] %v6321
        %6412 = vst [vmem:[#allocation2 + $0x58] sm:$0xff] %v6322
        %6413 = vst [vmem:[#allocation2 + $0x60] sm:$0xff] %v6323
        %6414 = vst [vmem:[#allocation2 + $0x68] sm:$0xff] %v6324
        %6415 = vst [vmem:[#allocation2 + $0x70] sm:$0xff] %v6325
        %6416 = vst [vmem:[#allocation2 + $0x78] sm:$0xff] %v6326
        %6417 = vst [vmem:[#allocation2 + $0x80] sm:$0xff] %v6327
        %6418 = vst [vmem:[#allocation2 + $0x88] sm:$0xff] %v6328
        %6419 = vst [vmem:[#allocation2 + $0x90] sm:$0xff] %v6329
        %6420 = vst [vmem:[#allocation2 + $0x98] sm:$0xff] %v6330
        %6421 = vst [vmem:[#allocation2 + $0xa0] sm:$0xff] %v6331
        %6422 = vst [vmem:[#allocation2 + $0xa8] sm:$0xff] %v6332
        %6423 = vst [vmem:[#allocation2 + $0xb0] sm:$0xff] %v6333
        %6424 = vst [vmem:[#allocation2 + $0xb8] sm:$0xff] %v6334
        %6425 = vst [vmem:[#allocation2 + $0xc0] sm:$0xff] %v6335
        %6426 = vst [vmem:[#allocation2 + $0xc8] sm:$0xff] %v6336
        %6427 = vst [vmem:[#allocation2 + $0xd0] sm:$0xff] %v6337
        %6428 = vst [vmem:[#allocation2 + $0xd8] sm:$0xff] %v6338
        %6429 = vst [vmem:[#allocation2 + $0xe0] sm:$0xff] %v6339
        %6430 = vst [vmem:[#allocation2 + $0xe8] sm:$0xff] %v6340
        %6431 = vst [vmem:[#allocation2 + $0xf0] sm:$0xff] %v6341
        %6432 = vst [vmem:[#allocation2 + $0xf8] sm:$0xff] %v6342
        %6433 = vst [vmem:[#allocation2 + $0x100] sm:$0xff] %v6343
        %6434 = vst [vmem:[#allocation2 + $0x108] sm:$0xff] %v6344
        %6435 = vst [vmem:[#allocation2 + $0x110] sm:$0xff] %v6345
        %6436 = vst [vmem:[#allocation2 + $0x118] sm:$0xff] %v6346
        %6437 = vst [vmem:[#allocation2 + $0x120] sm:$0xff] %v6347
        %6438 = vst [vmem:[#allocation2 + $0x128] sm:$0xff] %v6348
        %6439 = vst [vmem:[#allocation2 + $0x130] sm:$0xff] %v6349
        %6440 = vst [vmem:[#allocation2 + $0x138] sm:$0xff] %v6350
        %6441 = vst [vmem:[#allocation2 + $0x140] sm:$0xff] %v6351
        %6442 = vst [vmem:[#allocation2 + $0x148] sm:$0xff] %v6352
        %6443 = vst [vmem:[#allocation2 + $0x150] sm:$0xff] %v6353
        %6444 = vst [vmem:[#allocation2 + $0x158] sm:$0xff] %v6354
        %6445 = vst [vmem:[#allocation2 + $0x160] sm:$0xff] %v6355
        %6446 = vst [vmem:[#allocation2 + $0x168] sm:$0xff] %v6356
        %6447 = vst [vmem:[#allocation2 + $0x170] sm:$0xff] %v6357
        %6448 = vst [vmem:[#allocation2 + $0x178] sm:$0xff] %v6358
        %6449 = vst [vmem:[#allocation2 + $0x180] sm:$0xff] %v6359
        %6450 = vst [vmem:[#allocation2 + $0x188] sm:$0xff] %v6360
        %6451 = vst [vmem:[#allocation2 + $0x190] sm:$0xff] %v6361
        %6452 = vst [vmem:[#allocation2 + $0x198] sm:$0xff] %v6362
        %6453 = vst [vmem:[#allocation2 + $0x1a0] sm:$0xff] %v6363
        %6454 = vst [vmem:[#allocation2 + $0x1a8] sm:$0xff] %v6364
        %6455 = vst [vmem:[#allocation2 + $0x1b0] sm:$0xff] %v6365
        %6456 = vst [vmem:[#allocation2 + $0x1b8] sm:$0xff] %v6366
        %6457 = vst [vmem:[#allocation2 + $0x1c0] sm:$0xff] %v6367
        %6458 = vst [vmem:[#allocation2 + $0x1c8] sm:$0xff] %v6368
        %6459 = vst [vmem:[#allocation2 + $0x1d0] sm:$0xff] %v6369
        %6460 = vst [vmem:[#allocation2 + $0x1d8] sm:$0xff] %v6370
        %6461 = vst [vmem:[#allocation2 + $0x1e0] sm:$0xff] %v6371
        %6462 = vst [vmem:[#allocation2 + $0x1e8] sm:$0xff] %v6372
        %6463 = vst [vmem:[#allocation2 + $0x1f0] sm:$0xff] %v6373
        %6464 = vst [vmem:[#allocation2 + $0x1f8] sm:$0xff] %v6374
        %6465 = vst [vmem:[#allocation2 + $0x200] sm:$0xff] %v6375
        %6466 = vst [vmem:[#allocation2 + $0x208] sm:$0xff] %v6376
        %6467 = vst [vmem:[#allocation2 + $0x210] sm:$0xff] %v6377
        %6468 = vst [vmem:[#allocation2 + $0x218] sm:$0xff] %v6378
        %6469 = vst [vmem:[#allocation2 + $0x220] sm:$0xff] %v6379
        %6470 = vst [vmem:[#allocation2 + $0x228] sm:$0xff] %v6380
        %6471 = vst [vmem:[#allocation2 + $0x230] sm:$0xff] %v6381
        %6472 = vst [vmem:[#allocation2 + $0x238] sm:$0xff] %v6382
        %6473 = vst [vmem:[#allocation2 + $0x240] sm:$0xff] %v6383
        %6474 = vst [vmem:[#allocation2 + $0x248] sm:$0xff] %v6384
        %6475 = vst [vmem:[#allocation2 + $0x250] sm:$0xff] %v6385
        %6476 = vst [vmem:[#allocation2 + $0x258] sm:$0xff] %v6386
        %6477 = vst [vmem:[#allocation2 + $0x260] sm:$0xff] %v6387
        %6478 = vst [vmem:[#allocation2 + $0x268] sm:$0xff] %v6388
        %6479 = vst [vmem:[#allocation2 + $0x270] sm:$0xff] %v6389
        %6480 = vst [vmem:[#allocation2 + $0x278] sm:$0xff] %v6390
        %6481 = vst [vmem:[#allocation2 + $0x280] sm:$0xff] %v6391
        %6482 = vst [vmem:[#allocation2 + $0x288] sm:$0xff] %v6392
        %6483 = vst [vmem:[#allocation2 + $0x290] sm:$0xff] %v6393
        %6484 = vst [vmem:[#allocation2 + $0x298] sm:$0xff] %v6394
        %6485 = vst [vmem:[#allocation2 + $0x2a0] sm:$0xff] %v6395
        %6486 = vst [vmem:[#allocation2 + $0x2a8] sm:$0xff] %v6396
        %6487 = vst [vmem:[#allocation2 + $0x2b0] sm:$0xff] %v6397
        %6488 = vst [vmem:[#allocation2 + $0x2b8] sm:$0xff] %v6398
        %6489 = vst [vmem:[#allocation2 + $0x2c0] sm:$0xff] %v6399
        %6490 = vst [vmem:[#allocation2 + $0x2c8] sm:$0xff] %v6400
        %p6491 = scmp.eq.s32.totalorder %s29, 3
        // Predicated region
        $region65: #{tpu_custom_call.1} parent=39 // pred_check
          %p6492 = pneg %p6491
        $region66: #{tpu_custom_call.1} parent=39 // pred_check_branch
          %6494 = sbr.rel (%p6492) target = $region68
        $region67: #{tpu_custom_call.1} parent=39 // pred_region
          %v6495 = vld [vmem:[#allocation2] sm:$0xff]
          %v6496 = vld [vmem:[#allocation2 + $0x8] sm:$0xff]
          %v6497 = vld [vmem:[#allocation2 + $0x10] sm:$0xff]
          %v6498 = vld [vmem:[#allocation2 + $0x18] sm:$0xff]
          %v6499 = vld [vmem:[#allocation2 + $0x20] sm:$0xff]
          %v6500 = vld [vmem:[#allocation2 + $0x28] sm:$0xff]
          %v6501 = vld [vmem:[#allocation2 + $0x30] sm:$0xff]
          %v6502 = vld [vmem:[#allocation2 + $0x38] sm:$0xff]
          %v6503 = vld [vmem:[#allocation2 + $0x40] sm:$0xff]
          %v6504 = vld [vmem:[#allocation2 + $0x48] sm:$0xff]
          %v6505 = vld [vmem:[#allocation2 + $0x50] sm:$0xff]
          %v6506 = vld [vmem:[#allocation2 + $0x58] sm:$0xff]
          %v6507 = vld [vmem:[#allocation2 + $0x60] sm:$0xff]
          %v6508 = vld [vmem:[#allocation2 + $0x68] sm:$0xff]
          %v6509 = vld [vmem:[#allocation2 + $0x70] sm:$0xff]
          %v6510 = vld [vmem:[#allocation2 + $0x78] sm:$0xff]
          %v6511 = vld [vmem:[#allocation2 + $0x80] sm:$0xff]
          %v6512 = vld [vmem:[#allocation2 + $0x88] sm:$0xff]
          %v6513 = vld [vmem:[#allocation2 + $0x90] sm:$0xff]
          %v6514 = vld [vmem:[#allocation2 + $0x98] sm:$0xff]
          %v6515 = vld [vmem:[#allocation2 + $0xa0] sm:$0xff]
          %v6516 = vld [vmem:[#allocation2 + $0xa8] sm:$0xff]
          %v6517 = vld [vmem:[#allocation2 + $0xb0] sm:$0xff]
          %v6518 = vld [vmem:[#allocation2 + $0xb8] sm:$0xff]
          %v6519 = vld [vmem:[#allocation2 + $0xc0] sm:$0xff]
          %v6520 = vld [vmem:[#allocation2 + $0xc8] sm:$0xff]
          %v6521 = vld [vmem:[#allocation2 + $0xd0] sm:$0xff]
          %v6522 = vld [vmem:[#allocation2 + $0xd8] sm:$0xff]
          %v6523 = vld [vmem:[#allocation2 + $0xe0] sm:$0xff]
          %v6524 = vld [vmem:[#allocation2 + $0xe8] sm:$0xff]
          %v6525 = vld [vmem:[#allocation2 + $0xf0] sm:$0xff]
          %v6526 = vld [vmem:[#allocation2 + $0xf8] sm:$0xff]
          %v6527 = vld [vmem:[#allocation2 + $0x100] sm:$0xff]
          %v6528 = vld [vmem:[#allocation2 + $0x108] sm:$0xff]
          %v6529 = vld [vmem:[#allocation2 + $0x110] sm:$0xff]
          %v6530 = vld [vmem:[#allocation2 + $0x118] sm:$0xff]
          %v6531 = vld [vmem:[#allocation2 + $0x120] sm:$0xff]
          %v6532 = vld [vmem:[#allocation2 + $0x128] sm:$0xff]
          %v6533 = vld [vmem:[#allocation2 + $0x130] sm:$0xff]
          %v6534 = vld [vmem:[#allocation2 + $0x138] sm:$0xff]
          %v6535 = vld [vmem:[#allocation2 + $0x140] sm:$0xff]
          %v6536 = vld [vmem:[#allocation2 + $0x148] sm:$0xff]
          %v6537 = vld [vmem:[#allocation2 + $0x150] sm:$0xff]
          %v6538 = vld [vmem:[#allocation2 + $0x158] sm:$0xff]
          %v6539 = vld [vmem:[#allocation2 + $0x160] sm:$0xff]
          %v6540 = vld [vmem:[#allocation2 + $0x168] sm:$0xff]
          %v6541 = vld [vmem:[#allocation2 + $0x170] sm:$0xff]
          %v6542 = vld [vmem:[#allocation2 + $0x178] sm:$0xff]
          %v6543 = vld [vmem:[#allocation2 + $0x180] sm:$0xff]
          %v6544 = vld [vmem:[#allocation2 + $0x188] sm:$0xff]
          %v6545 = vld [vmem:[#allocation2 + $0x190] sm:$0xff]
          %v6546 = vld [vmem:[#allocation2 + $0x198] sm:$0xff]
          %v6547 = vld [vmem:[#allocation2 + $0x1a0] sm:$0xff]
          %v6548 = vld [vmem:[#allocation2 + $0x1a8] sm:$0xff]
          %v6549 = vld [vmem:[#allocation2 + $0x1b0] sm:$0xff]
          %v6550 = vld [vmem:[#allocation2 + $0x1b8] sm:$0xff]
          %v6551 = vld [vmem:[#allocation2 + $0x1c0] sm:$0xff]
          %v6552 = vld [vmem:[#allocation2 + $0x1c8] sm:$0xff]
          %v6553 = vld [vmem:[#allocation2 + $0x1d0] sm:$0xff]
          %v6554 = vld [vmem:[#allocation2 + $0x1d8] sm:$0xff]
          %v6555 = vld [vmem:[#allocation2 + $0x1e0] sm:$0xff]
          %v6556 = vld [vmem:[#allocation2 + $0x1e8] sm:$0xff]
          %v6557 = vld [vmem:[#allocation2 + $0x1f0] sm:$0xff]
          %v6558 = vld [vmem:[#allocation2 + $0x1f8] sm:$0xff]
          %v6559 = vld [vmem:[#allocation2 + $0x200] sm:$0xff]
          %v6560 = vld [vmem:[#allocation2 + $0x208] sm:$0xff]
          %v6561 = vld [vmem:[#allocation2 + $0x210] sm:$0xff]
          %v6562 = vld [vmem:[#allocation2 + $0x218] sm:$0xff]
          %v6563 = vld [vmem:[#allocation2 + $0x220] sm:$0xff]
          %v6564 = vld [vmem:[#allocation2 + $0x228] sm:$0xff]
          %v6565 = vld [vmem:[#allocation2 + $0x230] sm:$0xff]
          %v6566 = vld [vmem:[#allocation2 + $0x238] sm:$0xff]
          %v6567 = vld [vmem:[#allocation2 + $0x240] sm:$0xff]
          %v6568 = vld [vmem:[#allocation2 + $0x248] sm:$0xff]
          %v6569 = vld [vmem:[#allocation2 + $0x250] sm:$0xff]
          %v6570 = vld [vmem:[#allocation2 + $0x258] sm:$0xff]
          %v6571 = vld [vmem:[#allocation2 + $0x260] sm:$0xff]
          %v6572 = vld [vmem:[#allocation2 + $0x268] sm:$0xff]
          %v6573 = vld [vmem:[#allocation2 + $0x270] sm:$0xff]
          %v6574 = vld [vmem:[#allocation2 + $0x278] sm:$0xff]
          %v6575 = vld [vmem:[#allocation2 + $0x280] sm:$0xff]
          %v6576 = vld [vmem:[#allocation2 + $0x288] sm:$0xff]
          %v6577 = vld [vmem:[#allocation2 + $0x290] sm:$0xff]
          %v6578 = vld [vmem:[#allocation2 + $0x298] sm:$0xff]
          %v6579 = vld [vmem:[#allocation2 + $0x2a0] sm:$0xff]
          %v6580 = vld [vmem:[#allocation2 + $0x2a8] sm:$0xff]
          %v6581 = vld [vmem:[#allocation2 + $0x2b0] sm:$0xff]
          %v6582 = vld [vmem:[#allocation2 + $0x2b8] sm:$0xff]
          %v6583 = vld [vmem:[#allocation2 + $0x2c0] sm:$0xff]
          %v6584 = vld [vmem:[#allocation2 + $0x2c8] sm:$0xff]
          %v6585 = vld [vmem:[#allocation11] sm:$0x3f]
          %v6587 = vlaneseq
          %v6588 = vshrl.u32 %v6587, 7
          %v6589 = vsub.s32 0, %v6588
          %v6590 = vrot.slane %v6585, %v6589
          %v6591 = vlaneseq
          %v6592 = vshrl.u32 %v6591, 7
          %v6593 = vsub.s32 1, %v6592
          %v6594 = vrot.slane %v6585, %v6593
          %v6595 = vlaneseq
          %v6596 = vshrl.u32 %v6595, 7
          %v6597 = vsub.s32 2, %v6596
          %v6598 = vrot.slane %v6585, %v6597
          %v6599 = vlaneseq
          %v6600 = vshrl.u32 %v6599, 7
          %v6601 = vsub.s32 3, %v6600
          %v6602 = vrot.slane %v6585, %v6601
          %v6603 = vlaneseq
          %v6604 = vshrl.u32 %v6603, 7
          %v6605 = vsub.s32 4, %v6604
          %v6606 = vrot.slane %v6585, %v6605
          %v6607 = vlaneseq
          %v6608 = vshrl.u32 %v6607, 7
          %v6609 = vsub.s32 5, %v6608
          %v6610 = vrot.slane %v6585, %v6609
          %v6617 = vadd.f32 %v6495, %v6590
          %v6618 = vadd.f32 %v6496, %v6594
          %v6619 = vadd.f32 %v6497, %v6598
          %v6620 = vadd.f32 %v6498, %v6602
          %v6621 = vadd.f32 %v6499, %v6606
          %v6622 = vadd.f32 %v6500, %v6610
          %v6623 = vadd.f32 %v6501, %v6590
          %v6624 = vadd.f32 %v6502, %v6594
          %v6625 = vadd.f32 %v6503, %v6598
          %v6626 = vadd.f32 %v6504, %v6602
          %v6627 = vadd.f32 %v6505, %v6606
          %v6628 = vadd.f32 %v6506, %v6610
          %v6629 = vadd.f32 %v6507, %v6590
          %v6630 = vadd.f32 %v6508, %v6594
          %v6631 = vadd.f32 %v6509, %v6598
          %v6632 = vadd.f32 %v6510, %v6602
          %v6633 = vadd.f32 %v6511, %v6606
          %v6634 = vadd.f32 %v6512, %v6610
          %v6635 = vadd.f32 %v6513, %v6590
          %v6636 = vadd.f32 %v6514, %v6594
          %v6637 = vadd.f32 %v6515, %v6598
          %v6638 = vadd.f32 %v6516, %v6602
          %v6639 = vadd.f32 %v6517, %v6606
          %v6640 = vadd.f32 %v6518, %v6610
          %v6641 = vadd.f32 %v6519, %v6590
          %v6642 = vadd.f32 %v6520, %v6594
          %v6643 = vadd.f32 %v6521, %v6598
          %v6644 = vadd.f32 %v6522, %v6602
          %v6645 = vadd.f32 %v6523, %v6606
          %v6646 = vadd.f32 %v6524, %v6610
          %v6647 = vadd.f32 %v6525, %v6590
          %v6648 = vadd.f32 %v6526, %v6594
          %v6649 = vadd.f32 %v6527, %v6598
          %v6650 = vadd.f32 %v6528, %v6602
          %v6651 = vadd.f32 %v6529, %v6606
          %v6652 = vadd.f32 %v6530, %v6610
          %v6653 = vadd.f32 %v6531, %v6590
          %v6654 = vadd.f32 %v6532, %v6594
          %v6655 = vadd.f32 %v6533, %v6598
          %v6656 = vadd.f32 %v6534, %v6602
          %v6657 = vadd.f32 %v6535, %v6606
          %v6658 = vadd.f32 %v6536, %v6610
          %v6659 = vadd.f32 %v6537, %v6590
          %v6660 = vadd.f32 %v6538, %v6594
          %v6661 = vadd.f32 %v6539, %v6598
          %v6662 = vadd.f32 %v6540, %v6602
          %v6663 = vadd.f32 %v6541, %v6606
          %v6664 = vadd.f32 %v6542, %v6610
          %v6665 = vadd.f32 %v6543, %v6590
          %v6666 = vadd.f32 %v6544, %v6594
          %v6667 = vadd.f32 %v6545, %v6598
          %v6668 = vadd.f32 %v6546, %v6602
          %v6669 = vadd.f32 %v6547, %v6606
          %v6670 = vadd.f32 %v6548, %v6610
          %v6671 = vadd.f32 %v6549, %v6590
          %v6672 = vadd.f32 %v6550, %v6594
          %v6673 = vadd.f32 %v6551, %v6598
          %v6674 = vadd.f32 %v6552, %v6602
          %v6675 = vadd.f32 %v6553, %v6606
          %v6676 = vadd.f32 %v6554, %v6610
          %v6677 = vadd.f32 %v6555, %v6590
          %v6678 = vadd.f32 %v6556, %v6594
          %v6679 = vadd.f32 %v6557, %v6598
          %v6680 = vadd.f32 %v6558, %v6602
          %v6681 = vadd.f32 %v6559, %v6606
          %v6682 = vadd.f32 %v6560, %v6610
          %v6683 = vadd.f32 %v6561, %v6590
          %v6684 = vadd.f32 %v6562, %v6594
          %v6685 = vadd.f32 %v6563, %v6598
          %v6686 = vadd.f32 %v6564, %v6602
          %v6687 = vadd.f32 %v6565, %v6606
          %v6688 = vadd.f32 %v6566, %v6610
          %v6689 = vadd.f32 %v6567, %v6590
          %v6690 = vadd.f32 %v6568, %v6594
          %v6691 = vadd.f32 %v6569, %v6598
          %v6692 = vadd.f32 %v6570, %v6602
          %v6693 = vadd.f32 %v6571, %v6606
          %v6694 = vadd.f32 %v6572, %v6610
          %v6695 = vadd.f32 %v6573, %v6590
          %v6696 = vadd.f32 %v6574, %v6594
          %v6697 = vadd.f32 %v6575, %v6598
          %v6698 = vadd.f32 %v6576, %v6602
          %v6699 = vadd.f32 %v6577, %v6606
          %v6700 = vadd.f32 %v6578, %v6610
          %v6701 = vadd.f32 %v6579, %v6590
          %v6702 = vadd.f32 %v6580, %v6594
          %v6703 = vadd.f32 %v6581, %v6598
          %v6704 = vadd.f32 %v6582, %v6602
          %v6705 = vadd.f32 %v6583, %v6606
          %v6706 = vadd.f32 %v6584, %v6610
          %6707 = vst [vmem:[#allocation12] sm:$0xff] %v6617
          %6708 = vst [vmem:[#allocation12 + $0x8] sm:$0xff] %v6618
          %6709 = vst [vmem:[#allocation12 + $0x10] sm:$0xff] %v6619
          %6710 = vst [vmem:[#allocation12 + $0x18] sm:$0xff] %v6620
          %6711 = vst [vmem:[#allocation12 + $0x20] sm:$0xff] %v6621
          %6712 = vst [vmem:[#allocation12 + $0x28] sm:$0xff] %v6622
          %6713 = vst [vmem:[#allocation12 + $0x30] sm:$0xff] %v6623
          %6714 = vst [vmem:[#allocation12 + $0x38] sm:$0xff] %v6624
          %6715 = vst [vmem:[#allocation12 + $0x40] sm:$0xff] %v6625
          %6716 = vst [vmem:[#allocation12 + $0x48] sm:$0xff] %v6626
          %6717 = vst [vmem:[#allocation12 + $0x50] sm:$0xff] %v6627
          %6718 = vst [vmem:[#allocation12 + $0x58] sm:$0xff] %v6628
          %6719 = vst [vmem:[#allocation12 + $0x60] sm:$0xff] %v6629
          %6720 = vst [vmem:[#allocation12 + $0x68] sm:$0xff] %v6630
          %6721 = vst [vmem:[#allocation12 + $0x70] sm:$0xff] %v6631
          %6722 = vst [vmem:[#allocation12 + $0x78] sm:$0xff] %v6632
          %6723 = vst [vmem:[#allocation12 + $0x80] sm:$0xff] %v6633
          %6724 = vst [vmem:[#allocation12 + $0x88] sm:$0xff] %v6634
          %6725 = vst [vmem:[#allocation12 + $0x90] sm:$0xff] %v6635
          %6726 = vst [vmem:[#allocation12 + $0x98] sm:$0xff] %v6636
          %6727 = vst [vmem:[#allocation12 + $0xa0] sm:$0xff] %v6637
          %6728 = vst [vmem:[#allocation12 + $0xa8] sm:$0xff] %v6638
          %6729 = vst [vmem:[#allocation12 + $0xb0] sm:$0xff] %v6639
          %6730 = vst [vmem:[#allocation12 + $0xb8] sm:$0xff] %v6640
          %6731 = vst [vmem:[#allocation12 + $0xc0] sm:$0xff] %v6641
          %6732 = vst [vmem:[#allocation12 + $0xc8] sm:$0xff] %v6642
          %6733 = vst [vmem:[#allocation12 + $0xd0] sm:$0xff] %v6643
          %6734 = vst [vmem:[#allocation12 + $0xd8] sm:$0xff] %v6644
          %6735 = vst [vmem:[#allocation12 + $0xe0] sm:$0xff] %v6645
          %6736 = vst [vmem:[#allocation12 + $0xe8] sm:$0xff] %v6646
          %6737 = vst [vmem:[#allocation12 + $0xf0] sm:$0xff] %v6647
          %6738 = vst [vmem:[#allocation12 + $0xf8] sm:$0xff] %v6648
          %6739 = vst [vmem:[#allocation12 + $0x100] sm:$0xff] %v6649
          %6740 = vst [vmem:[#allocation12 + $0x108] sm:$0xff] %v6650
          %6741 = vst [vmem:[#allocation12 + $0x110] sm:$0xff] %v6651
          %6742 = vst [vmem:[#allocation12 + $0x118] sm:$0xff] %v6652
          %6743 = vst [vmem:[#allocation12 + $0x120] sm:$0xff] %v6653
          %6744 = vst [vmem:[#allocation12 + $0x128] sm:$0xff] %v6654
          %6745 = vst [vmem:[#allocation12 + $0x130] sm:$0xff] %v6655
          %6746 = vst [vmem:[#allocation12 + $0x138] sm:$0xff] %v6656
          %6747 = vst [vmem:[#allocation12 + $0x140] sm:$0xff] %v6657
          %6748 = vst [vmem:[#allocation12 + $0x148] sm:$0xff] %v6658
          %6749 = vst [vmem:[#allocation12 + $0x150] sm:$0xff] %v6659
          %6750 = vst [vmem:[#allocation12 + $0x158] sm:$0xff] %v6660
          %6751 = vst [vmem:[#allocation12 + $0x160] sm:$0xff] %v6661
          %6752 = vst [vmem:[#allocation12 + $0x168] sm:$0xff] %v6662
          %6753 = vst [vmem:[#allocation12 + $0x170] sm:$0xff] %v6663
          %6754 = vst [vmem:[#allocation12 + $0x178] sm:$0xff] %v6664
          %6755 = vst [vmem:[#allocation12 + $0x180] sm:$0xff] %v6665
          %6756 = vst [vmem:[#allocation12 + $0x188] sm:$0xff] %v6666
          %6757 = vst [vmem:[#allocation12 + $0x190] sm:$0xff] %v6667
          %6758 = vst [vmem:[#allocation12 + $0x198] sm:$0xff] %v6668
          %6759 = vst [vmem:[#allocation12 + $0x1a0] sm:$0xff] %v6669
          %6760 = vst [vmem:[#allocation12 + $0x1a8] sm:$0xff] %v6670
          %6761 = vst [vmem:[#allocation12 + $0x1b0] sm:$0xff] %v6671
          %6762 = vst [vmem:[#allocation12 + $0x1b8] sm:$0xff] %v6672
          %6763 = vst [vmem:[#allocation12 + $0x1c0] sm:$0xff] %v6673
          %6764 = vst [vmem:[#allocation12 + $0x1c8] sm:$0xff] %v6674
          %6765 = vst [vmem:[#allocation12 + $0x1d0] sm:$0xff] %v6675
          %6766 = vst [vmem:[#allocation12 + $0x1d8] sm:$0xff] %v6676
          %6767 = vst [vmem:[#allocation12 + $0x1e0] sm:$0xff] %v6677
          %6768 = vst [vmem:[#allocation12 + $0x1e8] sm:$0xff] %v6678
          %6769 = vst [vmem:[#allocation12 + $0x1f0] sm:$0xff] %v6679
          %6770 = vst [vmem:[#allocation12 + $0x1f8] sm:$0xff] %v6680
          %6771 = vst [vmem:[#allocation12 + $0x200] sm:$0xff] %v6681
          %6772 = vst [vmem:[#allocation12 + $0x208] sm:$0xff] %v6682
          %6773 = vst [vmem:[#allocation12 + $0x210] sm:$0xff] %v6683
          %6774 = vst [vmem:[#allocation12 + $0x218] sm:$0xff] %v6684
          %6775 = vst [vmem:[#allocation12 + $0x220] sm:$0xff] %v6685
          %6776 = vst [vmem:[#allocation12 + $0x228] sm:$0xff] %v6686
          %6777 = vst [vmem:[#allocation12 + $0x230] sm:$0xff] %v6687
          %6778 = vst [vmem:[#allocation12 + $0x238] sm:$0xff] %v6688
          %6779 = vst [vmem:[#allocation12 + $0x240] sm:$0xff] %v6689
          %6780 = vst [vmem:[#allocation12 + $0x248] sm:$0xff] %v6690
          %6781 = vst [vmem:[#allocation12 + $0x250] sm:$0xff] %v6691
          %6782 = vst [vmem:[#allocation12 + $0x258] sm:$0xff] %v6692
          %6783 = vst [vmem:[#allocation12 + $0x260] sm:$0xff] %v6693
          %6784 = vst [vmem:[#allocation12 + $0x268] sm:$0xff] %v6694
          %6785 = vst [vmem:[#allocation12 + $0x270] sm:$0xff] %v6695
          %6786 = vst [vmem:[#allocation12 + $0x278] sm:$0xff] %v6696
          %6787 = vst [vmem:[#allocation12 + $0x280] sm:$0xff] %v6697
          %6788 = vst [vmem:[#allocation12 + $0x288] sm:$0xff] %v6698
          %6789 = vst [vmem:[#allocation12 + $0x290] sm:$0xff] %v6699
          %6790 = vst [vmem:[#allocation12 + $0x298] sm:$0xff] %v6700
          %6791 = vst [vmem:[#allocation12 + $0x2a0] sm:$0xff] %v6701
          %6792 = vst [vmem:[#allocation12 + $0x2a8] sm:$0xff] %v6702
          %6793 = vst [vmem:[#allocation12 + $0x2b0] sm:$0xff] %v6703
          %6794 = vst [vmem:[#allocation12 + $0x2b8] sm:$0xff] %v6704
          %6795 = vst [vmem:[#allocation12 + $0x2c0] sm:$0xff] %v6705
          %6796 = vst [vmem:[#allocation12 + $0x2c8] sm:$0xff] %v6706
        $region68: #{tpu_custom_call.1} parent=39 // pred_fallthru
          _
        // Predicated region
        $region69: #{tpu_custom_call.1} parent=39 // pred_check
          %p6797 = pneg %p179
        $region70: #{tpu_custom_call.1} parent=39 // pred_check_branch
          %6799 = sbr.rel (%p6797) target = $region72
        $region71: #{tpu_custom_call.1} parent=39 // pred_region
          %s6800 = smul.u32 15, %s28
          %s6802 = ssub.s32 11520, 11520
          %6803 = vsyncadd [#allocation5], %s6802
          %s6804 = smul.addr %s6800, 6
          %s6805 = smul.addr %s6804, 128
          %s6806 = scalar_lea.hbm %s5, %s6805
          %s6807 = sshll.u32 [#allocation12], 4
          %s6808 = int_to_ptr.vmem [resolvable:$true] %s6807
          %6813 = dma.vmem_to_hbm [thread:$0]  %s6808, 11520, %s6806, [#allocation5], 768, 768, 48
        $region72: #{tpu_custom_call.1} parent=39 // pred_fallthru
          _
        // Predicated region
        $region73: #{tpu_custom_call.1} parent=39 // pred_check
          %p6814 = pneg %p179
        $region74: #{tpu_custom_call.1} parent=39 // pred_check_branch
          %6816 = sbr.rel (%p6814) target = $region76
        $region75: #{tpu_custom_call.1} parent=39 // pred_region
          %6817 = dma.done [#allocation5], 11520
        $region76: #{tpu_custom_call.1} parent=39 // pred_fallthru
          _
      $region40: #{tpu_custom_call.1} parent=5 // pred_fallthru
        _
      %p6818 = scmp.le.s32.totalorder 2, %s19
      // Predicated region
      $region77: #{tpu_custom_call.1} parent=5 // pred_check
        %p6819 = pneg %p6818
      $region78: #{tpu_custom_call.1} parent=5 // pred_check_branch
        %6821 = sbr.rel (%p6819) target = $region80
      $region79: #{tpu_custom_call.1} parent=5 // pred_region
        %s6822 = ssub.s32 %s19, 2
      $region80: #{tpu_custom_call.1} parent=5 // pred_fallthru
        _
    $region6: #{tpu_custom_call.1} parent=1 // loop_footer
      %s23 = sadd.s32 1, %s19
    $region7: #{tpu_custom_call.1} parent=1 // loop_footer_branch
      %18 = sbr.rel target = $region3
    $region8: #{tpu_custom_call.1} parent=1 // loop_exit
      _
    %6823 = vsyncpa [#allocation4], 1
    %s6824 = scalar_lea.sflag [#allocation4], 1
    %6825 = vsyncpa %s6824, 1
    %6826 = vsyncpa [#allocation7], 1
    %s6827 = scalar_lea.sflag [#allocation7], 1
    %6828 = vsyncpa %s6827, 1
    %6829 = vsyncpa [#allocation10], 1
    %s6830 = scalar_lea.sflag [#allocation10], 1
    %6831 = vsyncpa %s6830, 1
    %6832 = vsyncpa [#allocation5], 1
    %s6833 = scalar_lea.sflag [#allocation5], 1
    %6834 = vsyncpa %s6833, 1

</llo_original>
